<compile_context>
chip_gen: v7x
topology: tpu7x:2x2x1
jax: 0.10.0
libtpu: 0.0.40
codegen_flags: <defaults>
</compile_context>

<pallas_src>
import numpy as np
import jax
import jax.numpy as jnp
from jax import lax
from jax.experimental import pallas as pl
from jax.experimental.pallas import tpu as pltpu


def _make_patch_embed_kernel(H, W, C_in, C_out, patch_size):
    ksz = patch_size + 1
    pad = patch_size // 2
    HO, WO = H // patch_size, W // patch_size
    N = HO * WO
    M = C_out // C_in          # output channels per group (requires in_ch == groups)
    GN_EPS, LN_EPS = 1e-5, 1e-6
    inv_hw = 1.0 / float(H * W)

    def kernel(x_ref, gng_ref, gnb_ref, wproj_ref, bproj_ref,
               wpa_ref, bpa_ref, lng_ref, lnb_ref, wlin_ref, blin_ref,
               o_ref, xpad_ref, ypad_ref, tok_ref):
        # ---------- 1) GroupNorm (num_groups == C_in -> per-channel stats over HxW) ----------
        x = x_ref[0].astype(jnp.float32)                                   # (H, W, C_in)
        s = jnp.sum(x, axis=0, keepdims=True)                              # (1, W, C_in)
        mu = jnp.sum(s, axis=1, keepdims=True) * inv_hw                    # (1, 1, C_in)
        d = x - mu
        ds = jnp.sum(d * d, axis=0, keepdims=True)
        var = jnp.sum(ds, axis=1, keepdims=True) * inv_hw                  # (1, 1, C_in)
        gng = gng_ref[...][None]                                           # (1, 1, C_in)
        gnb = gnb_ref[...][None]
        xn = d * lax.rsqrt(var + GN_EPS) * gng + gnb                       # (H, W, C_in)

        # ---------- 2) in-kernel halo: zero-padded VMEM scratch, input replicated M times
        #              along lanes so the grouped conv becomes a depthwise conv over C_out ----
        xpad_ref[...] = jnp.zeros_like(xpad_ref)
        for m in range(M):
            xpad_ref[pad:pad + H, pad:pad + W, m * C_in:(m + 1) * C_in] = xn

        # ---------- 3) proj: depthwise ksz x ksz, stride = patch_size conv + bias ----------
        wproj = wproj_ref[...]                                             # (ksz, ksz, C_out), hoisted
        bproj = bproj_ref[...]                                             # (1, C_out)
        ypad_ref[...] = jnp.zeros_like(ypad_ref)                           # PA halo lives here
        for oh in range(HO):
            for ow in range(WO):
                patch = xpad_ref[patch_size * oh: patch_size * oh + ksz,
                                 patch_size * ow: patch_size * ow + ksz, :]  # (ksz, ksz, C_out)
                v = jnp.sum(jnp.sum(patch * wproj, axis=0), axis=0, keepdims=True) + bproj
                ypad_ref[1 + oh, 1 + ow:2 + ow, :] = v                     # (1, C_out)

        # ---------- 4) PA: depthwise 3x3 + bias -> sigmoid gate -> multiply; emit tokens ----
        wpa = wpa_ref[...]                                                 # (3, 3, C_out), hoisted
        gate0 = jnp.broadcast_to(bpa_ref[...], (WO, C_out))                # acc initialised from bias
        for oh in range(HO):
            gate = gate0
            for kh in range(3):
                for kw in range(3):
                    gate = gate + (ypad_ref[oh + kh, kw:kw + WO, :] *
                                   wpa[kh, kw:kw + 1, :])
            y_row = ypad_ref[1 + oh, 1:1 + WO, :]                          # (WO, C_out)
            tok_ref[oh * WO:(oh + 1) * WO, :] = y_row * jax.nn.sigmoid(gate)

        # ---------- 5) LayerNorm + Linear over the (N, C_out) tokens ----------
        t = tok_ref[...]                                                   # (N, C_out)
        mu_t = jnp.mean(t, axis=-1, keepdims=True)
        d_t = t - mu_t
        var_t = jnp.mean(d_t * d_t, axis=-1, keepdims=True)
        tn = d_t * lax.rsqrt(var_t + LN_EPS) * lng_ref[...] + lnb_ref[...]
        out = jnp.dot(tn, wlin_ref[...],
                      preferred_element_type=jnp.float32) + blin_ref[...]
        o_ref[0] = out.astype(o_ref.dtype)

    return kernel


def patch_embed_forward(x_nchw, params, *, patch_size=4, groups=32):
    """x_nchw: (B, C_in, H, W).  Returns ((B, N, C_out) tokens, (H//p, W//p))."""
    B, C_in, H, W = x_nchw.shape
    C_out = int(params["b_proj"].shape[0])
    assert C_in == groups, "proj path assumes one input channel per conv group"
    assert C_out % groups == 0 and H % patch_size == 0 and W % patch_size == 0
    ksz, pad = patch_size + 1, patch_size // 2
    HO, WO = H // patch_size, W // patch_size
    N = HO * WO
    M = C_out // C_in

    # One-time parameter repacking (channels-last; internal channel order c' = m*G + g).
    perm = np.arange(C_out).reshape(C_in, M).T.reshape(-1)                 # perm[m*G+g] = g*M+m
    wproj_k = jnp.transpose(params["w_proj"][:, 0, :, :][perm], (1, 2, 0))  # (ksz, ksz, C_out)
    bproj_k = params["b_proj"][perm].reshape(1, C_out)
    wpa_k = jnp.transpose(params["w_pa"][:, 0, :, :][perm], (1, 2, 0))      # (3, 3, C_out)
    bpa_k = params["b_pa"][perm].reshape(1, C_out)
    lng_k = params["ln_g"][perm].reshape(1, C_out)
    lnb_k = params["ln_b"][perm].reshape(1, C_out)
    wlin_k = jnp.transpose(params["w_lin"])[perm, :]                        # tokens_perm @ wlin_k
    blin_k = params["b_lin"].reshape(1, C_out)
    gng_k = params["gn_g"].reshape(1, C_in)
    gnb_k = params["gn_b"].reshape(1, C_in)

    # Single framework-layout conversion (NCHW -> channels-last); no pads / no output transpose.
    x = jnp.transpose(x_nchw, (0, 2, 3, 1))                                 # (B, H, W, C_in)

    kernel = _make_patch_embed_kernel(H, W, C_in, C_out, patch_size)
    out = pl.pallas_call(
        kernel,
        out_shape=jax.ShapeDtypeStruct((B, N, C_out), x_nchw.dtype),
        grid_spec=pltpu.PrefetchScalarGridSpec(
            num_scalar_prefetch=0,
            grid=(B,),
            in_specs=[
                pl.BlockSpec((1, H, W, C_in), lambda b: (b, 0, 0, 0)),
                pl.BlockSpec((1, C_in), lambda b: (0, 0)),
                pl.BlockSpec((1, C_in), lambda b: (0, 0)),
                pl.BlockSpec((ksz, ksz, C_out), lambda b: (0, 0, 0)),
                pl.BlockSpec((1, C_out), lambda b: (0, 0)),
                pl.BlockSpec((3, 3, C_out), lambda b: (0, 0, 0)),
                pl.BlockSpec((1, C_out), lambda b: (0, 0)),
                pl.BlockSpec((1, C_out), lambda b: (0, 0)),
                pl.BlockSpec((1, C_out), lambda b: (0, 0)),
                pl.BlockSpec((C_out, C_out), lambda b: (0, 0)),
                pl.BlockSpec((1, C_out), lambda b: (0, 0)),
            ],
            out_specs=pl.BlockSpec((1, N, C_out), lambda b: (b, 0, 0)),
            scratch_shapes=[
                pltpu.VMEM((H + 2 * pad, W + 2 * pad, C_out), jnp.float32),  # padded, replicated input
                pltpu.VMEM((HO + 2, WO + 2, C_out), jnp.float32),            # proj output + PA halo
                pltpu.VMEM((N, C_out), jnp.float32),                         # tokens
            ],
        ),
        compiler_params=pltpu.CompilerParams(
            dimension_semantics=("parallel",),
            vmem_limit_bytes=64 * 1024 * 1024,
        ),
    )(x, gng_k, gnb_k, wproj_k, bproj_k, wpa_k, bpa_k, lng_k, lnb_k, wlin_k, blin_k)

    return out, (HO, WO)


def patch_embed_reference(x, params, *, patch_size=4, groups=32):
    """Pure-JAX reference matching the PyTorch PatchEmbed forward."""
    B, C_in, H, W = x.shape
    C_out = int(params["b_proj"].shape[0])
    hp = lax.Precision.HIGHEST

    # GroupNorm(32, C_in), eps=1e-5
    xg = x.reshape(B, groups, -1)
    mu = jnp.mean(xg, axis=-1, keepdims=True)
    var = jnp.mean((xg - mu) ** 2, axis=-1, keepdims=True)
    xn = ((xg - mu) / jnp.sqrt(var + 1e-5)).reshape(B, C_in, H, W)
    xn = xn * params["gn_g"][None, :, None, None] + params["gn_b"][None, :, None, None]

    # proj: grouped conv k=patch+1, stride=patch, pad=patch//2
    pad = patch_size // 2
    y = lax.conv_general_dilated(
        xn, params["w_proj"], (patch_size, patch_size), ((pad, pad), (pad, pad)),
        dimension_numbers=("NCHW", "OIHW", "NCHW"),
        feature_group_count=groups, precision=hp,
    ) + params["b_proj"][None, :, None, None]

    # PA: y * sigmoid(depthwise 3x3(y) + b)
    g = lax.conv_general_dilated(
        y, params["w_pa"], (1, 1), ((1, 1), (1, 1)),
        dimension_numbers=("NCHW", "OIHW", "NCHW"),
        feature_group_count=C_out, precision=hp,
    ) + params["b_pa"][None, :, None, None]
    y = y * jax.nn.sigmoid(g)

    # flatten -> LayerNorm(eps=1e-6) -> Linear
    t = y.reshape(B, C_out, -1).transpose(0, 2, 1)                          # (B, N, C_out)
    mu_t = jnp.mean(t, axis=-1, keepdims=True)
    var_t = jnp.mean((t - mu_t) ** 2, axis=-1, keepdims=True)
    t = (t - mu_t) / jnp.sqrt(var_t + 1e-6)
    t = t * params["ln_g"][None, None, :] + params["ln_b"][None, None, :]
    out = jnp.einsum("bnc,oc->bno", t, params["w_lin"], precision=hp) \
        + params["b_lin"][None, None, :]
    return out, (H // patch_size, W // patch_size)


if __name__ == "__main__":
    # Small shapes consistent with the module: groups=32 => in_ch must be a multiple of 32;
    # out_ch chosen as 128 (a multiple of 32 that exactly fills the 128 TPU lanes).
    B, C_in, H, W = 2, 32, 16, 16
    C_out, patch = 128, 4
    ksz = patch + 1

    keys = jax.random.split(jax.random.PRNGKey(0), 11)
    x = jax.random.normal(keys[0], (B, C_in, H, W), dtype=jnp.float32)

    b_proj_init = 1.0 / np.sqrt(1 * ksz * ksz)          # fan_in = (in_ch/groups)*k*k
    b_pa_init = 1.0 / np.sqrt(1 * 3 * 3)
    b_lin_init = 1.0 / np.sqrt(C_out)
    params = {
        "gn_g": 1.0 + 0.1 * jax.random.normal(keys[1], (C_in,), jnp.float32),
        "gn_b": 0.1 * jax.random.normal(keys[2], (C_in,), jnp.float32),
        "w_proj": jax.random.uniform(keys[3], (C_out, C_in // 32, ksz, ksz), jnp.float32,
                                     -b_proj_init, b_proj_init),
        "b_proj": jax.random.uniform(keys[4], (C_out,), jnp.float32, -b_proj_init, b_proj_init),
        "w_pa": jax.random.uniform(keys[5], (C_out, 1, 3, 3), jnp.float32, -b_pa_init, b_pa_init),
        "b_pa": jax.random.uniform(keys[6], (C_out,), jnp.float32, -b_pa_init, b_pa_init),
        "ln_g": 1.0 + 0.1 * jax.random.normal(keys[7], (C_out,), jnp.float32),
        "ln_b": 0.1 * jax.random.normal(keys[8], (C_out,), jnp.float32),
        "w_lin": jax.random.uniform(keys[9], (C_out, C_out), jnp.float32, -b_lin_init, b_lin_init),
        "b_lin": jax.random.uniform(keys[10], (C_out,), jnp.float32, -b_lin_init, b_lin_init),
    }

    out, hw = patch_embed_forward(x, params, patch_size=patch, groups=32)
    out = jax.block_until_ready(out)

    ref, hw_ref = patch_embed_reference(x, params, patch_size=patch, groups=32)
    ref = jax.block_until_ready(ref)

    assert out.shape == (B, (H // patch) * (W // patch), C_out)
    assert hw == (H // patch, W // patch) and hw == hw_ref
    # Tolerance covers MXU f32 matmul emulation differences vs the HIGHEST-precision reference.
    np.testing.assert_allclose(np.asarray(out), np.asarray(ref), rtol=1e-2, atol=1e-2)
    print("KERNEL_OK")
</pallas_src>

<mosaic_0001>
module attributes {stable_mosaic.version = 11 : i64} {
  func.func @kernel(%arg0: i32, %arg1: memref<1x16x16x32xf32, #tpu.memory_space<vmem>>, %arg2: memref<1x32xf32, #tpu.memory_space<vmem>>, %arg3: memref<1x32xf32, #tpu.memory_space<vmem>>, %arg4: memref<5x5x128xf32, #tpu.memory_space<vmem>>, %arg5: memref<1x128xf32, #tpu.memory_space<vmem>>, %arg6: memref<3x3x128xf32, #tpu.memory_space<vmem>>, %arg7: memref<1x128xf32, #tpu.memory_space<vmem>>, %arg8: memref<1x128xf32, #tpu.memory_space<vmem>>, %arg9: memref<1x128xf32, #tpu.memory_space<vmem>>, %arg10: memref<128x128xf32, #tpu.memory_space<vmem>>, %arg11: memref<1x128xf32, #tpu.memory_space<vmem>>, %arg12: memref<1x16x128xf32, #tpu.memory_space<vmem>>, %arg13: memref<20x20x128xf32, #tpu.memory_space<vmem>>, %arg14: memref<6x6x128xf32, #tpu.memory_space<vmem>>, %arg15: memref<16x128xf32, #tpu.memory_space<vmem>>) attributes {dimension_semantics = [#tpu.dimension_semantics<parallel>], iteration_bounds = array<i64: 2>, scalar_prefetch = 0 : i64, scratch_operands = 3 : i64, tpu.core_type = #tpu.core_type<tc>, window_params = [{transform_indices = @transform_0, window_bounds = array<i64: 1, 16, 16, 32>}, {pipeline_mode = #tpu.pipeline_mode<synchronous>, transform_indices = @transform_1, window_bounds = array<i64: 1, 32>}, {pipeline_mode = #tpu.pipeline_mode<synchronous>, transform_indices = @transform_2, window_bounds = array<i64: 1, 32>}, {pipeline_mode = #tpu.pipeline_mode<synchronous>, transform_indices = @transform_3, window_bounds = array<i64: 5, 5, 128>}, {pipeline_mode = #tpu.pipeline_mode<synchronous>, transform_indices = @transform_4, window_bounds = array<i64: 1, 128>}, {pipeline_mode = #tpu.pipeline_mode<synchronous>, transform_indices = @transform_5, window_bounds = array<i64: 3, 3, 128>}, {pipeline_mode = #tpu.pipeline_mode<synchronous>, transform_indices = @transform_6, window_bounds = array<i64: 1, 128>}, {pipeline_mode = #tpu.pipeline_mode<synchronous>, transform_indices = @transform_7, window_bounds = array<i64: 1, 128>}, {pipeline_mode = #tpu.pipeline_mode<synchronous>, transform_indices = @transform_8, window_bounds = array<i64: 1, 128>}, {pipeline_mode = #tpu.pipeline_mode<synchronous>, transform_indices = @transform_9, window_bounds = array<i64: 128, 128>}, {pipeline_mode = #tpu.pipeline_mode<synchronous>, transform_indices = @transform_10, window_bounds = array<i64: 1, 128>}, {transform_indices = @transform_11, window_bounds = array<i64: 1, 16, 128>}]} {
    %c0 = arith.constant 0 : index
    %c0_0 = arith.constant 0 : index
    %c0_1 = arith.constant 0 : index
    %c0_2 = arith.constant 0 : index
    %0 = vector.load %arg1[%c0, %c0_0, %c0_1, %c0_2] : memref<1x16x16x32xf32, #tpu.memory_space<vmem>>, vector<1x16x16x32xf32>
    %1 = vector.shape_cast %0 : vector<1x16x16x32xf32> to vector<16x16x32xf32>
    %cst = arith.constant dense<0.000000e+00> : vector<16x32xf32>
    %2 = vector.multi_reduction <add>, %1, %cst [0] : vector<16x16x32xf32> to vector<16x32xf32>
    %3 = vector.shape_cast %2 : vector<16x32xf32> to vector<1x16x32xf32>
    %cst_3 = arith.constant dense<0.000000e+00> : vector<1x32xf32>
    %4 = vector.multi_reduction <add>, %3, %cst_3 [1] : vector<1x16x32xf32> to vector<1x32xf32>
    %5 = vector.shape_cast %4 : vector<1x32xf32> to vector<1x1x32xf32>
    %cst_4 = arith.constant 3.906250e-03 : f32
    %6 = vector.broadcast %cst_4 : f32 to vector<1x1x32xf32>
    %7 = arith.mulf %5, %6 : vector<1x1x32xf32>
    %8 = vector.broadcast %7 : vector<1x1x32xf32> to vector<16x16x32xf32>
    %9 = arith.subf %1, %8 : vector<16x16x32xf32>
    %10 = arith.mulf %9, %9 : vector<16x16x32xf32>
    %cst_5 = arith.constant dense<0.000000e+00> : vector<16x32xf32>
    %11 = vector.multi_reduction <add>, %10, %cst_5 [0] : vector<16x16x32xf32> to vector<16x32xf32>
    %12 = vector.shape_cast %11 : vector<16x32xf32> to vector<1x16x32xf32>
    %cst_6 = arith.constant dense<0.000000e+00> : vector<1x32xf32>
    %13 = vector.multi_reduction <add>, %12, %cst_6 [1] : vector<1x16x32xf32> to vector<1x32xf32>
    %14 = vector.shape_cast %13 : vector<1x32xf32> to vector<1x1x32xf32>
    %cst_7 = arith.constant 3.906250e-03 : f32
    %15 = vector.broadcast %cst_7 : f32 to vector<1x1x32xf32>
    %16 = arith.mulf %14, %15 : vector<1x1x32xf32>
    %c0_8 = arith.constant 0 : index
    %c0_9 = arith.constant 0 : index
    %17 = vector.load %arg2[%c0_8, %c0_9] : memref<1x32xf32, #tpu.memory_space<vmem>>, vector<1x32xf32>
    %18 = vector.shape_cast %17 : vector<1x32xf32> to vector<1x1x32xf32>
    %c0_10 = arith.constant 0 : index
    %c0_11 = arith.constant 0 : index
    %19 = vector.load %arg3[%c0_10, %c0_11] : memref<1x32xf32, #tpu.memory_space<vmem>>, vector<1x32xf32>
    %20 = vector.shape_cast %19 : vector<1x32xf32> to vector<1x1x32xf32>
    %cst_12 = arith.constant 9.99999974E-6 : f32
    %21 = vector.broadcast %cst_12 : f32 to vector<1x1x32xf32>
    %22 = arith.addf %16, %21 : vector<1x1x32xf32>
    %23 = math.rsqrt %22 : vector<1x1x32xf32>
    %24 = vector.broadcast %23 : vector<1x1x32xf32> to vector<16x16x32xf32>
    %25 = arith.mulf %9, %24 : vector<16x16x32xf32>
    %26 = vector.broadcast %18 : vector<1x1x32xf32> to vector<16x16x32xf32>
    %27 = arith.mulf %25, %26 : vector<16x16x32xf32>
    %28 = vector.broadcast %20 : vector<1x1x32xf32> to vector<16x16x32xf32>
    %29 = arith.addf %27, %28 : vector<16x16x32xf32>
    %cst_13 = arith.constant 0.000000e+00 : f32
    %30 = vector.broadcast %cst_13 : f32 to vector<20x20x128xf32>
    %c0_14 = arith.constant 0 : index
    %c0_15 = arith.constant 0 : index
    %c0_16 = arith.constant 0 : index
    %31 = vector.load %arg13[%c0_14, %c0_15, %c0_16] : memref<20x20x128xf32, #tpu.memory_space<vmem>>, vector<20x20x128xf32>
    tpu.vector_store %arg13[%c0_14, %c0_15, %c0_16], %30 {strides = array<i32>} : memref<20x20x128xf32, #tpu.memory_space<vmem>>, vector<20x20x128xf32>,
    %c2 = arith.constant 2 : index
    %c2_17 = arith.constant 2 : index
    %c0_18 = arith.constant 0 : index
    %32 = vector.load %arg13[%c2, %c2_17, %c0_18] : memref<20x20x128xf32, #tpu.memory_space<vmem>>, vector<16x16x32xf32>
    tpu.vector_store %arg13[%c2, %c2_17, %c0_18], %29 {strides = array<i32>} : memref<20x20x128xf32, #tpu.memory_space<vmem>>, vector<16x16x32xf32>,
    %c2_19 = arith.constant 2 : index
    %c2_20 = arith.constant 2 : index
    %c32 = arith.constant 32 : index
    %33 = vector.load %arg13[%c2_19, %c2_20, %c32] : memref<20x20x128xf32, #tpu.memory_space<vmem>>, vector<16x16x32xf32>
    tpu.vector_store %arg13[%c2_19, %c2_20, %c32], %29 {strides = array<i32>} : memref<20x20x128xf32, #tpu.memory_space<vmem>>, vector<16x16x32xf32>,
    %c2_21 = arith.constant 2 : index
    %c2_22 = arith.constant 2 : index
    %c64 = arith.constant 64 : index
    %34 = vector.load %arg13[%c2_21, %c2_22, %c64] : memref<20x20x128xf32, #tpu.memory_space<vmem>>, vector<16x16x32xf32>
    tpu.vector_store %arg13[%c2_21, %c2_22, %c64], %29 {strides = array<i32>} : memref<20x20x128xf32, #tpu.memory_space<vmem>>, vector<16x16x32xf32>,
    %c2_23 = arith.constant 2 : index
    %c2_24 = arith.constant 2 : index
    %c96 = arith.constant 96 : index
    %35 = vector.load %arg13[%c2_23, %c2_24, %c96] : memref<20x20x128xf32, #tpu.memory_space<vmem>>, vector<16x16x32xf32>
    tpu.vector_store %arg13[%c2_23, %c2_24, %c96], %29 {strides = array<i32>} : memref<20x20x128xf32, #tpu.memory_space<vmem>>, vector<16x16x32xf32>,
    %c0_25 = arith.constant 0 : index
    %c0_26 = arith.constant 0 : index
    %c0_27 = arith.constant 0 : index
    %36 = vector.load %arg4[%c0_25, %c0_26, %c0_27] : memref<5x5x128xf32, #tpu.memory_space<vmem>>, vector<5x5x128xf32>
    %c0_28 = arith.constant 0 : index
    %c0_29 = arith.constant 0 : index
    %37 = vector.load %arg5[%c0_28, %c0_29] : memref<1x128xf32, #tpu.memory_space<vmem>>, vector<1x128xf32>
    %cst_30 = arith.constant 0.000000e+00 : f32
    %38 = vector.broadcast %cst_30 : f32 to vector<6x6x128xf32>
    %c0_31 = arith.constant 0 : index
    %c0_32 = arith.constant 0 : index
    %c0_33 = arith.constant 0 : index
    %39 = vector.load %arg14[%c0_31, %c0_32, %c0_33] : memref<6x6x128xf32, #tpu.memory_space<vmem>>, vector<6x6x128xf32>
    tpu.vector_store %arg14[%c0_31, %c0_32, %c0_33], %38 {strides = array<i32>} : memref<6x6x128xf32, #tpu.memory_space<vmem>>, vector<6x6x128xf32>,
    %c0_34 = arith.constant 0 : index
    %c0_35 = arith.constant 0 : index
    %c0_36 = arith.constant 0 : index
    %40 = vector.load %arg13[%c0_34, %c0_35, %c0_36] : memref<20x20x128xf32, #tpu.memory_space<vmem>>, vector<5x5x128xf32>
    %41 = arith.mulf %40, %36 : vector<5x5x128xf32>
    %cst_37 = arith.constant dense<0.000000e+00> : vector<5x128xf32>
    %42 = vector.multi_reduction <add>, %41, %cst_37 [0] : vector<5x5x128xf32> to vector<5x128xf32>
    %cst_38 = arith.constant dense<0.000000e+00> : vector<128xf32>
    %43 = vector.multi_reduction <add>, %42, %cst_38 [0] : vector<5x128xf32> to vector<128xf32>
    %44 = vector.shape_cast %43 : vector<128xf32> to vector<1x128xf32>
    %45 = arith.addf %44, %37 : vector<1x128xf32>
    %c1 = arith.constant 1 : index
    %c1_39 = arith.constant 1 : index
    %c0_40 = arith.constant 0 : index
    %46 = vector.load %arg14[%c1, %c1_39, %c0_40] : memref<6x6x128xf32, #tpu.memory_space<vmem>>, vector<1x1x128xf32>
    %47 = vector.shape_cast %46 : vector<1x1x128xf32> to vector<1x128xf32>
    %48 = vector.shape_cast %45 : vector<1x128xf32> to vector<1x1x128xf32>
    tpu.vector_store %arg14[%c1, %c1_39, %c0_40], %48 {strides = array<i32>} : memref<6x6x128xf32, #tpu.memory_space<vmem>>, vector<1x1x128xf32>,
    %c0_41 = arith.constant 0 : index
    %c4 = arith.constant 4 : index
    %c0_42 = arith.constant 0 : index
    %49 = vector.load %arg13[%c0_41, %c4, %c0_42] : memref<20x20x128xf32, #tpu.memory_space<vmem>>, vector<5x5x128xf32>
    %50 = arith.mulf %49, %36 : vector<5x5x128xf32>
    %cst_43 = arith.constant dense<0.000000e+00> : vector<5x128xf32>
    %51 = vector.multi_reduction <add>, %50, %cst_43 [0] : vector<5x5x128xf32> to vector<5x128xf32>
    %cst_44 = arith.constant dense<0.000000e+00> : vector<128xf32>
    %52 = vector.multi_reduction <add>, %51, %cst_44 [0] : vector<5x128xf32> to vector<128xf32>
    %53 = vector.shape_cast %52 : vector<128xf32> to vector<1x128xf32>
    %54 = arith.addf %53, %37 : vector<1x128xf32>
    %c1_45 = arith.constant 1 : index
    %c2_46 = arith.constant 2 : index
    %c0_47 = arith.constant 0 : index
    %55 = vector.load %arg14[%c1_45, %c2_46, %c0_47] : memref<6x6x128xf32, #tpu.memory_space<vmem>>, vector<1x1x128xf32>
    %56 = vector.shape_cast %55 : vector<1x1x128xf32> to vector<1x128xf32>
    %57 = vector.shape_cast %54 : vector<1x128xf32> to vector<1x1x128xf32>
    tpu.vector_store %arg14[%c1_45, %c2_46, %c0_47], %57 {strides = array<i32>} : memref<6x6x128xf32, #tpu.memory_space<vmem>>, vector<1x1x128xf32>,
    %c0_48 = arith.constant 0 : index
    %c8 = arith.constant 8 : index
    %c0_49 = arith.constant 0 : index
    %58 = vector.load %arg13[%c0_48, %c8, %c0_49] : memref<20x20x128xf32, #tpu.memory_space<vmem>>, vector<5x5x128xf32>
    %59 = arith.mulf %58, %36 : vector<5x5x128xf32>
    %cst_50 = arith.constant dense<0.000000e+00> : vector<5x128xf32>
    %60 = vector.multi_reduction <add>, %59, %cst_50 [0] : vector<5x5x128xf32> to vector<5x128xf32>
    %cst_51 = arith.constant dense<0.000000e+00> : vector<128xf32>
    %61 = vector.multi_reduction <add>, %60, %cst_51 [0] : vector<5x128xf32> to vector<128xf32>
    %62 = vector.shape_cast %61 : vector<128xf32> to vector<1x128xf32>
    %63 = arith.addf %62, %37 : vector<1x128xf32>
    %c1_52 = arith.constant 1 : index
    %c3 = arith.constant 3 : index
    %c0_53 = arith.constant 0 : index
    %64 = vector.load %arg14[%c1_52, %c3, %c0_53] : memref<6x6x128xf32, #tpu.memory_space<vmem>>, vector<1x1x128xf32>
    %65 = vector.shape_cast %64 : vector<1x1x128xf32> to vector<1x128xf32>
    %66 = vector.shape_cast %63 : vector<1x128xf32> to vector<1x1x128xf32>
    tpu.vector_store %arg14[%c1_52, %c3, %c0_53], %66 {strides = array<i32>} : memref<6x6x128xf32, #tpu.memory_space<vmem>>, vector<1x1x128xf32>,
    %c0_54 = arith.constant 0 : index
    %c12 = arith.constant 12 : index
    %c0_55 = arith.constant 0 : index
    %67 = vector.load %arg13[%c0_54, %c12, %c0_55] : memref<20x20x128xf32, #tpu.memory_space<vmem>>, vector<5x5x128xf32>
    %68 = arith.mulf %67, %36 : vector<5x5x128xf32>
    %cst_56 = arith.constant dense<0.000000e+00> : vector<5x128xf32>
    %69 = vector.multi_reduction <add>, %68, %cst_56 [0] : vector<5x5x128xf32> to vector<5x128xf32>
    %cst_57 = arith.constant dense<0.000000e+00> : vector<128xf32>
    %70 = vector.multi_reduction <add>, %69, %cst_57 [0] : vector<5x128xf32> to vector<128xf32>
    %71 = vector.shape_cast %70 : vector<128xf32> to vector<1x128xf32>
    %72 = arith.addf %71, %37 : vector<1x128xf32>
    %c1_58 = arith.constant 1 : index
    %c4_59 = arith.constant 4 : index
    %c0_60 = arith.constant 0 : index
    %73 = vector.load %arg14[%c1_58, %c4_59, %c0_60] : memref<6x6x128xf32, #tpu.memory_space<vmem>>, vector<1x1x128xf32>
    %74 = vector.shape_cast %73 : vector<1x1x128xf32> to vector<1x128xf32>
    %75 = vector.shape_cast %72 : vector<1x128xf32> to vector<1x1x128xf32>
    tpu.vector_store %arg14[%c1_58, %c4_59, %c0_60], %75 {strides = array<i32>} : memref<6x6x128xf32, #tpu.memory_space<vmem>>, vector<1x1x128xf32>,
    %c4_61 = arith.constant 4 : index
    %c0_62 = arith.constant 0 : index
    %c0_63 = arith.constant 0 : index
    %76 = vector.load %arg13[%c4_61, %c0_62, %c0_63] : memref<20x20x128xf32, #tpu.memory_space<vmem>>, vector<5x5x128xf32>
    %77 = arith.mulf %76, %36 : vector<5x5x128xf32>
    %cst_64 = arith.constant dense<0.000000e+00> : vector<5x128xf32>
    %78 = vector.multi_reduction <add>, %77, %cst_64 [0] : vector<5x5x128xf32> to vector<5x128xf32>
    %cst_65 = arith.constant dense<0.000000e+00> : vector<128xf32>
    %79 = vector.multi_reduction <add>, %78, %cst_65 [0] : vector<5x128xf32> to vector<128xf32>
    %80 = vector.shape_cast %79 : vector<128xf32> to vector<1x128xf32>
    %81 = arith.addf %80, %37 : vector<1x128xf32>
    %c2_66 = arith.constant 2 : index
    %c1_67 = arith.constant 1 : index
    %c0_68 = arith.constant 0 : index
    %82 = vector.load %arg14[%c2_66, %c1_67, %c0_68] : memref<6x6x128xf32, #tpu.memory_space<vmem>>, vector<1x1x128xf32>
    %83 = vector.shape_cast %82 : vector<1x1x128xf32> to vector<1x128xf32>
    %84 = vector.shape_cast %81 : vector<1x128xf32> to vector<1x1x128xf32>
    tpu.vector_store %arg14[%c2_66, %c1_67, %c0_68], %84 {strides = array<i32>} : memref<6x6x128xf32, #tpu.memory_space<vmem>>, vector<1x1x128xf32>,
    %c4_69 = arith.constant 4 : index
    %c4_70 = arith.constant 4 : index
    %c0_71 = arith.constant 0 : index
    %85 = vector.load %arg13[%c4_69, %c4_70, %c0_71] : memref<20x20x128xf32, #tpu.memory_space<vmem>>, vector<5x5x128xf32>
    %86 = arith.mulf %85, %36 : vector<5x5x128xf32>
    %cst_72 = arith.constant dense<0.000000e+00> : vector<5x128xf32>
    %87 = vector.multi_reduction <add>, %86, %cst_72 [0] : vector<5x5x128xf32> to vector<5x128xf32>
    %cst_73 = arith.constant dense<0.000000e+00> : vector<128xf32>
    %88 = vector.multi_reduction <add>, %87, %cst_73 [0] : vector<5x128xf32> to vector<128xf32>
    %89 = vector.shape_cast %88 : vector<128xf32> to vector<1x128xf32>
    %90 = arith.addf %89, %37 : vector<1x128xf32>
    %c2_74 = arith.constant 2 : index
    %c2_75 = arith.constant 2 : index
    %c0_76 = arith.constant 0 : index
    %91 = vector.load %arg14[%c2_74, %c2_75, %c0_76] : memref<6x6x128xf32, #tpu.memory_space<vmem>>, vector<1x1x128xf32>
    %92 = vector.shape_cast %91 : vector<1x1x128xf32> to vector<1x128xf32>
    %93 = vector.shape_cast %90 : vector<1x128xf32> to vector<1x1x128xf32>
    tpu.vector_store %arg14[%c2_74, %c2_75, %c0_76], %93 {strides = array<i32>} : memref<6x6x128xf32, #tpu.memory_space<vmem>>, vector<1x1x128xf32>,
    %c4_77 = arith.constant 4 : index
    %c8_78 = arith.constant 8 : index
    %c0_79 = arith.constant 0 : index
    %94 = vector.load %arg13[%c4_77, %c8_78, %c0_79] : memref<20x20x128xf32, #tpu.memory_space<vmem>>, vector<5x5x128xf32>
    %95 = arith.mulf %94, %36 : vector<5x5x128xf32>
    %cst_80 = arith.constant dense<0.000000e+00> : vector<5x128xf32>
    %96 = vector.multi_reduction <add>, %95, %cst_80 [0] : vector<5x5x128xf32> to vector<5x128xf32>
    %cst_81 = arith.constant dense<0.000000e+00> : vector<128xf32>
    %97 = vector.multi_reduction <add>, %96, %cst_81 [0] : vector<5x128xf32> to vector<128xf32>
    %98 = vector.shape_cast %97 : vector<128xf32> to vector<1x128xf32>
    %99 = arith.addf %98, %37 : vector<1x128xf32>
    %c2_82 = arith.constant 2 : index
    %c3_83 = arith.constant 3 : index
    %c0_84 = arith.constant 0 : index
    %100 = vector.load %arg14[%c2_82, %c3_83, %c0_84] : memref<6x6x128xf32, #tpu.memory_space<vmem>>, vector<1x1x128xf32>
    %101 = vector.shape_cast %100 : vector<1x1x128xf32> to vector<1x128xf32>
    %102 = vector.shape_cast %99 : vector<1x128xf32> to vector<1x1x128xf32>
    tpu.vector_store %arg14[%c2_82, %c3_83, %c0_84], %102 {strides = array<i32>} : memref<6x6x128xf32, #tpu.memory_space<vmem>>, vector<1x1x128xf32>,
    %c4_85 = arith.constant 4 : index
    %c12_86 = arith.constant 12 : index
    %c0_87 = arith.constant 0 : index
    %103 = vector.load %arg13[%c4_85, %c12_86, %c0_87] : memref<20x20x128xf32, #tpu.memory_space<vmem>>, vector<5x5x128xf32>
    %104 = arith.mulf %103, %36 : vector<5x5x128xf32>
    %cst_88 = arith.constant dense<0.000000e+00> : vector<5x128xf32>
    %105 = vector.multi_reduction <add>, %104, %cst_88 [0] : vector<5x5x128xf32> to vector<5x128xf32>
    %cst_89 = arith.constant dense<0.000000e+00> : vector<128xf32>
    %106 = vector.multi_reduction <add>, %105, %cst_89 [0] : vector<5x128xf32> to vector<128xf32>
    %107 = vector.shape_cast %106 : vector<128xf32> to vector<1x128xf32>
    %108 = arith.addf %107, %37 : vector<1x128xf32>
    %c2_90 = arith.constant 2 : index
    %c4_91 = arith.constant 4 : index
    %c0_92 = arith.constant 0 : index
    %109 = vector.load %arg14[%c2_90, %c4_91, %c0_92] : memref<6x6x128xf32, #tpu.memory_space<vmem>>, vector<1x1x128xf32>
    %110 = vector.shape_cast %109 : vector<1x1x128xf32> to vector<1x128xf32>
    %111 = vector.shape_cast %108 : vector<1x128xf32> to vector<1x1x128xf32>
    tpu.vector_store %arg14[%c2_90, %c4_91, %c0_92], %111 {strides = array<i32>} : memref<6x6x128xf32, #tpu.memory_space<vmem>>, vector<1x1x128xf32>,
    %c8_93 = arith.constant 8 : index
    %c0_94 = arith.constant 0 : index
    %c0_95 = arith.constant 0 : index
    %112 = vector.load %arg13[%c8_93, %c0_94, %c0_95] : memref<20x20x128xf32, #tpu.memory_space<vmem>>, vector<5x5x128xf32>
    %113 = arith.mulf %112, %36 : vector<5x5x128xf32>
    %cst_96 = arith.constant dense<0.000000e+00> : vector<5x128xf32>
    %114 = vector.multi_reduction <add>, %113, %cst_96 [0] : vector<5x5x128xf32> to vector<5x128xf32>
    %cst_97 = arith.constant dense<0.000000e+00> : vector<128xf32>
    %115 = vector.multi_reduction <add>, %114, %cst_97 [0] : vector<5x128xf32> to vector<128xf32>
    %116 = vector.shape_cast %115 : vector<128xf32> to vector<1x128xf32>
    %117 = arith.addf %116, %37 : vector<1x128xf32>
    %c3_98 = arith.constant 3 : index
    %c1_99 = arith.constant 1 : index
    %c0_100 = arith.constant 0 : index
    %118 = vector.load %arg14[%c3_98, %c1_99, %c0_100] : memref<6x6x128xf32, #tpu.memory_space<vmem>>, vector<1x1x128xf32>
    %119 = vector.shape_cast %118 : vector<1x1x128xf32> to vector<1x128xf32>
    %120 = vector.shape_cast %117 : vector<1x128xf32> to vector<1x1x128xf32>
    tpu.vector_store %arg14[%c3_98, %c1_99, %c0_100], %120 {strides = array<i32>} : memref<6x6x128xf32, #tpu.memory_space<vmem>>, vector<1x1x128xf32>,
    %c8_101 = arith.constant 8 : index
    %c4_102 = arith.constant 4 : index
    %c0_103 = arith.constant 0 : index
    %121 = vector.load %arg13[%c8_101, %c4_102, %c0_103] : memref<20x20x128xf32, #tpu.memory_space<vmem>>, vector<5x5x128xf32>
    %122 = arith.mulf %121, %36 : vector<5x5x128xf32>
    %cst_104 = arith.constant dense<0.000000e+00> : vector<5x128xf32>
    %123 = vector.multi_reduction <add>, %122, %cst_104 [0] : vector<5x5x128xf32> to vector<5x128xf32>
    %cst_105 = arith.constant dense<0.000000e+00> : vector<128xf32>
    %124 = vector.multi_reduction <add>, %123, %cst_105 [0] : vector<5x128xf32> to vector<128xf32>
    %125 = vector.shape_cast %124 : vector<128xf32> to vector<1x128xf32>
    %126 = arith.addf %125, %37 : vector<1x128xf32>
    %c3_106 = arith.constant 3 : index
    %c2_107 = arith.constant 2 : index
    %c0_108 = arith.constant 0 : index
    %127 = vector.load %arg14[%c3_106, %c2_107, %c0_108] : memref<6x6x128xf32, #tpu.memory_space<vmem>>, vector<1x1x128xf32>
    %128 = vector.shape_cast %127 : vector<1x1x128xf32> to vector<1x128xf32>
    %129 = vector.shape_cast %126 : vector<1x128xf32> to vector<1x1x128xf32>
    tpu.vector_store %arg14[%c3_106, %c2_107, %c0_108], %129 {strides = array<i32>} : memref<6x6x128xf32, #tpu.memory_space<vmem>>, vector<1x1x128xf32>,
    %c8_109 = arith.constant 8 : index
    %c8_110 = arith.constant 8 : index
    %c0_111 = arith.constant 0 : index
    %130 = vector.load %arg13[%c8_109, %c8_110, %c0_111] : memref<20x20x128xf32, #tpu.memory_space<vmem>>, vector<5x5x128xf32>
    %131 = arith.mulf %130, %36 : vector<5x5x128xf32>
    %cst_112 = arith.constant dense<0.000000e+00> : vector<5x128xf32>
    %132 = vector.multi_reduction <add>, %131, %cst_112 [0] : vector<5x5x128xf32> to vector<5x128xf32>
    %cst_113 = arith.constant dense<0.000000e+00> : vector<128xf32>
    %133 = vector.multi_reduction <add>, %132, %cst_113 [0] : vector<5x128xf32> to vector<128xf32>
    %134 = vector.shape_cast %133 : vector<128xf32> to vector<1x128xf32>
    %135 = arith.addf %134, %37 : vector<1x128xf32>
    %c3_114 = arith.constant 3 : index
    %c3_115 = arith.constant 3 : index
    %c0_116 = arith.constant 0 : index
    %136 = vector.load %arg14[%c3_114, %c3_115, %c0_116] : memref<6x6x128xf32, #tpu.memory_space<vmem>>, vector<1x1x128xf32>
    %137 = vector.shape_cast %136 : vector<1x1x128xf32> to vector<1x128xf32>
    %138 = vector.shape_cast %135 : vector<1x128xf32> to vector<1x1x128xf32>
    tpu.vector_store %arg14[%c3_114, %c3_115, %c0_116], %138 {strides = array<i32>} : memref<6x6x128xf32, #tpu.memory_space<vmem>>, vector<1x1x128xf32>,
    %c8_117 = arith.constant 8 : index
    %c12_118 = arith.constant 12 : index
    %c0_119 = arith.constant 0 : index
    %139 = vector.load %arg13[%c8_117, %c12_118, %c0_119] : memref<20x20x128xf32, #tpu.memory_space<vmem>>, vector<5x5x128xf32>
    %140 = arith.mulf %139, %36 : vector<5x5x128xf32>
    %cst_120 = arith.constant dense<0.000000e+00> : vector<5x128xf32>
    %141 = vector.multi_reduction <add>, %140, %cst_120 [0] : vector<5x5x128xf32> to vector<5x128xf32>
    %cst_121 = arith.constant dense<0.000000e+00> : vector<128xf32>
    %142 = vector.multi_reduction <add>, %141, %cst_121 [0] : vector<5x128xf32> to vector<128xf32>
    %143 = vector.shape_cast %142 : vector<128xf32> to vector<1x128xf32>
    %144 = arith.addf %143, %37 : vector<1x128xf32>
    %c3_122 = arith.constant 3 : index
    %c4_123 = arith.constant 4 : index
    %c0_124 = arith.constant 0 : index
    %145 = vector.load %arg14[%c3_122, %c4_123, %c0_124] : memref<6x6x128xf32, #tpu.memory_space<vmem>>, vector<1x1x128xf32>
    %146 = vector.shape_cast %145 : vector<1x1x128xf32> to vector<1x128xf32>
    %147 = vector.shape_cast %144 : vector<1x128xf32> to vector<1x1x128xf32>
    tpu.vector_store %arg14[%c3_122, %c4_123, %c0_124], %147 {strides = array<i32>} : memref<6x6x128xf32, #tpu.memory_space<vmem>>, vector<1x1x128xf32>,
    %c12_125 = arith.constant 12 : index
    %c0_126 = arith.constant 0 : index
    %c0_127 = arith.constant 0 : index
    %148 = vector.load %arg13[%c12_125, %c0_126, %c0_127] : memref<20x20x128xf32, #tpu.memory_space<vmem>>, vector<5x5x128xf32>
    %149 = arith.mulf %148, %36 : vector<5x5x128xf32>
    %cst_128 = arith.constant dense<0.000000e+00> : vector<5x128xf32>
    %150 = vector.multi_reduction <add>, %149, %cst_128 [0] : vector<5x5x128xf32> to vector<5x128xf32>
    %cst_129 = arith.constant dense<0.000000e+00> : vector<128xf32>
    %151 = vector.multi_reduction <add>, %150, %cst_129 [0] : vector<5x128xf32> to vector<128xf32>
    %152 = vector.shape_cast %151 : vector<128xf32> to vector<1x128xf32>
    %153 = arith.addf %152, %37 : vector<1x128xf32>
    %c4_130 = arith.constant 4 : index
    %c1_131 = arith.constant 1 : index
    %c0_132 = arith.constant 0 : index
    %154 = vector.load %arg14[%c4_130, %c1_131, %c0_132] : memref<6x6x128xf32, #tpu.memory_space<vmem>>, vector<1x1x128xf32>
    %155 = vector.shape_cast %154 : vector<1x1x128xf32> to vector<1x128xf32>
    %156 = vector.shape_cast %153 : vector<1x128xf32> to vector<1x1x128xf32>
    tpu.vector_store %arg14[%c4_130, %c1_131, %c0_132], %156 {strides = array<i32>} : memref<6x6x128xf32, #tpu.memory_space<vmem>>, vector<1x1x128xf32>,
    %c12_133 = arith.constant 12 : index
    %c4_134 = arith.constant 4 : index
    %c0_135 = arith.constant 0 : index
    %157 = vector.load %arg13[%c12_133, %c4_134, %c0_135] : memref<20x20x128xf32, #tpu.memory_space<vmem>>, vector<5x5x128xf32>
    %158 = arith.mulf %157, %36 : vector<5x5x128xf32>
    %cst_136 = arith.constant dense<0.000000e+00> : vector<5x128xf32>
    %159 = vector.multi_reduction <add>, %158, %cst_136 [0] : vector<5x5x128xf32> to vector<5x128xf32>
    %cst_137 = arith.constant dense<0.000000e+00> : vector<128xf32>
    %160 = vector.multi_reduction <add>, %159, %cst_137 [0] : vector<5x128xf32> to vector<128xf32>
    %161 = vector.shape_cast %160 : vector<128xf32> to vector<1x128xf32>
    %162 = arith.addf %161, %37 : vector<1x128xf32>
    %c4_138 = arith.constant 4 : index
    %c2_139 = arith.constant 2 : index
    %c0_140 = arith.constant 0 : index
    %163 = vector.load %arg14[%c4_138, %c2_139, %c0_140] : memref<6x6x128xf32, #tpu.memory_space<vmem>>, vector<1x1x128xf32>
    %164 = vector.shape_cast %163 : vector<1x1x128xf32> to vector<1x128xf32>
    %165 = vector.shape_cast %162 : vector<1x128xf32> to vector<1x1x128xf32>
    tpu.vector_store %arg14[%c4_138, %c2_139, %c0_140], %165 {strides = array<i32>} : memref<6x6x128xf32, #tpu.memory_space<vmem>>, vector<1x1x128xf32>,
    %c12_141 = arith.constant 12 : index
    %c8_142 = arith.constant 8 : index
    %c0_143 = arith.constant 0 : index
    %166 = vector.load %arg13[%c12_141, %c8_142, %c0_143] : memref<20x20x128xf32, #tpu.memory_space<vmem>>, vector<5x5x128xf32>
    %167 = arith.mulf %166, %36 : vector<5x5x128xf32>
    %cst_144 = arith.constant dense<0.000000e+00> : vector<5x128xf32>
    %168 = vector.multi_reduction <add>, %167, %cst_144 [0] : vector<5x5x128xf32> to vector<5x128xf32>
    %cst_145 = arith.constant dense<0.000000e+00> : vector<128xf32>
    %169 = vector.multi_reduction <add>, %168, %cst_145 [0] : vector<5x128xf32> to vector<128xf32>
    %170 = vector.shape_cast %169 : vector<128xf32> to vector<1x128xf32>
    %171 = arith.addf %170, %37 : vector<1x128xf32>
    %c4_146 = arith.constant 4 : index
    %c3_147 = arith.constant 3 : index
    %c0_148 = arith.constant 0 : index
    %172 = vector.load %arg14[%c4_146, %c3_147, %c0_148] : memref<6x6x128xf32, #tpu.memory_space<vmem>>, vector<1x1x128xf32>
    %173 = vector.shape_cast %172 : vector<1x1x128xf32> to vector<1x128xf32>
    %174 = vector.shape_cast %171 : vector<1x128xf32> to vector<1x1x128xf32>
    tpu.vector_store %arg14[%c4_146, %c3_147, %c0_148], %174 {strides = array<i32>} : memref<6x6x128xf32, #tpu.memory_space<vmem>>, vector<1x1x128xf32>,
    %c12_149 = arith.constant 12 : index
    %c12_150 = arith.constant 12 : index
    %c0_151 = arith.constant 0 : index
    %175 = vector.load %arg13[%c12_149, %c12_150, %c0_151] : memref<20x20x128xf32, #tpu.memory_space<vmem>>, vector<5x5x128xf32>
    %176 = arith.mulf %175, %36 : vector<5x5x128xf32>
    %cst_152 = arith.constant dense<0.000000e+00> : vector<5x128xf32>
    %177 = vector.multi_reduction <add>, %176, %cst_152 [0] : vector<5x5x128xf32> to vector<5x128xf32>
    %cst_153 = arith.constant dense<0.000000e+00> : vector<128xf32>
    %178 = vector.multi_reduction <add>, %177, %cst_153 [0] : vector<5x128xf32> to vector<128xf32>
    %179 = vector.shape_cast %178 : vector<128xf32> to vector<1x128xf32>
    %180 = arith.addf %179, %37 : vector<1x128xf32>
    %c4_154 = arith.constant 4 : index
    %c4_155 = arith.constant 4 : index
    %c0_156 = arith.constant 0 : index
    %181 = vector.load %arg14[%c4_154, %c4_155, %c0_156] : memref<6x6x128xf32, #tpu.memory_space<vmem>>, vector<1x1x128xf32>
    %182 = vector.shape_cast %181 : vector<1x1x128xf32> to vector<1x128xf32>
    %183 = vector.shape_cast %180 : vector<1x128xf32> to vector<1x1x128xf32>
    tpu.vector_store %arg14[%c4_154, %c4_155, %c0_156], %183 {strides = array<i32>} : memref<6x6x128xf32, #tpu.memory_space<vmem>>, vector<1x1x128xf32>,
    %c0_157 = arith.constant 0 : index
    %c0_158 = arith.constant 0 : index
    %c0_159 = arith.constant 0 : index
    %184 = vector.load %arg6[%c0_157, %c0_158, %c0_159] : memref<3x3x128xf32, #tpu.memory_space<vmem>>, vector<3x3x128xf32>
    %c0_160 = arith.constant 0 : index
    %c0_161 = arith.constant 0 : index
    %185 = vector.load %arg7[%c0_160, %c0_161] : memref<1x128xf32, #tpu.memory_space<vmem>>, vector<1x128xf32>
    %186 = vector.shape_cast %185 : vector<1x128xf32> to vector<1x128xf32>
    %187 = vector.broadcast %186 : vector<1x128xf32> to vector<4x128xf32>
    %c0_162 = arith.constant 0 : index
    %c0_163 = arith.constant 0 : index
    %c0_164 = arith.constant 0 : index
    %188 = vector.load %arg14[%c0_162, %c0_163, %c0_164] : memref<6x6x128xf32, #tpu.memory_space<vmem>>, vector<1x4x128xf32>
    %189 = vector.shape_cast %188 : vector<1x4x128xf32> to vector<4x128xf32>
    %190 = vector.extract_strided_slice %184 {offsets = [0, 0, 0], sizes = [1, 1, 128], strides = [1, 1, 1]} : vector<3x3x128xf32> to vector<1x1x128xf32>
    %191 = vector.shape_cast %190 : vector<1x1x128xf32> to vector<1x128xf32>
    %192 = vector.broadcast %191 : vector<1x128xf32> to vector<4x128xf32>
    %193 = arith.mulf %189, %192 : vector<4x128xf32>
    %194 = arith.addf %187, %193 : vector<4x128xf32>
    %c0_165 = arith.constant 0 : index
    %c1_166 = arith.constant 1 : index
    %c0_167 = arith.constant 0 : index
    %195 = vector.load %arg14[%c0_165, %c1_166, %c0_167] : memref<6x6x128xf32, #tpu.memory_space<vmem>>, vector<1x4x128xf32>
    %196 = vector.shape_cast %195 : vector<1x4x128xf32> to vector<4x128xf32>
    %197 = vector.extract_strided_slice %184 {offsets = [0, 1, 0], sizes = [1, 1, 128], strides = [1, 1, 1]} : vector<3x3x128xf32> to vector<1x1x128xf32>
    %198 = vector.shape_cast %197 : vector<1x1x128xf32> to vector<1x128xf32>
    %199 = vector.broadcast %198 : vector<1x128xf32> to vector<4x128xf32>
    %200 = arith.mulf %196, %199 : vector<4x128xf32>
    %201 = arith.addf %194, %200 : vector<4x128xf32>
    %c0_168 = arith.constant 0 : index
    %c2_169 = arith.constant 2 : index
    %c0_170 = arith.constant 0 : index
    %202 = vector.load %arg14[%c0_168, %c2_169, %c0_170] : memref<6x6x128xf32, #tpu.memory_space<vmem>>, vector<1x4x128xf32>
    %203 = vector.shape_cast %202 : vector<1x4x128xf32> to vector<4x128xf32>
    %204 = vector.extract_strided_slice %184 {offsets = [0, 2, 0], sizes = [1, 1, 128], strides = [1, 1, 1]} : vector<3x3x128xf32> to vector<1x1x128xf32>
    %205 = vector.shape_cast %204 : vector<1x1x128xf32> to vector<1x128xf32>
    %206 = vector.broadcast %205 : vector<1x128xf32> to vector<4x128xf32>
    %207 = arith.mulf %203, %206 : vector<4x128xf32>
    %208 = arith.addf %201, %207 : vector<4x128xf32>
    %c1_171 = arith.constant 1 : index
    %c0_172 = arith.constant 0 : index
    %c0_173 = arith.constant 0 : index
    %209 = vector.load %arg14[%c1_171, %c0_172, %c0_173] : memref<6x6x128xf32, #tpu.memory_space<vmem>>, vector<1x4x128xf32>
    %210 = vector.shape_cast %209 : vector<1x4x128xf32> to vector<4x128xf32>
    %211 = vector.extract_strided_slice %184 {offsets = [1, 0, 0], sizes = [1, 1, 128], strides = [1, 1, 1]} : vector<3x3x128xf32> to vector<1x1x128xf32>
    %212 = vector.shape_cast %211 : vector<1x1x128xf32> to vector<1x128xf32>
    %213 = vector.broadcast %212 : vector<1x128xf32> to vector<4x128xf32>
    %214 = arith.mulf %210, %213 : vector<4x128xf32>
    %215 = arith.addf %208, %214 : vector<4x128xf32>
    %c1_174 = arith.constant 1 : index
    %c1_175 = arith.constant 1 : index
    %c0_176 = arith.constant 0 : index
    %216 = vector.load %arg14[%c1_174, %c1_175, %c0_176] : memref<6x6x128xf32, #tpu.memory_space<vmem>>, vector<1x4x128xf32>
    %217 = vector.shape_cast %216 : vector<1x4x128xf32> to vector<4x128xf32>
    %218 = vector.extract_strided_slice %184 {offsets = [1, 1, 0], sizes = [1, 1, 128], strides = [1, 1, 1]} : vector<3x3x128xf32> to vector<1x1x128xf32>
    %219 = vector.shape_cast %218 : vector<1x1x128xf32> to vector<1x128xf32>
    %220 = vector.broadcast %219 : vector<1x128xf32> to vector<4x128xf32>
    %221 = arith.mulf %217, %220 : vector<4x128xf32>
    %222 = arith.addf %215, %221 : vector<4x128xf32>
    %c1_177 = arith.constant 1 : index
    %c2_178 = arith.constant 2 : index
    %c0_179 = arith.constant 0 : index
    %223 = vector.load %arg14[%c1_177, %c2_178, %c0_179] : memref<6x6x128xf32, #tpu.memory_space<vmem>>, vector<1x4x128xf32>
    %224 = vector.shape_cast %223 : vector<1x4x128xf32> to vector<4x128xf32>
    %225 = vector.extract_strided_slice %184 {offsets = [1, 2, 0], sizes = [1, 1, 128], strides = [1, 1, 1]} : vector<3x3x128xf32> to vector<1x1x128xf32>
    %226 = vector.shape_cast %225 : vector<1x1x128xf32> to vector<1x128xf32>
    %227 = vector.broadcast %226 : vector<1x128xf32> to vector<4x128xf32>
    %228 = arith.mulf %224, %227 : vector<4x128xf32>
    %229 = arith.addf %222, %228 : vector<4x128xf32>
    %c2_180 = arith.constant 2 : index
    %c0_181 = arith.constant 0 : index
    %c0_182 = arith.constant 0 : index
    %230 = vector.load %arg14[%c2_180, %c0_181, %c0_182] : memref<6x6x128xf32, #tpu.memory_space<vmem>>, vector<1x4x128xf32>
    %231 = vector.shape_cast %230 : vector<1x4x128xf32> to vector<4x128xf32>
    %232 = vector.extract_strided_slice %184 {offsets = [2, 0, 0], sizes = [1, 1, 128], strides = [1, 1, 1]} : vector<3x3x128xf32> to vector<1x1x128xf32>
    %233 = vector.shape_cast %232 : vector<1x1x128xf32> to vector<1x128xf32>
    %234 = vector.broadcast %233 : vector<1x128xf32> to vector<4x128xf32>
    %235 = arith.mulf %231, %234 : vector<4x128xf32>
    %236 = arith.addf %229, %235 : vector<4x128xf32>
    %c2_183 = arith.constant 2 : index
    %c1_184 = arith.constant 1 : index
    %c0_185 = arith.constant 0 : index
    %237 = vector.load %arg14[%c2_183, %c1_184, %c0_185] : memref<6x6x128xf32, #tpu.memory_space<vmem>>, vector<1x4x128xf32>
    %238 = vector.shape_cast %237 : vector<1x4x128xf32> to vector<4x128xf32>
    %239 = vector.extract_strided_slice %184 {offsets = [2, 1, 0], sizes = [1, 1, 128], strides = [1, 1, 1]} : vector<3x3x128xf32> to vector<1x1x128xf32>
    %240 = vector.shape_cast %239 : vector<1x1x128xf32> to vector<1x128xf32>
    %241 = vector.broadcast %240 : vector<1x128xf32> to vector<4x128xf32>
    %242 = arith.mulf %238, %241 : vector<4x128xf32>
    %243 = arith.addf %236, %242 : vector<4x128xf32>
    %c2_186 = arith.constant 2 : index
    %c2_187 = arith.constant 2 : index
    %c0_188 = arith.constant 0 : index
    %244 = vector.load %arg14[%c2_186, %c2_187, %c0_188] : memref<6x6x128xf32, #tpu.memory_space<vmem>>, vector<1x4x128xf32>
    %245 = vector.shape_cast %244 : vector<1x4x128xf32> to vector<4x128xf32>
    %246 = vector.extract_strided_slice %184 {offsets = [2, 2, 0], sizes = [1, 1, 128], strides = [1, 1, 1]} : vector<3x3x128xf32> to vector<1x1x128xf32>
    %247 = vector.shape_cast %246 : vector<1x1x128xf32> to vector<1x128xf32>
    %248 = vector.broadcast %247 : vector<1x128xf32> to vector<4x128xf32>
    %249 = arith.mulf %245, %248 : vector<4x128xf32>
    %250 = arith.addf %243, %249 : vector<4x128xf32>
    %c1_189 = arith.constant 1 : index
    %c1_190 = arith.constant 1 : index
    %c0_191 = arith.constant 0 : index
    %251 = vector.load %arg14[%c1_189, %c1_190, %c0_191] : memref<6x6x128xf32, #tpu.memory_space<vmem>>, vector<1x4x128xf32>
    %252 = vector.shape_cast %251 : vector<1x4x128xf32> to vector<4x128xf32>
    %253 = arith.negf %250 : vector<4x128xf32>
    %254 = math.exp %253 : vector<4x128xf32>
    %cst_192 = arith.constant 1.000000e+00 : f32
    %255 = vector.broadcast %cst_192 : f32 to vector<4x128xf32>
    %256 = arith.addf %255, %254 : vector<4x128xf32>
    %257 = arith.divf %255, %256 : vector<4x128xf32>
    %258 = arith.mulf %252, %257 : vector<4x128xf32>
    %c0_193 = arith.constant 0 : index
    %c0_194 = arith.constant 0 : index
    %259 = vector.load %arg15[%c0_193, %c0_194] : memref<16x128xf32, #tpu.memory_space<vmem>>, vector<4x128xf32>
    tpu.vector_store %arg15[%c0_193, %c0_194], %258 {strides = array<i32>} : memref<16x128xf32, #tpu.memory_space<vmem>>, vector<4x128xf32>,
    %c1_195 = arith.constant 1 : index
    %c0_196 = arith.constant 0 : index
    %c0_197 = arith.constant 0 : index
    %260 = vector.load %arg14[%c1_195, %c0_196, %c0_197] : memref<6x6x128xf32, #tpu.memory_space<vmem>>, vector<1x4x128xf32>
    %261 = vector.shape_cast %260 : vector<1x4x128xf32> to vector<4x128xf32>
    %262 = vector.extract_strided_slice %184 {offsets = [0, 0, 0], sizes = [1, 1, 128], strides = [1, 1, 1]} : vector<3x3x128xf32> to vector<1x1x128xf32>
    %263 = vector.shape_cast %262 : vector<1x1x128xf32> to vector<1x128xf32>
    %264 = vector.broadcast %263 : vector<1x128xf32> to vector<4x128xf32>
    %265 = arith.mulf %261, %264 : vector<4x128xf32>
    %266 = arith.addf %187, %265 : vector<4x128xf32>
    %c1_198 = arith.constant 1 : index
    %c1_199 = arith.constant 1 : index
    %c0_200 = arith.constant 0 : index
    %267 = vector.load %arg14[%c1_198, %c1_199, %c0_200] : memref<6x6x128xf32, #tpu.memory_space<vmem>>, vector<1x4x128xf32>
    %268 = vector.shape_cast %267 : vector<1x4x128xf32> to vector<4x128xf32>
    %269 = vector.extract_strided_slice %184 {offsets = [0, 1, 0], sizes = [1, 1, 128], strides = [1, 1, 1]} : vector<3x3x128xf32> to vector<1x1x128xf32>
    %270 = vector.shape_cast %269 : vector<1x1x128xf32> to vector<1x128xf32>
    %271 = vector.broadcast %270 : vector<1x128xf32> to vector<4x128xf32>
    %272 = arith.mulf %268, %271 : vector<4x128xf32>
    %273 = arith.addf %266, %272 : vector<4x128xf32>
    %c1_201 = arith.constant 1 : index
    %c2_202 = arith.constant 2 : index
    %c0_203 = arith.constant 0 : index
    %274 = vector.load %arg14[%c1_201, %c2_202, %c0_203] : memref<6x6x128xf32, #tpu.memory_space<vmem>>, vector<1x4x128xf32>
    %275 = vector.shape_cast %274 : vector<1x4x128xf32> to vector<4x128xf32>
    %276 = vector.extract_strided_slice %184 {offsets = [0, 2, 0], sizes = [1, 1, 128], strides = [1, 1, 1]} : vector<3x3x128xf32> to vector<1x1x128xf32>
    %277 = vector.shape_cast %276 : vector<1x1x128xf32> to vector<1x128xf32>
    %278 = vector.broadcast %277 : vector<1x128xf32> to vector<4x128xf32>
    %279 = arith.mulf %275, %278 : vector<4x128xf32>
    %280 = arith.addf %273, %279 : vector<4x128xf32>
    %c2_204 = arith.constant 2 : index
    %c0_205 = arith.constant 0 : index
    %c0_206 = arith.constant 0 : index
    %281 = vector.load %arg14[%c2_204, %c0_205, %c0_206] : memref<6x6x128xf32, #tpu.memory_space<vmem>>, vector<1x4x128xf32>
    %282 = vector.shape_cast %281 : vector<1x4x128xf32> to vector<4x128xf32>
    %283 = vector.extract_strided_slice %184 {offsets = [1, 0, 0], sizes = [1, 1, 128], strides = [1, 1, 1]} : vector<3x3x128xf32> to vector<1x1x128xf32>
    %284 = vector.shape_cast %283 : vector<1x1x128xf32> to vector<1x128xf32>
    %285 = vector.broadcast %284 : vector<1x128xf32> to vector<4x128xf32>
    %286 = arith.mulf %282, %285 : vector<4x128xf32>
    %287 = arith.addf %280, %286 : vector<4x128xf32>
    %c2_207 = arith.constant 2 : index
    %c1_208 = arith.constant 1 : index
    %c0_209 = arith.constant 0 : index
    %288 = vector.load %arg14[%c2_207, %c1_208, %c0_209] : memref<6x6x128xf32, #tpu.memory_space<vmem>>, vector<1x4x128xf32>
    %289 = vector.shape_cast %288 : vector<1x4x128xf32> to vector<4x128xf32>
    %290 = vector.extract_strided_slice %184 {offsets = [1, 1, 0], sizes = [1, 1, 128], strides = [1, 1, 1]} : vector<3x3x128xf32> to vector<1x1x128xf32>
    %291 = vector.shape_cast %290 : vector<1x1x128xf32> to vector<1x128xf32>
    %292 = vector.broadcast %291 : vector<1x128xf32> to vector<4x128xf32>
    %293 = arith.mulf %289, %292 : vector<4x128xf32>
    %294 = arith.addf %287, %293 : vector<4x128xf32>
    %c2_210 = arith.constant 2 : index
    %c2_211 = arith.constant 2 : index
    %c0_212 = arith.constant 0 : index
    %295 = vector.load %arg14[%c2_210, %c2_211, %c0_212] : memref<6x6x128xf32, #tpu.memory_space<vmem>>, vector<1x4x128xf32>
    %296 = vector.shape_cast %295 : vector<1x4x128xf32> to vector<4x128xf32>
    %297 = vector.extract_strided_slice %184 {offsets = [1, 2, 0], sizes = [1, 1, 128], strides = [1, 1, 1]} : vector<3x3x128xf32> to vector<1x1x128xf32>
    %298 = vector.shape_cast %297 : vector<1x1x128xf32> to vector<1x128xf32>
    %299 = vector.broadcast %298 : vector<1x128xf32> to vector<4x128xf32>
    %300 = arith.mulf %296, %299 : vector<4x128xf32>
    %301 = arith.addf %294, %300 : vector<4x128xf32>
    %c3_213 = arith.constant 3 : index
    %c0_214 = arith.constant 0 : index
    %c0_215 = arith.constant 0 : index
    %302 = vector.load %arg14[%c3_213, %c0_214, %c0_215] : memref<6x6x128xf32, #tpu.memory_space<vmem>>, vector<1x4x128xf32>
    %303 = vector.shape_cast %302 : vector<1x4x128xf32> to vector<4x128xf32>
    %304 = vector.extract_strided_slice %184 {offsets = [2, 0, 0], sizes = [1, 1, 128], strides = [1, 1, 1]} : vector<3x3x128xf32> to vector<1x1x128xf32>
    %305 = vector.shape_cast %304 : vector<1x1x128xf32> to vector<1x128xf32>
    %306 = vector.broadcast %305 : vector<1x128xf32> to vector<4x128xf32>
    %307 = arith.mulf %303, %306 : vector<4x128xf32>
    %308 = arith.addf %301, %307 : vector<4x128xf32>
    %c3_216 = arith.constant 3 : index
    %c1_217 = arith.constant 1 : index
    %c0_218 = arith.constant 0 : index
    %309 = vector.load %arg14[%c3_216, %c1_217, %c0_218] : memref<6x6x128xf32, #tpu.memory_space<vmem>>, vector<1x4x128xf32>
    %310 = vector.shape_cast %309 : vector<1x4x128xf32> to vector<4x128xf32>
    %311 = vector.extract_strided_slice %184 {offsets = [2, 1, 0], sizes = [1, 1, 128], strides = [1, 1, 1]} : vector<3x3x128xf32> to vector<1x1x128xf32>
    %312 = vector.shape_cast %311 : vector<1x1x128xf32> to vector<1x128xf32>
    %313 = vector.broadcast %312 : vector<1x128xf32> to vector<4x128xf32>
    %314 = arith.mulf %310, %313 : vector<4x128xf32>
    %315 = arith.addf %308, %314 : vector<4x128xf32>
    %c3_219 = arith.constant 3 : index
    %c2_220 = arith.constant 2 : index
    %c0_221 = arith.constant 0 : index
    %316 = vector.load %arg14[%c3_219, %c2_220, %c0_221] : memref<6x6x128xf32, #tpu.memory_space<vmem>>, vector<1x4x128xf32>
    %317 = vector.shape_cast %316 : vector<1x4x128xf32> to vector<4x128xf32>
    %318 = vector.extract_strided_slice %184 {offsets = [2, 2, 0], sizes = [1, 1, 128], strides = [1, 1, 1]} : vector<3x3x128xf32> to vector<1x1x128xf32>
    %319 = vector.shape_cast %318 : vector<1x1x128xf32> to vector<1x128xf32>
    %320 = vector.broadcast %319 : vector<1x128xf32> to vector<4x128xf32>
    %321 = arith.mulf %317, %320 : vector<4x128xf32>
    %322 = arith.addf %315, %321 : vector<4x128xf32>
    %c2_222 = arith.constant 2 : index
    %c1_223 = arith.constant 1 : index
    %c0_224 = arith.constant 0 : index
    %323 = vector.load %arg14[%c2_222, %c1_223, %c0_224] : memref<6x6x128xf32, #tpu.memory_space<vmem>>, vector<1x4x128xf32>
    %324 = vector.shape_cast %323 : vector<1x4x128xf32> to vector<4x128xf32>
    %325 = arith.negf %322 : vector<4x128xf32>
    %326 = math.exp %325 : vector<4x128xf32>
    %cst_225 = arith.constant 1.000000e+00 : f32
    %327 = vector.broadcast %cst_225 : f32 to vector<4x128xf32>
    %328 = arith.addf %327, %326 : vector<4x128xf32>
    %329 = arith.divf %327, %328 : vector<4x128xf32>
    %330 = arith.mulf %324, %329 : vector<4x128xf32>
    %c4_226 = arith.constant 4 : index
    %c0_227 = arith.constant 0 : index
    %331 = vector.load %arg15[%c4_226, %c0_227] : memref<16x128xf32, #tpu.memory_space<vmem>>, vector<4x128xf32>
    tpu.vector_store %arg15[%c4_226, %c0_227], %330 {strides = array<i32>} : memref<16x128xf32, #tpu.memory_space<vmem>>, vector<4x128xf32>,
    %c2_228 = arith.constant 2 : index
    %c0_229 = arith.constant 0 : index
    %c0_230 = arith.constant 0 : index
    %332 = vector.load %arg14[%c2_228, %c0_229, %c0_230] : memref<6x6x128xf32, #tpu.memory_space<vmem>>, vector<1x4x128xf32>
    %333 = vector.shape_cast %332 : vector<1x4x128xf32> to vector<4x128xf32>
    %334 = vector.extract_strided_slice %184 {offsets = [0, 0, 0], sizes = [1, 1, 128], strides = [1, 1, 1]} : vector<3x3x128xf32> to vector<1x1x128xf32>
    %335 = vector.shape_cast %334 : vector<1x1x128xf32> to vector<1x128xf32>
    %336 = vector.broadcast %335 : vector<1x128xf32> to vector<4x128xf32>
    %337 = arith.mulf %333, %336 : vector<4x128xf32>
    %338 = arith.addf %187, %337 : vector<4x128xf32>
    %c2_231 = arith.constant 2 : index
    %c1_232 = arith.constant 1 : index
    %c0_233 = arith.constant 0 : index
    %339 = vector.load %arg14[%c2_231, %c1_232, %c0_233] : memref<6x6x128xf32, #tpu.memory_space<vmem>>, vector<1x4x128xf32>
    %340 = vector.shape_cast %339 : vector<1x4x128xf32> to vector<4x128xf32>
    %341 = vector.extract_strided_slice %184 {offsets = [0, 1, 0], sizes = [1, 1, 128], strides = [1, 1, 1]} : vector<3x3x128xf32> to vector<1x1x128xf32>
    %342 = vector.shape_cast %341 : vector<1x1x128xf32> to vector<1x128xf32>
    %343 = vector.broadcast %342 : vector<1x128xf32> to vector<4x128xf32>
    %344 = arith.mulf %340, %343 : vector<4x128xf32>
    %345 = arith.addf %338, %344 : vector<4x128xf32>
    %c2_234 = arith.constant 2 : index
    %c2_235 = arith.constant 2 : index
    %c0_236 = arith.constant 0 : index
    %346 = vector.load %arg14[%c2_234, %c2_235, %c0_236] : memref<6x6x128xf32, #tpu.memory_space<vmem>>, vector<1x4x128xf32>
    %347 = vector.shape_cast %346 : vector<1x4x128xf32> to vector<4x128xf32>
    %348 = vector.extract_strided_slice %184 {offsets = [0, 2, 0], sizes = [1, 1, 128], strides = [1, 1, 1]} : vector<3x3x128xf32> to vector<1x1x128xf32>
    %349 = vector.shape_cast %348 : vector<1x1x128xf32> to vector<1x128xf32>
    %350 = vector.broadcast %349 : vector<1x128xf32> to vector<4x128xf32>
    %351 = arith.mulf %347, %350 : vector<4x128xf32>
    %352 = arith.addf %345, %351 : vector<4x128xf32>
    %c3_237 = arith.constant 3 : index
    %c0_238 = arith.constant 0 : index
    %c0_239 = arith.constant 0 : index
    %353 = vector.load %arg14[%c3_237, %c0_238, %c0_239] : memref<6x6x128xf32, #tpu.memory_space<vmem>>, vector<1x4x128xf32>
    %354 = vector.shape_cast %353 : vector<1x4x128xf32> to vector<4x128xf32>
    %355 = vector.extract_strided_slice %184 {offsets = [1, 0, 0], sizes = [1, 1, 128], strides = [1, 1, 1]} : vector<3x3x128xf32> to vector<1x1x128xf32>
    %356 = vector.shape_cast %355 : vector<1x1x128xf32> to vector<1x128xf32>
    %357 = vector.broadcast %356 : vector<1x128xf32> to vector<4x128xf32>
    %358 = arith.mulf %354, %357 : vector<4x128xf32>
    %359 = arith.addf %352, %358 : vector<4x128xf32>
    %c3_240 = arith.constant 3 : index
    %c1_241 = arith.constant 1 : index
    %c0_242 = arith.constant 0 : index
    %360 = vector.load %arg14[%c3_240, %c1_241, %c0_242] : memref<6x6x128xf32, #tpu.memory_space<vmem>>, vector<1x4x128xf32>
    %361 = vector.shape_cast %360 : vector<1x4x128xf32> to vector<4x128xf32>
    %362 = vector.extract_strided_slice %184 {offsets = [1, 1, 0], sizes = [1, 1, 128], strides = [1, 1, 1]} : vector<3x3x128xf32> to vector<1x1x128xf32>
    %363 = vector.shape_cast %362 : vector<1x1x128xf32> to vector<1x128xf32>
    %364 = vector.broadcast %363 : vector<1x128xf32> to vector<4x128xf32>
    %365 = arith.mulf %361, %364 : vector<4x128xf32>
    %366 = arith.addf %359, %365 : vector<4x128xf32>
    %c3_243 = arith.constant 3 : index
    %c2_244 = arith.constant 2 : index
    %c0_245 = arith.constant 0 : index
    %367 = vector.load %arg14[%c3_243, %c2_244, %c0_245] : memref<6x6x128xf32, #tpu.memory_space<vmem>>, vector<1x4x128xf32>
    %368 = vector.shape_cast %367 : vector<1x4x128xf32> to vector<4x128xf32>
    %369 = vector.extract_strided_slice %184 {offsets = [1, 2, 0], sizes = [1, 1, 128], strides = [1, 1, 1]} : vector<3x3x128xf32> to vector<1x1x128xf32>
    %370 = vector.shape_cast %369 : vector<1x1x128xf32> to vector<1x128xf32>
    %371 = vector.broadcast %370 : vector<1x128xf32> to vector<4x128xf32>
    %372 = arith.mulf %368, %371 : vector<4x128xf32>
    %373 = arith.addf %366, %372 : vector<4x128xf32>
    %c4_246 = arith.constant 4 : index
    %c0_247 = arith.constant 0 : index
    %c0_248 = arith.constant 0 : index
    %374 = vector.load %arg14[%c4_246, %c0_247, %c0_248] : memref<6x6x128xf32, #tpu.memory_space<vmem>>, vector<1x4x128xf32>
    %375 = vector.shape_cast %374 : vector<1x4x128xf32> to vector<4x128xf32>
    %376 = vector.extract_strided_slice %184 {offsets = [2, 0, 0], sizes = [1, 1, 128], strides = [1, 1, 1]} : vector<3x3x128xf32> to vector<1x1x128xf32>
    %377 = vector.shape_cast %376 : vector<1x1x128xf32> to vector<1x128xf32>
    %378 = vector.broadcast %377 : vector<1x128xf32> to vector<4x128xf32>
    %379 = arith.mulf %375, %378 : vector<4x128xf32>
    %380 = arith.addf %373, %379 : vector<4x128xf32>
    %c4_249 = arith.constant 4 : index
    %c1_250 = arith.constant 1 : index
    %c0_251 = arith.constant 0 : index
    %381 = vector.load %arg14[%c4_249, %c1_250, %c0_251] : memref<6x6x128xf32, #tpu.memory_space<vmem>>, vector<1x4x128xf32>
    %382 = vector.shape_cast %381 : vector<1x4x128xf32> to vector<4x128xf32>
    %383 = vector.extract_strided_slice %184 {offsets = [2, 1, 0], sizes = [1, 1, 128], strides = [1, 1, 1]} : vector<3x3x128xf32> to vector<1x1x128xf32>
    %384 = vector.shape_cast %383 : vector<1x1x128xf32> to vector<1x128xf32>
    %385 = vector.broadcast %384 : vector<1x128xf32> to vector<4x128xf32>
    %386 = arith.mulf %382, %385 : vector<4x128xf32>
    %387 = arith.addf %380, %386 : vector<4x128xf32>
    %c4_252 = arith.constant 4 : index
    %c2_253 = arith.constant 2 : index
    %c0_254 = arith.constant 0 : index
    %388 = vector.load %arg14[%c4_252, %c2_253, %c0_254] : memref<6x6x128xf32, #tpu.memory_space<vmem>>, vector<1x4x128xf32>
    %389 = vector.shape_cast %388 : vector<1x4x128xf32> to vector<4x128xf32>
    %390 = vector.extract_strided_slice %184 {offsets = [2, 2, 0], sizes = [1, 1, 128], strides = [1, 1, 1]} : vector<3x3x128xf32> to vector<1x1x128xf32>
    %391 = vector.shape_cast %390 : vector<1x1x128xf32> to vector<1x128xf32>
    %392 = vector.broadcast %391 : vector<1x128xf32> to vector<4x128xf32>
    %393 = arith.mulf %389, %392 : vector<4x128xf32>
    %394 = arith.addf %387, %393 : vector<4x128xf32>
    %c3_255 = arith.constant 3 : index
    %c1_256 = arith.constant 1 : index
    %c0_257 = arith.constant 0 : index
    %395 = vector.load %arg14[%c3_255, %c1_256, %c0_257] : memref<6x6x128xf32, #tpu.memory_space<vmem>>, vector<1x4x128xf32>
    %396 = vector.shape_cast %395 : vector<1x4x128xf32> to vector<4x128xf32>
    %397 = arith.negf %394 : vector<4x128xf32>
    %398 = math.exp %397 : vector<4x128xf32>
    %cst_258 = arith.constant 1.000000e+00 : f32
    %399 = vector.broadcast %cst_258 : f32 to vector<4x128xf32>
    %400 = arith.addf %399, %398 : vector<4x128xf32>
    %401 = arith.divf %399, %400 : vector<4x128xf32>
    %402 = arith.mulf %396, %401 : vector<4x128xf32>
    %c8_259 = arith.constant 8 : index
    %c0_260 = arith.constant 0 : index
    %403 = vector.load %arg15[%c8_259, %c0_260] : memref<16x128xf32, #tpu.memory_space<vmem>>, vector<4x128xf32>
    tpu.vector_store %arg15[%c8_259, %c0_260], %402 {strides = array<i32>} : memref<16x128xf32, #tpu.memory_space<vmem>>, vector<4x128xf32>,
    %c3_261 = arith.constant 3 : index
    %c0_262 = arith.constant 0 : index
    %c0_263 = arith.constant 0 : index
    %404 = vector.load %arg14[%c3_261, %c0_262, %c0_263] : memref<6x6x128xf32, #tpu.memory_space<vmem>>, vector<1x4x128xf32>
    %405 = vector.shape_cast %404 : vector<1x4x128xf32> to vector<4x128xf32>
    %406 = vector.extract_strided_slice %184 {offsets = [0, 0, 0], sizes = [1, 1, 128], strides = [1, 1, 1]} : vector<3x3x128xf32> to vector<1x1x128xf32>
    %407 = vector.shape_cast %406 : vector<1x1x128xf32> to vector<1x128xf32>
    %408 = vector.broadcast %407 : vector<1x128xf32> to vector<4x128xf32>
    %409 = arith.mulf %405, %408 : vector<4x128xf32>
    %410 = arith.addf %187, %409 : vector<4x128xf32>
    %c3_264 = arith.constant 3 : index
    %c1_265 = arith.constant 1 : index
    %c0_266 = arith.constant 0 : index
    %411 = vector.load %arg14[%c3_264, %c1_265, %c0_266] : memref<6x6x128xf32, #tpu.memory_space<vmem>>, vector<1x4x128xf32>
    %412 = vector.shape_cast %411 : vector<1x4x128xf32> to vector<4x128xf32>
    %413 = vector.extract_strided_slice %184 {offsets = [0, 1, 0], sizes = [1, 1, 128], strides = [1, 1, 1]} : vector<3x3x128xf32> to vector<1x1x128xf32>
    %414 = vector.shape_cast %413 : vector<1x1x128xf32> to vector<1x128xf32>
    %415 = vector.broadcast %414 : vector<1x128xf32> to vector<4x128xf32>
    %416 = arith.mulf %412, %415 : vector<4x128xf32>
    %417 = arith.addf %410, %416 : vector<4x128xf32>
    %c3_267 = arith.constant 3 : index
    %c2_268 = arith.constant 2 : index
    %c0_269 = arith.constant 0 : index
    %418 = vector.load %arg14[%c3_267, %c2_268, %c0_269] : memref<6x6x128xf32, #tpu.memory_space<vmem>>, vector<1x4x128xf32>
    %419 = vector.shape_cast %418 : vector<1x4x128xf32> to vector<4x128xf32>
    %420 = vector.extract_strided_slice %184 {offsets = [0, 2, 0], sizes = [1, 1, 128], strides = [1, 1, 1]} : vector<3x3x128xf32> to vector<1x1x128xf32>
    %421 = vector.shape_cast %420 : vector<1x1x128xf32> to vector<1x128xf32>
    %422 = vector.broadcast %421 : vector<1x128xf32> to vector<4x128xf32>
    %423 = arith.mulf %419, %422 : vector<4x128xf32>
    %424 = arith.addf %417, %423 : vector<4x128xf32>
    %c4_270 = arith.constant 4 : index
    %c0_271 = arith.constant 0 : index
    %c0_272 = arith.constant 0 : index
    %425 = vector.load %arg14[%c4_270, %c0_271, %c0_272] : memref<6x6x128xf32, #tpu.memory_space<vmem>>, vector<1x4x128xf32>
    %426 = vector.shape_cast %425 : vector<1x4x128xf32> to vector<4x128xf32>
    %427 = vector.extract_strided_slice %184 {offsets = [1, 0, 0], sizes = [1, 1, 128], strides = [1, 1, 1]} : vector<3x3x128xf32> to vector<1x1x128xf32>
    %428 = vector.shape_cast %427 : vector<1x1x128xf32> to vector<1x128xf32>
    %429 = vector.broadcast %428 : vector<1x128xf32> to vector<4x128xf32>
    %430 = arith.mulf %426, %429 : vector<4x128xf32>
    %431 = arith.addf %424, %430 : vector<4x128xf32>
    %c4_273 = arith.constant 4 : index
    %c1_274 = arith.constant 1 : index
    %c0_275 = arith.constant 0 : index
    %432 = vector.load %arg14[%c4_273, %c1_274, %c0_275] : memref<6x6x128xf32, #tpu.memory_space<vmem>>, vector<1x4x128xf32>
    %433 = vector.shape_cast %432 : vector<1x4x128xf32> to vector<4x128xf32>
    %434 = vector.extract_strided_slice %184 {offsets = [1, 1, 0], sizes = [1, 1, 128], strides = [1, 1, 1]} : vector<3x3x128xf32> to vector<1x1x128xf32>
    %435 = vector.shape_cast %434 : vector<1x1x128xf32> to vector<1x128xf32>
    %436 = vector.broadcast %435 : vector<1x128xf32> to vector<4x128xf32>
    %437 = arith.mulf %433, %436 : vector<4x128xf32>
    %438 = arith.addf %431, %437 : vector<4x128xf32>
    %c4_276 = arith.constant 4 : index
    %c2_277 = arith.constant 2 : index
    %c0_278 = arith.constant 0 : index
    %439 = vector.load %arg14[%c4_276, %c2_277, %c0_278] : memref<6x6x128xf32, #tpu.memory_space<vmem>>, vector<1x4x128xf32>
    %440 = vector.shape_cast %439 : vector<1x4x128xf32> to vector<4x128xf32>
    %441 = vector.extract_strided_slice %184 {offsets = [1, 2, 0], sizes = [1, 1, 128], strides = [1, 1, 1]} : vector<3x3x128xf32> to vector<1x1x128xf32>
    %442 = vector.shape_cast %441 : vector<1x1x128xf32> to vector<1x128xf32>
    %443 = vector.broadcast %442 : vector<1x128xf32> to vector<4x128xf32>
    %444 = arith.mulf %440, %443 : vector<4x128xf32>
    %445 = arith.addf %438, %444 : vector<4x128xf32>
    %c5 = arith.constant 5 : index
    %c0_279 = arith.constant 0 : index
    %c0_280 = arith.constant 0 : index
    %446 = vector.load %arg14[%c5, %c0_279, %c0_280] : memref<6x6x128xf32, #tpu.memory_space<vmem>>, vector<1x4x128xf32>
    %447 = vector.shape_cast %446 : vector<1x4x128xf32> to vector<4x128xf32>
    %448 = vector.extract_strided_slice %184 {offsets = [2, 0, 0], sizes = [1, 1, 128], strides = [1, 1, 1]} : vector<3x3x128xf32> to vector<1x1x128xf32>
    %449 = vector.shape_cast %448 : vector<1x1x128xf32> to vector<1x128xf32>
    %450 = vector.broadcast %449 : vector<1x128xf32> to vector<4x128xf32>
    %451 = arith.mulf %447, %450 : vector<4x128xf32>
    %452 = arith.addf %445, %451 : vector<4x128xf32>
    %c5_281 = arith.constant 5 : index
    %c1_282 = arith.constant 1 : index
    %c0_283 = arith.constant 0 : index
    %453 = vector.load %arg14[%c5_281, %c1_282, %c0_283] : memref<6x6x128xf32, #tpu.memory_space<vmem>>, vector<1x4x128xf32>
    %454 = vector.shape_cast %453 : vector<1x4x128xf32> to vector<4x128xf32>
    %455 = vector.extract_strided_slice %184 {offsets = [2, 1, 0], sizes = [1, 1, 128], strides = [1, 1, 1]} : vector<3x3x128xf32> to vector<1x1x128xf32>
    %456 = vector.shape_cast %455 : vector<1x1x128xf32> to vector<1x128xf32>
    %457 = vector.broadcast %456 : vector<1x128xf32> to vector<4x128xf32>
    %458 = arith.mulf %454, %457 : vector<4x128xf32>
    %459 = arith.addf %452, %458 : vector<4x128xf32>
    %c5_284 = arith.constant 5 : index
    %c2_285 = arith.constant 2 : index
    %c0_286 = arith.constant 0 : index
    %460 = vector.load %arg14[%c5_284, %c2_285, %c0_286] : memref<6x6x128xf32, #tpu.memory_space<vmem>>, vector<1x4x128xf32>
    %461 = vector.shape_cast %460 : vector<1x4x128xf32> to vector<4x128xf32>
    %462 = vector.extract_strided_slice %184 {offsets = [2, 2, 0], sizes = [1, 1, 128], strides = [1, 1, 1]} : vector<3x3x128xf32> to vector<1x1x128xf32>
    %463 = vector.shape_cast %462 : vector<1x1x128xf32> to vector<1x128xf32>
    %464 = vector.broadcast %463 : vector<1x128xf32> to vector<4x128xf32>
    %465 = arith.mulf %461, %464 : vector<4x128xf32>
    %466 = arith.addf %459, %465 : vector<4x128xf32>
    %c4_287 = arith.constant 4 : index
    %c1_288 = arith.constant 1 : index
    %c0_289 = arith.constant 0 : index
    %467 = vector.load %arg14[%c4_287, %c1_288, %c0_289] : memref<6x6x128xf32, #tpu.memory_space<vmem>>, vector<1x4x128xf32>
    %468 = vector.shape_cast %467 : vector<1x4x128xf32> to vector<4x128xf32>
    %469 = arith.negf %466 : vector<4x128xf32>
    %470 = math.exp %469 : vector<4x128xf32>
    %cst_290 = arith.constant 1.000000e+00 : f32
    %471 = vector.broadcast %cst_290 : f32 to vector<4x128xf32>
    %472 = arith.addf %471, %470 : vector<4x128xf32>
    %473 = arith.divf %471, %472 : vector<4x128xf32>
    %474 = arith.mulf %468, %473 : vector<4x128xf32>
    %c12_291 = arith.constant 12 : index
    %c0_292 = arith.constant 0 : index
    %475 = vector.load %arg15[%c12_291, %c0_292] : memref<16x128xf32, #tpu.memory_space<vmem>>, vector<4x128xf32>
    tpu.vector_store %arg15[%c12_291, %c0_292], %474 {strides = array<i32>} : memref<16x128xf32, #tpu.memory_space<vmem>>, vector<4x128xf32>,
    %c0_293 = arith.constant 0 : index
    %c0_294 = arith.constant 0 : index
    %476 = vector.load %arg15[%c0_293, %c0_294] : memref<16x128xf32, #tpu.memory_space<vmem>>, vector<16x128xf32>
    %cst_295 = arith.constant dense<0.000000e+00> : vector<16xf32>
    %477 = vector.multi_reduction <add>, %476, %cst_295 [1] : vector<16x128xf32> to vector<16xf32>
    %478 = vector.shape_cast %477 : vector<16xf32> to vector<16x1xf32>
    %cst_296 = arith.constant 1.280000e+02 : f32
    %479 = vector.broadcast %cst_296 : f32 to vector<16x1xf32>
    %480 = arith.divf %478, %479 : vector<16x1xf32>
    %481 = vector.broadcast %480 : vector<16x1xf32> to vector<16x128xf32>
    %482 = arith.subf %476, %481 : vector<16x128xf32>
    %483 = arith.mulf %482, %482 : vector<16x128xf32>
    %cst_297 = arith.constant dense<0.000000e+00> : vector<16xf32>
    %484 = vector.multi_reduction <add>, %483, %cst_297 [1] : vector<16x128xf32> to vector<16xf32>
    %485 = vector.shape_cast %484 : vector<16xf32> to vector<16x1xf32>
    %cst_298 = arith.constant 1.280000e+02 : f32
    %486 = vector.broadcast %cst_298 : f32 to vector<16x1xf32>
    %487 = arith.divf %485, %486 : vector<16x1xf32>
    %cst_299 = arith.constant 9.99999997E-7 : f32
    %488 = vector.broadcast %cst_299 : f32 to vector<16x1xf32>
    %489 = arith.addf %487, %488 : vector<16x1xf32>
    %490 = math.rsqrt %489 : vector<16x1xf32>
    %491 = vector.broadcast %490 : vector<16x1xf32> to vector<16x128xf32>
    %492 = arith.mulf %482, %491 : vector<16x128xf32>
    %c0_300 = arith.constant 0 : index
    %c0_301 = arith.constant 0 : index
    %493 = vector.load %arg8[%c0_300, %c0_301] : memref<1x128xf32, #tpu.memory_space<vmem>>, vector<1x128xf32>
    %494 = vector.broadcast %493 : vector<1x128xf32> to vector<16x128xf32>
    %495 = arith.mulf %492, %494 : vector<16x128xf32>
    %c0_302 = arith.constant 0 : index
    %c0_303 = arith.constant 0 : index
    %496 = vector.load %arg9[%c0_302, %c0_303] : memref<1x128xf32, #tpu.memory_space<vmem>>, vector<1x128xf32>
    %497 = vector.broadcast %496 : vector<1x128xf32> to vector<16x128xf32>
    %498 = arith.addf %495, %497 : vector<16x128xf32>
    %c0_304 = arith.constant 0 : index
    %c0_305 = arith.constant 0 : index
    %499 = vector.load %arg10[%c0_304, %c0_305] : memref<128x128xf32, #tpu.memory_space<vmem>>, vector<128x128xf32>
    %cst_306 = arith.constant dense<0.000000e+00> : vector<16x128xf32>
    %500 = tpu.matmul %498, %499, %cst_306 {dimension_numbers = #tpu.dot_dimension_numbers<[1], [0], [0], [1], [0, 0, 1, 1], [], []>} : vector<16x128xf32>, vector<128x128xf32>, vector<16x128xf32> -> vector<16x128xf32>
    %c0_307 = arith.constant 0 : index
    %c0_308 = arith.constant 0 : index
    %501 = vector.load %arg11[%c0_307, %c0_308] : memref<1x128xf32, #tpu.memory_space<vmem>>, vector<1x128xf32>
    %502 = vector.broadcast %501 : vector<1x128xf32> to vector<16x128xf32>
    %503 = arith.addf %500, %502 : vector<16x128xf32>
    %c0_309 = arith.constant 0 : index
    %c0_310 = arith.constant 0 : index
    %c0_311 = arith.constant 0 : index
    %504 = vector.load %arg12[%c0_309, %c0_310, %c0_311] : memref<1x16x128xf32, #tpu.memory_space<vmem>>, vector<1x16x128xf32>
    %505 = vector.shape_cast %504 : vector<1x16x128xf32> to vector<16x128xf32>
    %506 = vector.shape_cast %503 : vector<16x128xf32> to vector<1x16x128xf32>
    tpu.vector_store %arg12[%c0_309, %c0_310, %c0_311], %506 {strides = array<i32>} : memref<1x16x128xf32, #tpu.memory_space<vmem>>, vector<1x16x128xf32>,
    return
  }
  func.func @transform_0(%arg0: i32) -> (i32, i32, i32, i32) {
    %c0_i32 = arith.constant 0 : i32
    %c0_i32_0 = arith.constant 0 : i32
    %c0_i32_1 = arith.constant 0 : i32
    %c0_i32_2 = arith.constant 0 : i32
    return %arg0, %c0_i32, %c0_i32_0, %c0_i32_1 : i32, i32, i32, i32
  }
  func.func @transform_1(%arg0: i32) -> (i32, i32) {
    %c0_i32 = arith.constant 0 : i32
    %c0_i32_0 = arith.constant 0 : i32
    %c0_i32_1 = arith.constant 0 : i32
    return %c0_i32, %c0_i32_0 : i32, i32
  }
  func.func @transform_2(%arg0: i32) -> (i32, i32) {
    %c0_i32 = arith.constant 0 : i32
    %c0_i32_0 = arith.constant 0 : i32
    %c0_i32_1 = arith.constant 0 : i32
    return %c0_i32, %c0_i32_0 : i32, i32
  }
  func.func @transform_3(%arg0: i32) -> (i32, i32, i32) {
    %c0_i32 = arith.constant 0 : i32
    %c0_i32_0 = arith.constant 0 : i32
    %c0_i32_1 = arith.constant 0 : i32
    %c0_i32_2 = arith.constant 0 : i32
    return %c0_i32, %c0_i32_0, %c0_i32_1 : i32, i32, i32
  }
  func.func @transform_4(%arg0: i32) -> (i32, i32) {
    %c0_i32 = arith.constant 0 : i32
    %c0_i32_0 = arith.constant 0 : i32
    %c0_i32_1 = arith.constant 0 : i32
    return %c0_i32, %c0_i32_0 : i32, i32
  }
  func.func @transform_5(%arg0: i32) -> (i32, i32, i32) {
    %c0_i32 = arith.constant 0 : i32
    %c0_i32_0 = arith.constant 0 : i32
    %c0_i32_1 = arith.constant 0 : i32
    %c0_i32_2 = arith.constant 0 : i32
    return %c0_i32, %c0_i32_0, %c0_i32_1 : i32, i32, i32
  }
  func.func @transform_6(%arg0: i32) -> (i32, i32) {
    %c0_i32 = arith.constant 0 : i32
    %c0_i32_0 = arith.constant 0 : i32
    %c0_i32_1 = arith.constant 0 : i32
    return %c0_i32, %c0_i32_0 : i32, i32
  }
  func.func @transform_7(%arg0: i32) -> (i32, i32) {
    %c0_i32 = arith.constant 0 : i32
    %c0_i32_0 = arith.constant 0 : i32
    %c0_i32_1 = arith.constant 0 : i32
    return %c0_i32, %c0_i32_0 : i32, i32
  }
  func.func @transform_8(%arg0: i32) -> (i32, i32) {
    %c0_i32 = arith.constant 0 : i32
    %c0_i32_0 = arith.constant 0 : i32
    %c0_i32_1 = arith.constant 0 : i32
    return %c0_i32, %c0_i32_0 : i32, i32
  }
  func.func @transform_9(%arg0: i32) -> (i32, i32) {
    %c0_i32 = arith.constant 0 : i32
    %c0_i32_0 = arith.constant 0 : i32
    %c0_i32_1 = arith.constant 0 : i32
    return %c0_i32, %c0_i32_0 : i32, i32
  }
  func.func @transform_10(%arg0: i32) -> (i32, i32) {
    %c0_i32 = arith.constant 0 : i32
    %c0_i32_0 = arith.constant 0 : i32
    %c0_i32_1 = arith.constant 0 : i32
    return %c0_i32, %c0_i32_0 : i32, i32
  }
  func.func @transform_11(%arg0: i32) -> (i32, i32, i32) {
    %c0_i32 = arith.constant 0 : i32
    %c0_i32_0 = arith.constant 0 : i32
    %c0_i32_1 = arith.constant 0 : i32
    return %arg0, %c0_i32, %c0_i32_0 : i32, i32, i32
  }
}

</mosaic_0001>

<llo_original>
// kernel: tpu_custom_call.1
$region0: #{tpu_custom_call.1}
  #allocation0 [shape = 'u32[]', space=smem, size = 0x4, offset = 0x4, fixed_abs, tag = 'smem constant byte address 0x4 - core index']
  #allocation1 [shape = 'u32[144,128]{1,0:T(1,128)}', space=vmem, size = 0x12000, scoped, tag = 'internal scratch']
  #allocation2 [shape = 'f32[20,20,128]{2,1,0:T(8,128)}', space=vmem, size = 0x3c000, scoped, tag = 'scratch operand']
  #allocation3 [shape = 'f32[6,6,128]{2,1,0:T(8,128)}', space=vmem, size = 0x6000, scoped, tag = 'scratch operand']
  #allocation4 [shape = 'f32[16,128]{1,0:T(8,128)}', space=vmem, size = 0x2000, scoped, tag = 'scratch operand']
  %s0 = inlined_call_operand.hbm [shape: f32[2,16,16,32], index: 0, kind: input, shape index: {}]
  %s1 = inlined_call_operand.hbm [shape: f32[1,32], index: 1, kind: input, shape index: {}]
  %s2 = inlined_call_operand.hbm [shape: f32[1,32], index: 2, kind: input, shape index: {}]
  %s3 = inlined_call_operand.hbm [shape: f32[5,5,128], index: 3, kind: input, shape index: {}]
  %s4 = inlined_call_operand.hbm [shape: f32[1,128], index: 4, kind: input, shape index: {}]
  %s5 = inlined_call_operand.hbm [shape: f32[3,3,128], index: 5, kind: input, shape index: {}]
  %s6 = inlined_call_operand.hbm [shape: f32[1,128], index: 6, kind: input, shape index: {}]
  %s7 = inlined_call_operand.hbm [shape: f32[1,128], index: 7, kind: input, shape index: {}]
  %s8 = inlined_call_operand.hbm [shape: f32[1,128], index: 8, kind: input, shape index: {}]
  %s9 = inlined_call_operand.hbm [shape: f32[128,128], index: 9, kind: input, shape index: {}]
  %s10 = inlined_call_operand.hbm [shape: f32[1,128], index: 10, kind: input, shape index: {}]
  %s11 = inlined_call_operand.hbm [shape: f32[2,16,128], index: 11, kind: output, shape index: {}]
  %s12 = sld [smem:[#allocation0]]
  $region121: #{tpu_custom_call.1} parent=0
    _
  %s14 = ssub.s32 1, %s12
  %s15 = scalar_select 0, %s14, %s12
  $region1: #{tpu_custom_call.1} parent=0
    #allocation5 [shape = 'u8[262144]{0}', space=vmem, size = 0x40000, scoped, tag = 'input window, operand 0']
    #allocation6 [shape = 's32[2]{0}', space=sflag, size = 0x8, scoped, tag = 'scoped memory for tpu_custom_call.1']
    #allocation7 [shape = 's32[2]{0}', space=sflag, size = 0x8, scoped, tag = 'scoped memory for tpu_custom_call.1']
    #allocation8 [shape = 'u8[512]{0}', space=vmem, size = 0x400, scoped, tag = 'input window, operand 1, single buffered']
    #allocation9 [shape = 's32[1]{0}', space=sflag, size = 0x4, scoped, tag = 'scoped memory for tpu_custom_call.1']
    #allocation10 [shape = 'u8[512]{0}', space=vmem, size = 0x400, scoped, tag = 'input window, operand 2, single buffered']
    #allocation11 [shape = 'u8[20480]{0}', space=vmem, size = 0x5000, scoped, tag = 'input window, operand 3, single buffered']
    #allocation12 [shape = 's32[1]{0}', space=sflag, size = 0x4, scoped, tag = 'scoped memory for tpu_custom_call.1']
    #allocation13 [shape = 'u8[512]{0}', space=vmem, size = 0x400, scoped, tag = 'input window, operand 4, single buffered']
    #allocation14 [shape = 'u8[6144]{0}', space=vmem, size = 0x1800, scoped, tag = 'input window, operand 5, single buffered']
    #allocation15 [shape = 's32[1]{0}', space=sflag, size = 0x4, scoped, tag = 'scoped memory for tpu_custom_call.1']
    #allocation16 [shape = 'u8[512]{0}', space=vmem, size = 0x400, scoped, tag = 'input window, operand 6, single buffered']
    #allocation17 [shape = 'u8[512]{0}', space=vmem, size = 0x400, scoped, tag = 'input window, operand 7, single buffered']
    #allocation18 [shape = 's32[1]{0}', space=sflag, size = 0x4, scoped, tag = 'scoped memory for tpu_custom_call.1']
    #allocation19 [shape = 'u8[512]{0}', space=vmem, size = 0x400, scoped, tag = 'input window, operand 8, single buffered']
    #allocation20 [shape = 'u8[65536]{0}', space=vmem, size = 0x10000, scoped, tag = 'input window, operand 9, single buffered']
    #allocation21 [shape = 's32[1]{0}', space=sflag, size = 0x4, scoped, tag = 'scoped memory for tpu_custom_call.1']
    #allocation22 [shape = 'u8[512]{0}', space=vmem, size = 0x400, scoped, tag = 'input window, operand 10, single buffered']
    #allocation23 [shape = 'u8[16384]{0}', space=vmem, size = 0x4000, scoped, tag = 'output window, operand 0']
    %16 = vsyncpa [#allocation6], 0
    %s17 = scalar_lea.sflag [#allocation6], 1
    %18 = vsyncpa %s17, 0
    %19 = vsyncpa [#allocation9], 0
    %20 = vsyncpa [#allocation12], 0
    %21 = vsyncpa [#allocation15], 0
    %22 = vsyncpa [#allocation18], 0
    %23 = vsyncpa [#allocation21], 0
    %24 = vsyncpa [#allocation7], 0
    %s25 = scalar_lea.sflag [#allocation7], 1
    %26 = vsyncpa %s25, 0
    loop: start=0, step=1, limit=4
    $region2: #{tpu_custom_call.1} parent=1 // loop_pre_header
      _
    $region3: #{tpu_custom_call.1} parent=1 // loop_header
      %s28 = sphi 0, %s32
      %p29 = scmp.ge.s32.totalorder %s28, 4
      %s38 = sphi 0, %s40
      %s41 = sphi 0, %s38
      %s42 = sphi 0, %s41
      %s58 = sphi 0, %s42
      %s62 = sphi 0, %s62
      %s64 = sphi 0, %s62
      %s65 = sphi 0, %s64
      %s79 = sphi 0, %s65
      %s83 = sphi 0, %s83
      %s85 = sphi 0, %s83
      %s86 = sphi 0, %s85
      %s100 = sphi 0, %s86
      %s104 = sphi 0, %s104
      %s106 = sphi 0, %s104
      %s107 = sphi 0, %s106
      %s121 = sphi 0, %s107
      %s125 = sphi 0, %s125
      %s127 = sphi 0, %s125
      %s128 = sphi 0, %s127
      %s142 = sphi 0, %s128
      %s146 = sphi 0, %s146
      %s148 = sphi 0, %s146
      %s149 = sphi 0, %s148
      %s163 = sphi 0, %s149
      %s167 = sphi 0, %s167
      %s169 = sphi 0, %s167
      %s170 = sphi 0, %s169
      %s184 = sphi 0, %s170
      %s188 = sphi 0, %s188
      %s190 = sphi 0, %s188
      %s191 = sphi 0, %s190
      %s205 = sphi 0, %s191
      %s209 = sphi 0, %s209
      %s211 = sphi 0, %s209
      %s212 = sphi 0, %s211
      %s226 = sphi 0, %s212
      %s230 = sphi 0, %s230
      %s232 = sphi 0, %s230
      %s233 = sphi 0, %s232
      %s247 = sphi 0, %s233
      %s251 = sphi 0, %s251
      %s253 = sphi 0, %s251
      %s254 = sphi 0, %s253
      %s268 = sphi 0, %s254
      %s274 = sphi 0, %s276
      %s277 = sphi 0, %s274
      %s278 = sphi 0, %s277
      %s294 = sphi 0, %s278
    $region4: #{tpu_custom_call.1} parent=1 // loop_header_branch
      %31 = sbr.rel (%p29) target = $region8
    $region5: #{tpu_custom_call.1} parent=1 // loop_body
      %s33 = ssub.s32 %s28, 1
      %s34 = ssub.s32 %s28, 2
      %s35 = sadd.s32 %s28, 1
      %s36 = ssub.s32 %s28, %s35
      %p37 = scmp.eq.s32.totalorder %s36, 0
      %s39 = sadd.s32 %s38, 1
      %s40 = scalar_select %p37, %s38, %s39
      %p43 = pneg %p37
      %p44 = scmp.eq.s32.totalorder %s28, 1
      %p45 = por %p43, %p44
      %p46 = scmp.ne.s32.totalorder %s38, %s41
      %p47 = scmp.eq.s32.totalorder %s28, 0
      %p48 = por %p46, %p47
      %p49 = scmp.ne.s32.totalorder %s38, %s41
      %p50 = scmp.eq.s32.totalorder %s33, 1
      %p51 = por %p49, %p50
      %p52 = scmp.ne.s32.totalorder %s41, %s42
      %p53 = scmp.eq.s32.totalorder %s33, 0
      %p54 = por %p52, %p53
      %p55 = scmp.ne.s32.totalorder %s41, %s42
      %p56 = scmp.eq.s32.totalorder %s34, 1
      %p57 = por %p55, %p56
      %p59 = scmp.ne.s32.totalorder %s42, %s58
      %p60 = scmp.eq.s32.totalorder %s34, 0
      %p61 = por %p59, %p60
      %s63 = sadd.s32 %s62, 1
      %p66 = scmp.eq.s32.totalorder %s28, 1
      %p67 = scmp.ne.s32.totalorder %s62, %s64
      %p68 = scmp.eq.s32.totalorder %s28, 0
      %p69 = por %p67, %p68
      %p70 = scmp.ne.s32.totalorder %s62, %s64
      %p71 = scmp.eq.s32.totalorder %s33, 1
      %p72 = por %p70, %p71
      %p73 = scmp.ne.s32.totalorder %s64, %s65
      %p74 = scmp.eq.s32.totalorder %s33, 0
      %p75 = por %p73, %p74
      %p76 = scmp.ne.s32.totalorder %s64, %s65
      %p77 = scmp.eq.s32.totalorder %s34, 1
      %p78 = por %p76, %p77
      %p80 = scmp.ne.s32.totalorder %s65, %s79
      %p81 = scmp.eq.s32.totalorder %s34, 0
      %p82 = por %p80, %p81
      %s84 = sadd.s32 %s83, 1
      %p87 = scmp.eq.s32.totalorder %s28, 1
      %p88 = scmp.ne.s32.totalorder %s83, %s85
      %p89 = scmp.eq.s32.totalorder %s28, 0
      %p90 = por %p88, %p89
      %p91 = scmp.ne.s32.totalorder %s83, %s85
      %p92 = scmp.eq.s32.totalorder %s33, 1
      %p93 = por %p91, %p92
      %p94 = scmp.ne.s32.totalorder %s85, %s86
      %p95 = scmp.eq.s32.totalorder %s33, 0
      %p96 = por %p94, %p95
      %p97 = scmp.ne.s32.totalorder %s85, %s86
      %p98 = scmp.eq.s32.totalorder %s34, 1
      %p99 = por %p97, %p98
      %p101 = scmp.ne.s32.totalorder %s86, %s100
      %p102 = scmp.eq.s32.totalorder %s34, 0
      %p103 = por %p101, %p102
      %s105 = sadd.s32 %s104, 1
      %p108 = scmp.eq.s32.totalorder %s28, 1
      %p109 = scmp.ne.s32.totalorder %s104, %s106
      %p110 = scmp.eq.s32.totalorder %s28, 0
      %p111 = por %p109, %p110
      %p112 = scmp.ne.s32.totalorder %s104, %s106
      %p113 = scmp.eq.s32.totalorder %s33, 1
      %p114 = por %p112, %p113
      %p115 = scmp.ne.s32.totalorder %s106, %s107
      %p116 = scmp.eq.s32.totalorder %s33, 0
      %p117 = por %p115, %p116
      %p118 = scmp.ne.s32.totalorder %s106, %s107
      %p119 = scmp.eq.s32.totalorder %s34, 1
      %p120 = por %p118, %p119
      %p122 = scmp.ne.s32.totalorder %s107, %s121
      %p123 = scmp.eq.s32.totalorder %s34, 0
      %p124 = por %p122, %p123
      %s126 = sadd.s32 %s125, 1
      %p129 = scmp.eq.s32.totalorder %s28, 1
      %p130 = scmp.ne.s32.totalorder %s125, %s127
      %p131 = scmp.eq.s32.totalorder %s28, 0
      %p132 = por %p130, %p131
      %p133 = scmp.ne.s32.totalorder %s125, %s127
      %p134 = scmp.eq.s32.totalorder %s33, 1
      %p135 = por %p133, %p134
      %p136 = scmp.ne.s32.totalorder %s127, %s128
      %p137 = scmp.eq.s32.totalorder %s33, 0
      %p138 = por %p136, %p137
      %p139 = scmp.ne.s32.totalorder %s127, %s128
      %p140 = scmp.eq.s32.totalorder %s34, 1
      %p141 = por %p139, %p140
      %p143 = scmp.ne.s32.totalorder %s128, %s142
      %p144 = scmp.eq.s32.totalorder %s34, 0
      %p145 = por %p143, %p144
      %s147 = sadd.s32 %s146, 1
      %p150 = scmp.eq.s32.totalorder %s28, 1
      %p151 = scmp.ne.s32.totalorder %s146, %s148
      %p152 = scmp.eq.s32.totalorder %s28, 0
      %p153 = por %p151, %p152
      %p154 = scmp.ne.s32.totalorder %s146, %s148
      %p155 = scmp.eq.s32.totalorder %s33, 1
      %p156 = por %p154, %p155
      %p157 = scmp.ne.s32.totalorder %s148, %s149
      %p158 = scmp.eq.s32.totalorder %s33, 0
      %p159 = por %p157, %p158
      %p160 = scmp.ne.s32.totalorder %s148, %s149
      %p161 = scmp.eq.s32.totalorder %s34, 1
      %p162 = por %p160, %p161
      %p164 = scmp.ne.s32.totalorder %s149, %s163
      %p165 = scmp.eq.s32.totalorder %s34, 0
      %p166 = por %p164, %p165
      %s168 = sadd.s32 %s167, 1
      %p171 = scmp.eq.s32.totalorder %s28, 1
      %p172 = scmp.ne.s32.totalorder %s167, %s169
      %p173 = scmp.eq.s32.totalorder %s28, 0
      %p174 = por %p172, %p173
      %p175 = scmp.ne.s32.totalorder %s167, %s169
      %p176 = scmp.eq.s32.totalorder %s33, 1
      %p177 = por %p175, %p176
      %p178 = scmp.ne.s32.totalorder %s169, %s170
      %p179 = scmp.eq.s32.totalorder %s33, 0
      %p180 = por %p178, %p179
      %p181 = scmp.ne.s32.totalorder %s169, %s170
      %p182 = scmp.eq.s32.totalorder %s34, 1
      %p183 = por %p181, %p182
      %p185 = scmp.ne.s32.totalorder %s170, %s184
      %p186 = scmp.eq.s32.totalorder %s34, 0
      %p187 = por %p185, %p186
      %s189 = sadd.s32 %s188, 1
      %p192 = scmp.eq.s32.totalorder %s28, 1
      %p193 = scmp.ne.s32.totalorder %s188, %s190
      %p194 = scmp.eq.s32.totalorder %s28, 0
      %p195 = por %p193, %p194
      %p196 = scmp.ne.s32.totalorder %s188, %s190
      %p197 = scmp.eq.s32.totalorder %s33, 1
      %p198 = por %p196, %p197
      %p199 = scmp.ne.s32.totalorder %s190, %s191
      %p200 = scmp.eq.s32.totalorder %s33, 0
      %p201 = por %p199, %p200
      %p202 = scmp.ne.s32.totalorder %s190, %s191
      %p203 = scmp.eq.s32.totalorder %s34, 1
      %p204 = por %p202, %p203
      %p206 = scmp.ne.s32.totalorder %s191, %s205
      %p207 = scmp.eq.s32.totalorder %s34, 0
      %p208 = por %p206, %p207
      %s210 = sadd.s32 %s209, 1
      %p213 = scmp.eq.s32.totalorder %s28, 1
      %p214 = scmp.ne.s32.totalorder %s209, %s211
      %p215 = scmp.eq.s32.totalorder %s28, 0
      %p216 = por %p214, %p215
      %p217 = scmp.ne.s32.totalorder %s209, %s211
      %p218 = scmp.eq.s32.totalorder %s33, 1
      %p219 = por %p217, %p218
      %p220 = scmp.ne.s32.totalorder %s211, %s212
      %p221 = scmp.eq.s32.totalorder %s33, 0
      %p222 = por %p220, %p221
      %p223 = scmp.ne.s32.totalorder %s211, %s212
      %p224 = scmp.eq.s32.totalorder %s34, 1
      %p225 = por %p223, %p224
      %p227 = scmp.ne.s32.totalorder %s212, %s226
      %p228 = scmp.eq.s32.totalorder %s34, 0
      %p229 = por %p227, %p228
      %s231 = sadd.s32 %s230, 1
      %p234 = scmp.eq.s32.totalorder %s28, 1
      %p235 = scmp.ne.s32.totalorder %s230, %s232
      %p236 = scmp.eq.s32.totalorder %s28, 0
      %p237 = por %p235, %p236
      %p238 = scmp.ne.s32.totalorder %s230, %s232
      %p239 = scmp.eq.s32.totalorder %s33, 1
      %p240 = por %p238, %p239
      %p241 = scmp.ne.s32.totalorder %s232, %s233
      %p242 = scmp.eq.s32.totalorder %s33, 0
      %p243 = por %p241, %p242
      %p244 = scmp.ne.s32.totalorder %s232, %s233
      %p245 = scmp.eq.s32.totalorder %s34, 1
      %p246 = por %p244, %p245
      %p248 = scmp.ne.s32.totalorder %s233, %s247
      %p249 = scmp.eq.s32.totalorder %s34, 0
      %p250 = por %p248, %p249
      %s252 = sadd.s32 %s251, 1
      %p255 = scmp.eq.s32.totalorder %s28, 1
      %p256 = scmp.ne.s32.totalorder %s251, %s253
      %p257 = scmp.eq.s32.totalorder %s28, 0
      %p258 = por %p256, %p257
      %p259 = scmp.ne.s32.totalorder %s251, %s253
      %p260 = scmp.eq.s32.totalorder %s33, 1
      %p261 = por %p259, %p260
      %p262 = scmp.ne.s32.totalorder %s253, %s254
      %p263 = scmp.eq.s32.totalorder %s33, 0
      %p264 = por %p262, %p263
      %p265 = scmp.ne.s32.totalorder %s253, %s254
      %p266 = scmp.eq.s32.totalorder %s34, 1
      %p267 = por %p265, %p266
      %p269 = scmp.ne.s32.totalorder %s254, %s268
      %p270 = scmp.eq.s32.totalorder %s34, 0
      %p271 = por %p269, %p270
      %s272 = ssub.s32 %s28, %s35
      %p273 = scmp.eq.s32.totalorder %s272, 0
      %s275 = sadd.s32 %s274, 1
      %s276 = scalar_select %p273, %s274, %s275
      %p279 = pneg %p273
      %p280 = scmp.eq.s32.totalorder %s28, 1
      %p281 = por %p279, %p280
      %p282 = scmp.ne.s32.totalorder %s274, %s277
      %p283 = scmp.eq.s32.totalorder %s28, 0
      %p284 = por %p282, %p283
      %p285 = scmp.ne.s32.totalorder %s274, %s277
      %p286 = scmp.eq.s32.totalorder %s33, 1
      %p287 = por %p285, %p286
      %p288 = scmp.ne.s32.totalorder %s277, %s278
      %p289 = scmp.eq.s32.totalorder %s33, 0
      %p290 = por %p288, %p289
      %p291 = scmp.ne.s32.totalorder %s277, %s278
      %p292 = scmp.eq.s32.totalorder %s34, 1
      %p293 = por %p291, %p292
      %p295 = scmp.ne.s32.totalorder %s278, %s294
      %p296 = scmp.eq.s32.totalorder %s34, 0
      %p297 = por %p295, %p296
      %p298 = scmp.le.s32.totalorder 1, %s28
      %p299 = scmp.lt.s32.totalorder %s28, 3
      %p300 = pnand %p298, %p299
      %p301 = pneg %p300
      // Predicated region
      $region9: #{tpu_custom_call.1} parent=5 // pred_check
        _
      $region10: #{tpu_custom_call.1} parent=5 // pred_check_branch
        %303 = sbr.rel (%p300) target = $region12
      $region11: #{tpu_custom_call.1} parent=5 // pred_region
        %s304 = ssub.s32 %s28, 1
        // Predicated region
        $region13: #{tpu_custom_call.1} parent=11 // pred_check
          %p305 = pneg %p75
        $region14: #{tpu_custom_call.1} parent=11 // pred_check_branch
          %307 = sbr.rel (%p305) target = $region16
        $region15: #{tpu_custom_call.1} parent=11 // pred_region
          %s309 = ssub.s32 16, 16
          %310 = vsyncadd [#allocation9], %s309
          %s312 = sshll.u32 [#allocation8], 4
          %s313 = int_to_ptr.vmem [resolvable:$true] %s312
          %315 = dma.hbm_to_vmem [thread:$0]  %s1, 16, %s313, [#allocation9]
        $region16: #{tpu_custom_call.1} parent=11 // pred_fallthru
          _
        // Predicated region
        $region17: #{tpu_custom_call.1} parent=11 // pred_check
          %p316 = pneg %p96
        $region18: #{tpu_custom_call.1} parent=11 // pred_check_branch
          %318 = sbr.rel (%p316) target = $region20
        $region19: #{tpu_custom_call.1} parent=11 // pred_region
          %s320 = ssub.s32 16, 16
          %321 = vsyncadd [#allocation9], %s320
          %s323 = sshll.u32 [#allocation10], 4
          %s324 = int_to_ptr.vmem [resolvable:$true] %s323
          %326 = dma.hbm_to_vmem [thread:$0]  %s2, 16, %s324, [#allocation9]
        $region20: #{tpu_custom_call.1} parent=11 // pred_fallthru
          _
        // Predicated region
        $region21: #{tpu_custom_call.1} parent=11 // pred_check
          %p327 = pneg %p117
        $region22: #{tpu_custom_call.1} parent=11 // pred_check_branch
          %329 = sbr.rel (%p327) target = $region24
        $region23: #{tpu_custom_call.1} parent=11 // pred_region
          %s331 = ssub.s32 640, 640
          %332 = vsyncadd [#allocation12], %s331
          %s333 = sshll.u32 [#allocation11], 4
          %s334 = int_to_ptr.vmem [resolvable:$true] %s333
          %339 = dma.hbm_to_vmem [thread:$0]  %s3, 640, %s334, [#allocation12], 128, 128, 8
        $region24: #{tpu_custom_call.1} parent=11 // pred_fallthru
          _
        // Predicated region
        $region25: #{tpu_custom_call.1} parent=11 // pred_check
          %p340 = pneg %p138
        $region26: #{tpu_custom_call.1} parent=11 // pred_check_branch
          %342 = sbr.rel (%p340) target = $region28
        $region27: #{tpu_custom_call.1} parent=11 // pred_region
          %s344 = ssub.s32 16, 16
          %345 = vsyncadd [#allocation12], %s344
          %s347 = sshll.u32 [#allocation13], 4
          %s348 = int_to_ptr.vmem [resolvable:$true] %s347
          %350 = dma.hbm_to_vmem [thread:$0]  %s4, 16, %s348, [#allocation12]
        $region28: #{tpu_custom_call.1} parent=11 // pred_fallthru
          _
        // Predicated region
        $region29: #{tpu_custom_call.1} parent=11 // pred_check
          %p351 = pneg %p159
        $region30: #{tpu_custom_call.1} parent=11 // pred_check_branch
          %353 = sbr.rel (%p351) target = $region32
        $region31: #{tpu_custom_call.1} parent=11 // pred_region
          %s355 = ssub.s32 192, 192
          %356 = vsyncadd [#allocation15], %s355
          %s357 = sshll.u32 [#allocation14], 4
          %s358 = int_to_ptr.vmem [resolvable:$true] %s357
          %363 = dma.hbm_to_vmem [thread:$0]  %s5, 192, %s358, [#allocation15], 64, 64, 4
        $region32: #{tpu_custom_call.1} parent=11 // pred_fallthru
          _
        // Predicated region
        $region33: #{tpu_custom_call.1} parent=11 // pred_check
          %p364 = pneg %p180
        $region34: #{tpu_custom_call.1} parent=11 // pred_check_branch
          %366 = sbr.rel (%p364) target = $region36
        $region35: #{tpu_custom_call.1} parent=11 // pred_region
          %s368 = ssub.s32 16, 16
          %369 = vsyncadd [#allocation15], %s368
          %s371 = sshll.u32 [#allocation16], 4
          %s372 = int_to_ptr.vmem [resolvable:$true] %s371
          %374 = dma.hbm_to_vmem [thread:$0]  %s6, 16, %s372, [#allocation15]
        $region36: #{tpu_custom_call.1} parent=11 // pred_fallthru
          _
        // Predicated region
        $region37: #{tpu_custom_call.1} parent=11 // pred_check
          %p375 = pneg %p201
        $region38: #{tpu_custom_call.1} parent=11 // pred_check_branch
          %377 = sbr.rel (%p375) target = $region40
        $region39: #{tpu_custom_call.1} parent=11 // pred_region
          %s379 = ssub.s32 16, 16
          %380 = vsyncadd [#allocation18], %s379
          %s382 = sshll.u32 [#allocation17], 4
          %s383 = int_to_ptr.vmem [resolvable:$true] %s382
          %385 = dma.hbm_to_vmem [thread:$0]  %s7, 16, %s383, [#allocation18]
        $region40: #{tpu_custom_call.1} parent=11 // pred_fallthru
          _
        // Predicated region
        $region41: #{tpu_custom_call.1} parent=11 // pred_check
          %p386 = pneg %p222
        $region42: #{tpu_custom_call.1} parent=11 // pred_check_branch
          %388 = sbr.rel (%p386) target = $region44
        $region43: #{tpu_custom_call.1} parent=11 // pred_region
          %s390 = ssub.s32 16, 16
          %391 = vsyncadd [#allocation18], %s390
          %s393 = sshll.u32 [#allocation19], 4
          %s394 = int_to_ptr.vmem [resolvable:$true] %s393
          %396 = dma.hbm_to_vmem [thread:$0]  %s8, 16, %s394, [#allocation18]
        $region44: #{tpu_custom_call.1} parent=11 // pred_fallthru
          _
        // Predicated region
        $region45: #{tpu_custom_call.1} parent=11 // pred_check
          %p397 = pneg %p243
        $region46: #{tpu_custom_call.1} parent=11 // pred_check_branch
          %399 = sbr.rel (%p397) target = $region48
        $region47: #{tpu_custom_call.1} parent=11 // pred_region
          %s401 = ssub.s32 2048, 2048
          %402 = vsyncadd [#allocation21], %s401
          %s403 = sshll.u32 [#allocation20], 4
          %s404 = int_to_ptr.vmem [resolvable:$true] %s403
          %409 = dma.hbm_to_vmem [thread:$0]  %s9, 2048, %s404, [#allocation21], 128, 128, 8
        $region48: #{tpu_custom_call.1} parent=11 // pred_fallthru
          _
        // Predicated region
        $region49: #{tpu_custom_call.1} parent=11 // pred_check
          %p410 = pneg %p264
        $region50: #{tpu_custom_call.1} parent=11 // pred_check_branch
          %412 = sbr.rel (%p410) target = $region52
        $region51: #{tpu_custom_call.1} parent=11 // pred_region
          %s414 = ssub.s32 16, 16
          %415 = vsyncadd [#allocation21], %s414
          %s417 = sshll.u32 [#allocation22], 4
          %s418 = int_to_ptr.vmem [resolvable:$true] %s417
          %420 = dma.hbm_to_vmem [thread:$0]  %s10, 16, %s418, [#allocation21]
        $region52: #{tpu_custom_call.1} parent=11 // pred_fallthru
          _
      $region12: #{tpu_custom_call.1} parent=5 // pred_fallthru
        _
      %p421 = scmp.lt.s32.totalorder %s28, 2
      // Predicated region
      $region53: #{tpu_custom_call.1} parent=5 // pred_check
        %p422 = pneg %p421
      $region54: #{tpu_custom_call.1} parent=5 // pred_check_branch
        %424 = sbr.rel (%p422) target = $region56
      $region55: #{tpu_custom_call.1} parent=5 // pred_region
        // Predicated region
        $region57: #{tpu_custom_call.1} parent=55 // pred_check
          %p425 = pneg %p48
        $region58: #{tpu_custom_call.1} parent=55 // pred_check_branch
          %427 = sbr.rel (%p425) target = $region60
        $region59: #{tpu_custom_call.1} parent=55 // pred_region
          %s428 = sand.u32 %s38, 1
          %s429 = scalar_lea.sflag [#allocation6], %s428
          %s430 = sand.u32 %s38, 1
          %s431 = smul.addr %s430, 256
          %s432 = scalar_lea.vmem [#allocation5], %s431
          %s434 = ssub.s32 4096, 4096
          %435 = vsyncadd %s429, %s434
          %s436 = smul.addr %s28, 32
          %s437 = smul.addr %s436, 128
          %s438 = scalar_lea.hbm %s0, %s437
          %s439 = sshll.u32 %s432, 4
          %s440 = int_to_ptr.vmem [resolvable:$true] %s439
          %445 = dma.hbm_to_vmem [thread:$0]  %s438, 4096, %s440, %s429, 128, 128, 8
        $region60: #{tpu_custom_call.1} parent=55 // pred_fallthru
          _
      $region56: #{tpu_custom_call.1} parent=5 // pred_fallthru
        _
      %p446 = scmp.le.s32.totalorder 1, %s28
      %p447 = scmp.lt.s32.totalorder %s28, 3
      %p448 = pnand %p446, %p447
      %p449 = pneg %p448
      // Predicated region
      $region61: #{tpu_custom_call.1} parent=5 // pred_check
        _
      $region62: #{tpu_custom_call.1} parent=5 // pred_check_branch
        %451 = sbr.rel (%p448) target = $region64
      $region63: #{tpu_custom_call.1} parent=5 // pred_region
        %s452 = ssub.s32 %s28, 1
        %s453 = sand.u32 %s41, 1
        %s454 = scalar_lea.sflag [#allocation6], %s453
        %s455 = sand.u32 %s41, 1
        %s456 = smul.addr %s455, 256
        %s457 = scalar_lea.vmem [#allocation5], %s456
        // Predicated region
        $region65: #{tpu_custom_call.1} parent=63 // pred_check
          %p458 = pneg %p54
        $region66: #{tpu_custom_call.1} parent=63 // pred_check_branch
          %460 = sbr.rel (%p458) target = $region68
        $region67: #{tpu_custom_call.1} parent=63 // pred_region
          %461 = dma.done %s454, 4096
        $region68: #{tpu_custom_call.1} parent=63 // pred_fallthru
          _
        // Predicated region
        $region69: #{tpu_custom_call.1} parent=63 // pred_check
          %p462 = pneg %p75
        $region70: #{tpu_custom_call.1} parent=63 // pred_check_branch
          %464 = sbr.rel (%p462) target = $region72
        $region71: #{tpu_custom_call.1} parent=63 // pred_region
          %465 = dma.done [#allocation9], 16
        $region72: #{tpu_custom_call.1} parent=63 // pred_fallthru
          _
        // Predicated region
        $region73: #{tpu_custom_call.1} parent=63 // pred_check
          %p466 = pneg %p96
        $region74: #{tpu_custom_call.1} parent=63 // pred_check_branch
          %468 = sbr.rel (%p466) target = $region76
        $region75: #{tpu_custom_call.1} parent=63 // pred_region
          %469 = dma.done [#allocation9], 16
        $region76: #{tpu_custom_call.1} parent=63 // pred_fallthru
          _
        // Predicated region
        $region77: #{tpu_custom_call.1} parent=63 // pred_check
          %p470 = pneg %p117
        $region78: #{tpu_custom_call.1} parent=63 // pred_check_branch
          %472 = sbr.rel (%p470) target = $region80
        $region79: #{tpu_custom_call.1} parent=63 // pred_region
          %473 = dma.done [#allocation12], 640
        $region80: #{tpu_custom_call.1} parent=63 // pred_fallthru
          _
        // Predicated region
        $region81: #{tpu_custom_call.1} parent=63 // pred_check
          %p474 = pneg %p138
        $region82: #{tpu_custom_call.1} parent=63 // pred_check_branch
          %476 = sbr.rel (%p474) target = $region84
        $region83: #{tpu_custom_call.1} parent=63 // pred_region
          %477 = dma.done [#allocation12], 16
        $region84: #{tpu_custom_call.1} parent=63 // pred_fallthru
          _
        // Predicated region
        $region85: #{tpu_custom_call.1} parent=63 // pred_check
          %p478 = pneg %p159
        $region86: #{tpu_custom_call.1} parent=63 // pred_check_branch
          %480 = sbr.rel (%p478) target = $region88
        $region87: #{tpu_custom_call.1} parent=63 // pred_region
          %481 = dma.done [#allocation15], 192
        $region88: #{tpu_custom_call.1} parent=63 // pred_fallthru
          _
        // Predicated region
        $region89: #{tpu_custom_call.1} parent=63 // pred_check
          %p482 = pneg %p180
        $region90: #{tpu_custom_call.1} parent=63 // pred_check_branch
          %484 = sbr.rel (%p482) target = $region92
        $region91: #{tpu_custom_call.1} parent=63 // pred_region
          %485 = dma.done [#allocation15], 16
        $region92: #{tpu_custom_call.1} parent=63 // pred_fallthru
          _
        // Predicated region
        $region93: #{tpu_custom_call.1} parent=63 // pred_check
          %p486 = pneg %p201
        $region94: #{tpu_custom_call.1} parent=63 // pred_check_branch
          %488 = sbr.rel (%p486) target = $region96
        $region95: #{tpu_custom_call.1} parent=63 // pred_region
          %489 = dma.done [#allocation18], 16
        $region96: #{tpu_custom_call.1} parent=63 // pred_fallthru
          _
        // Predicated region
        $region97: #{tpu_custom_call.1} parent=63 // pred_check
          %p490 = pneg %p222
        $region98: #{tpu_custom_call.1} parent=63 // pred_check_branch
          %492 = sbr.rel (%p490) target = $region100
        $region99: #{tpu_custom_call.1} parent=63 // pred_region
          %493 = dma.done [#allocation18], 16
        $region100: #{tpu_custom_call.1} parent=63 // pred_fallthru
          _
        // Predicated region
        $region101: #{tpu_custom_call.1} parent=63 // pred_check
          %p494 = pneg %p243
        $region102: #{tpu_custom_call.1} parent=63 // pred_check_branch
          %496 = sbr.rel (%p494) target = $region104
        $region103: #{tpu_custom_call.1} parent=63 // pred_region
          %497 = dma.done [#allocation21], 2048
        $region104: #{tpu_custom_call.1} parent=63 // pred_fallthru
          _
        // Predicated region
        $region105: #{tpu_custom_call.1} parent=63 // pred_check
          %p498 = pneg %p264
        $region106: #{tpu_custom_call.1} parent=63 // pred_check_branch
          %500 = sbr.rel (%p498) target = $region108
        $region107: #{tpu_custom_call.1} parent=63 // pred_region
          %501 = dma.done [#allocation21], 16
        $region108: #{tpu_custom_call.1} parent=63 // pred_fallthru
          _
        %s502 = sand.u32 %s41, 1
        %s503 = scalar_lea.sflag [#allocation6], %s502
        %s504 = sand.u32 %s41, 1
        %s505 = smul.addr %s504, 256
        %s506 = scalar_lea.vmem [#allocation5], %s505
        %p507 = pneg %p54
        %p508 = pneg %p51
        %p509 = pneg %p75
        %p510 = pneg %p72
        %p511 = pneg %p96
        %p512 = pneg %p93
        %p513 = pneg %p117
        %p514 = pneg %p114
        %p515 = pneg %p138
        %p516 = pneg %p135
        %p517 = pneg %p159
        %p518 = pneg %p156
        %p519 = pneg %p180
        %p520 = pneg %p177
        %p521 = pneg %p201
        %p522 = pneg %p198
        %p523 = pneg %p222
        %p524 = pneg %p219
        %p525 = pneg %p243
        %p526 = pneg %p240
        %p527 = pneg %p264
        %p528 = pneg %p261
        %p529 = pneg %p290
        %p530 = pneg %p287
        %s531 = sand.u32 %s277, 1
        %s532 = scalar_lea.sflag [#allocation7], %s531
        %s533 = sand.u32 %s277, 1
        %s534 = smul.addr %s533, 16
        %s535 = scalar_lea.vmem [#allocation23], %s534
        %v536 = vld [vmem:[%s457] sm:$0xff]
        %v537 = vld [vmem:[%s457 + $0x8] sm:$0xff]
        %v538 = vld [vmem:[%s457 + $0x10] sm:$0xff]
        %v539 = vld [vmem:[%s457 + $0x18] sm:$0xff]
        %v540 = vld [vmem:[%s457 + $0x20] sm:$0xff]
        %v541 = vld [vmem:[%s457 + $0x28] sm:$0xff]
        %v542 = vld [vmem:[%s457 + $0x30] sm:$0xff]
        %v543 = vld [vmem:[%s457 + $0x38] sm:$0xff]
        %v544 = vld [vmem:[%s457 + $0x40] sm:$0xff]
        %v545 = vld [vmem:[%s457 + $0x48] sm:$0xff]
        %v546 = vld [vmem:[%s457 + $0x50] sm:$0xff]
        %v547 = vld [vmem:[%s457 + $0x58] sm:$0xff]
        %v548 = vld [vmem:[%s457 + $0x60] sm:$0xff]
        %v549 = vld [vmem:[%s457 + $0x68] sm:$0xff]
        %v550 = vld [vmem:[%s457 + $0x70] sm:$0xff]
        %v551 = vld [vmem:[%s457 + $0x78] sm:$0xff]
        %v552 = vld [vmem:[%s457 + $0x80] sm:$0xff]
        %v553 = vld [vmem:[%s457 + $0x88] sm:$0xff]
        %v554 = vld [vmem:[%s457 + $0x90] sm:$0xff]
        %v555 = vld [vmem:[%s457 + $0x98] sm:$0xff]
        %v556 = vld [vmem:[%s457 + $0xa0] sm:$0xff]
        %v557 = vld [vmem:[%s457 + $0xa8] sm:$0xff]
        %v558 = vld [vmem:[%s457 + $0xb0] sm:$0xff]
        %v559 = vld [vmem:[%s457 + $0xb8] sm:$0xff]
        %v560 = vld [vmem:[%s457 + $0xc0] sm:$0xff]
        %v561 = vld [vmem:[%s457 + $0xc8] sm:$0xff]
        %v562 = vld [vmem:[%s457 + $0xd0] sm:$0xff]
        %v563 = vld [vmem:[%s457 + $0xd8] sm:$0xff]
        %v564 = vld [vmem:[%s457 + $0xe0] sm:$0xff]
        %v565 = vld [vmem:[%s457 + $0xe8] sm:$0xff]
        %v566 = vld [vmem:[%s457 + $0xf0] sm:$0xff]
        %v567 = vld [vmem:[%s457 + $0xf8] sm:$0xff]
        %vm568 = vcmask 261120
        %v569 = vsel %vm568, %v536, 0.0
        %v570 = vsel %vm568, %v538, 0.0
        %v571 = vadd.f32 %v569, %v570
        %v572 = vsel %vm568, %v540, 0.0
        %v573 = vadd.f32 %v571, %v572
        %v574 = vsel %vm568, %v542, 0.0
        %v575 = vadd.f32 %v573, %v574
        %v576 = vsel %vm568, %v544, 0.0
        %v577 = vadd.f32 %v575, %v576
        %v578 = vsel %vm568, %v546, 0.0
        %v579 = vadd.f32 %v577, %v578
        %v580 = vsel %vm568, %v548, 0.0
        %v581 = vadd.f32 %v579, %v580
        %v582 = vsel %vm568, %v550, 0.0
        %v583 = vadd.f32 %v581, %v582
        %v584 = vsel %vm568, %v552, 0.0
        %v585 = vadd.f32 %v583, %v584
        %v586 = vsel %vm568, %v554, 0.0
        %v587 = vadd.f32 %v585, %v586
        %v588 = vsel %vm568, %v556, 0.0
        %v589 = vadd.f32 %v587, %v588
        %v590 = vsel %vm568, %v558, 0.0
        %v591 = vadd.f32 %v589, %v590
        %v592 = vsel %vm568, %v560, 0.0
        %v593 = vadd.f32 %v591, %v592
        %v594 = vsel %vm568, %v562, 0.0
        %v595 = vadd.f32 %v593, %v594
        %v596 = vsel %vm568, %v564, 0.0
        %v597 = vadd.f32 %v595, %v596
        %v598 = vsel %vm568, %v566, 0.0
        %v599 = vadd.f32 %v597, %v598
        %v600 = vsel %vm568, %v537, 0.0
        %v601 = vsel %vm568, %v539, 0.0
        %v602 = vadd.f32 %v600, %v601
        %v603 = vsel %vm568, %v541, 0.0
        %v604 = vadd.f32 %v602, %v603
        %v605 = vsel %vm568, %v543, 0.0
        %v606 = vadd.f32 %v604, %v605
        %v607 = vsel %vm568, %v545, 0.0
        %v608 = vadd.f32 %v606, %v607
        %v609 = vsel %vm568, %v547, 0.0
        %v610 = vadd.f32 %v608, %v609
        %v611 = vsel %vm568, %v549, 0.0
        %v612 = vadd.f32 %v610, %v611
        %v613 = vsel %vm568, %v551, 0.0
        %v614 = vadd.f32 %v612, %v613
        %v615 = vsel %vm568, %v553, 0.0
        %v616 = vadd.f32 %v614, %v615
        %v617 = vsel %vm568, %v555, 0.0
        %v618 = vadd.f32 %v616, %v617
        %v619 = vsel %vm568, %v557, 0.0
        %v620 = vadd.f32 %v618, %v619
        %v621 = vsel %vm568, %v559, 0.0
        %v622 = vadd.f32 %v620, %v621
        %v623 = vsel %vm568, %v561, 0.0
        %v624 = vadd.f32 %v622, %v623
        %v625 = vsel %vm568, %v563, 0.0
        %v626 = vadd.f32 %v624, %v625
        %v627 = vsel %vm568, %v565, 0.0
        %v628 = vadd.f32 %v626, %v627
        %v629 = vsel %vm568, %v567, 0.0
        %v630 = vadd.f32 %v628, %v629
        %v631 = vsel %vm568, %v599, 0.0
        %v632 = vsel %vm568, %v630, 0.0
        %v633 = vadd.f32 %v631, %v632
        %v634 = vrot.slane %v633, 4
        %v635 = vadd.f32 %v633, %v634
        %v636 = vrot.slane %v635, 2
        %v637 = vadd.f32 %v635, %v636
        %v638 = vrot.slane %v637, 1
        %v639 = vadd.f32 %v637, %v638
        %v640 = vmul.f32 %v639, 0.00390625
        %v641 = vsub.f32 %v536, %v640
        %v642 = vsub.f32 %v537, %v640
        %v643 = vsub.f32 %v538, %v640
        %v644 = vsub.f32 %v539, %v640
        %v645 = vsub.f32 %v540, %v640
        %v646 = vsub.f32 %v541, %v640
        %v647 = vsub.f32 %v542, %v640
        %v648 = vsub.f32 %v543, %v640
        %v649 = vsub.f32 %v544, %v640
        %v650 = vsub.f32 %v545, %v640
        %v651 = vsub.f32 %v546, %v640
        %v652 = vsub.f32 %v547, %v640
        %v653 = vsub.f32 %v548, %v640
        %v654 = vsub.f32 %v549, %v640
        %v655 = vsub.f32 %v550, %v640
        %v656 = vsub.f32 %v551, %v640
        %v657 = vsub.f32 %v552, %v640
        %v658 = vsub.f32 %v553, %v640
        %v659 = vsub.f32 %v554, %v640
        %v660 = vsub.f32 %v555, %v640
        %v661 = vsub.f32 %v556, %v640
        %v662 = vsub.f32 %v557, %v640
        %v663 = vsub.f32 %v558, %v640
        %v664 = vsub.f32 %v559, %v640
        %v665 = vsub.f32 %v560, %v640
        %v666 = vsub.f32 %v561, %v640
        %v667 = vsub.f32 %v562, %v640
        %v668 = vsub.f32 %v563, %v640
        %v669 = vsub.f32 %v564, %v640
        %v670 = vsub.f32 %v565, %v640
        %v671 = vsub.f32 %v566, %v640
        %v672 = vsub.f32 %v567, %v640
        %v673 = vmul.f32 %v641, %v641
        %v674 = vmul.f32 %v642, %v642
        %v675 = vmul.f32 %v643, %v643
        %v676 = vmul.f32 %v644, %v644
        %v677 = vmul.f32 %v645, %v645
        %v678 = vmul.f32 %v646, %v646
        %v679 = vmul.f32 %v647, %v647
        %v680 = vmul.f32 %v648, %v648
        %v681 = vmul.f32 %v649, %v649
        %v682 = vmul.f32 %v650, %v650
        %v683 = vmul.f32 %v651, %v651
        %v684 = vmul.f32 %v652, %v652
        %v685 = vmul.f32 %v653, %v653
        %v686 = vmul.f32 %v654, %v654
        %v687 = vmul.f32 %v655, %v655
        %v688 = vmul.f32 %v656, %v656
        %v689 = vmul.f32 %v657, %v657
        %v690 = vmul.f32 %v658, %v658
        %v691 = vmul.f32 %v659, %v659
        %v692 = vmul.f32 %v660, %v660
        %v693 = vmul.f32 %v661, %v661
        %v694 = vmul.f32 %v662, %v662
        %v695 = vmul.f32 %v663, %v663
        %v696 = vmul.f32 %v664, %v664
        %v697 = vmul.f32 %v665, %v665
        %v698 = vmul.f32 %v666, %v666
        %v699 = vmul.f32 %v667, %v667
        %v700 = vmul.f32 %v668, %v668
        %v701 = vmul.f32 %v669, %v669
        %v702 = vmul.f32 %v670, %v670
        %v703 = vmul.f32 %v671, %v671
        %v704 = vmul.f32 %v672, %v672
        %v705 = vsel %vm568, %v673, 0.0
        %v706 = vsel %vm568, %v675, 0.0
        %v707 = vadd.f32 %v705, %v706
        %v708 = vsel %vm568, %v677, 0.0
        %v709 = vadd.f32 %v707, %v708
        %v710 = vsel %vm568, %v679, 0.0
        %v711 = vadd.f32 %v709, %v710
        %v712 = vsel %vm568, %v681, 0.0
        %v713 = vadd.f32 %v711, %v712
        %v714 = vsel %vm568, %v683, 0.0
        %v715 = vadd.f32 %v713, %v714
        %v716 = vsel %vm568, %v685, 0.0
        %v717 = vadd.f32 %v715, %v716
        %v718 = vsel %vm568, %v687, 0.0
        %v719 = vadd.f32 %v717, %v718
        %v720 = vsel %vm568, %v689, 0.0
        %v721 = vadd.f32 %v719, %v720
        %v722 = vsel %vm568, %v691, 0.0
        %v723 = vadd.f32 %v721, %v722
        %v724 = vsel %vm568, %v693, 0.0
        %v725 = vadd.f32 %v723, %v724
        %v726 = vsel %vm568, %v695, 0.0
        %v727 = vadd.f32 %v725, %v726
        %v728 = vsel %vm568, %v697, 0.0
        %v729 = vadd.f32 %v727, %v728
        %v730 = vsel %vm568, %v699, 0.0
        %v731 = vadd.f32 %v729, %v730
        %v732 = vsel %vm568, %v701, 0.0
        %v733 = vadd.f32 %v731, %v732
        %v734 = vsel %vm568, %v703, 0.0
        %v735 = vadd.f32 %v733, %v734
        %v736 = vsel %vm568, %v674, 0.0
        %v737 = vsel %vm568, %v676, 0.0
        %v738 = vadd.f32 %v736, %v737
        %v739 = vsel %vm568, %v678, 0.0
        %v740 = vadd.f32 %v738, %v739
        %v741 = vsel %vm568, %v680, 0.0
        %v742 = vadd.f32 %v740, %v741
        %v743 = vsel %vm568, %v682, 0.0
        %v744 = vadd.f32 %v742, %v743
        %v745 = vsel %vm568, %v684, 0.0
        %v746 = vadd.f32 %v744, %v745
        %v747 = vsel %vm568, %v686, 0.0
        %v748 = vadd.f32 %v746, %v747
        %v749 = vsel %vm568, %v688, 0.0
        %v750 = vadd.f32 %v748, %v749
        %v751 = vsel %vm568, %v690, 0.0
        %v752 = vadd.f32 %v750, %v751
        %v753 = vsel %vm568, %v692, 0.0
        %v754 = vadd.f32 %v752, %v753
        %v755 = vsel %vm568, %v694, 0.0
        %v756 = vadd.f32 %v754, %v755
        %v757 = vsel %vm568, %v696, 0.0
        %v758 = vadd.f32 %v756, %v757
        %v759 = vsel %vm568, %v698, 0.0
        %v760 = vadd.f32 %v758, %v759
        %v761 = vsel %vm568, %v700, 0.0
        %v762 = vadd.f32 %v760, %v761
        %v763 = vsel %vm568, %v702, 0.0
        %v764 = vadd.f32 %v762, %v763
        %v765 = vsel %vm568, %v704, 0.0
        %v766 = vadd.f32 %v764, %v765
        %v767 = vsel %vm568, %v735, 0.0
        %v768 = vsel %vm568, %v766, 0.0
        %v769 = vadd.f32 %v767, %v768
        %v770 = vrot.slane %v769, 4
        %v771 = vadd.f32 %v769, %v770
        %v772 = vrot.slane %v771, 2
        %v773 = vadd.f32 %v771, %v772
        %v774 = vrot.slane %v773, 1
        %v775 = vadd.f32 %v773, %v774
        %v776 = vmul.f32 %v775, 0.00390625
        %v777 = vld [vmem:[#allocation8] sm:$0x1]
        %v778 = vld [vmem:[#allocation10] sm:$0x1]
        %v779 = vadd.f32 %v776, 1e-05
        %v780 = vrsqrt.pop %v779
        %v781 = vmul.f32 %v641, %v780
        %v782 = vmul.f32 %v642, %v780
        %v783 = vmul.f32 %v643, %v780
        %v784 = vmul.f32 %v644, %v780
        %v785 = vmul.f32 %v645, %v780
        %v786 = vmul.f32 %v646, %v780
        %v787 = vmul.f32 %v647, %v780
        %v788 = vmul.f32 %v648, %v780
        %v789 = vmul.f32 %v649, %v780
        %v790 = vmul.f32 %v650, %v780
        %v791 = vmul.f32 %v651, %v780
        %v792 = vmul.f32 %v652, %v780
        %v793 = vmul.f32 %v653, %v780
        %v794 = vmul.f32 %v654, %v780
        %v795 = vmul.f32 %v655, %v780
        %v796 = vmul.f32 %v656, %v780
        %v797 = vmul.f32 %v657, %v780
        %v798 = vmul.f32 %v658, %v780
        %v799 = vmul.f32 %v659, %v780
        %v800 = vmul.f32 %v660, %v780
        %v801 = vmul.f32 %v661, %v780
        %v802 = vmul.f32 %v662, %v780
        %v803 = vmul.f32 %v663, %v780
        %v804 = vmul.f32 %v664, %v780
        %v805 = vmul.f32 %v665, %v780
        %v806 = vmul.f32 %v666, %v780
        %v807 = vmul.f32 %v667, %v780
        %v808 = vmul.f32 %v668, %v780
        %v809 = vmul.f32 %v669, %v780
        %v810 = vmul.f32 %v670, %v780
        %v811 = vmul.f32 %v671, %v780
        %v812 = vmul.f32 %v672, %v780
        %v814 = vlaneseq
        %v815 = vshrl.u32 %v814, 7
        %v816 = vsub.s32 0, %v815
        %v817 = vrot.slane %v777, %v816
        %v819 = vmul.f32 %v781, %v817
        %v820 = vmul.f32 %v782, %v817
        %v821 = vmul.f32 %v783, %v817
        %v822 = vmul.f32 %v784, %v817
        %v823 = vmul.f32 %v785, %v817
        %v824 = vmul.f32 %v786, %v817
        %v825 = vmul.f32 %v787, %v817
        %v826 = vmul.f32 %v788, %v817
        %v827 = vmul.f32 %v789, %v817
        %v828 = vmul.f32 %v790, %v817
        %v829 = vmul.f32 %v791, %v817
        %v830 = vmul.f32 %v792, %v817
        %v831 = vmul.f32 %v793, %v817
        %v832 = vmul.f32 %v794, %v817
        %v833 = vmul.f32 %v795, %v817
        %v834 = vmul.f32 %v796, %v817
        %v835 = vmul.f32 %v797, %v817
        %v836 = vmul.f32 %v798, %v817
        %v837 = vmul.f32 %v799, %v817
        %v838 = vmul.f32 %v800, %v817
        %v839 = vmul.f32 %v801, %v817
        %v840 = vmul.f32 %v802, %v817
        %v841 = vmul.f32 %v803, %v817
        %v842 = vmul.f32 %v804, %v817
        %v843 = vmul.f32 %v805, %v817
        %v844 = vmul.f32 %v806, %v817
        %v845 = vmul.f32 %v807, %v817
        %v846 = vmul.f32 %v808, %v817
        %v847 = vmul.f32 %v809, %v817
        %v848 = vmul.f32 %v810, %v817
        %v849 = vmul.f32 %v811, %v817
        %v850 = vmul.f32 %v812, %v817
        %v852 = vlaneseq
        %v853 = vshrl.u32 %v852, 7
        %v854 = vsub.s32 0, %v853
        %v855 = vrot.slane %v778, %v854
        %v857 = vadd.f32 %v819, %v855
        %v858 = vadd.f32 %v820, %v855
        %v859 = vadd.f32 %v821, %v855
        %v860 = vadd.f32 %v822, %v855
        %v861 = vadd.f32 %v823, %v855
        %v862 = vadd.f32 %v824, %v855
        %v863 = vadd.f32 %v825, %v855
        %v864 = vadd.f32 %v826, %v855
        %v865 = vadd.f32 %v827, %v855
        %v866 = vadd.f32 %v828, %v855
        %v867 = vadd.f32 %v829, %v855
        %v868 = vadd.f32 %v830, %v855
        %v869 = vadd.f32 %v831, %v855
        %v870 = vadd.f32 %v832, %v855
        %v871 = vadd.f32 %v833, %v855
        %v872 = vadd.f32 %v834, %v855
        %v873 = vadd.f32 %v835, %v855
        %v874 = vadd.f32 %v836, %v855
        %v875 = vadd.f32 %v837, %v855
        %v876 = vadd.f32 %v838, %v855
        %v877 = vadd.f32 %v839, %v855
        %v878 = vadd.f32 %v840, %v855
        %v879 = vadd.f32 %v841, %v855
        %v880 = vadd.f32 %v842, %v855
        %v881 = vadd.f32 %v843, %v855
        %v882 = vadd.f32 %v844, %v855
        %v883 = vadd.f32 %v845, %v855
        %v884 = vadd.f32 %v846, %v855
        %v885 = vadd.f32 %v847, %v855
        %v886 = vadd.f32 %v848, %v855
        %v887 = vadd.f32 %v849, %v855
        %v888 = vadd.f32 %v850, %v855
        %889 = vst [vmem:[#allocation2] sm:$0xff] 0.0
        %890 = vst [vmem:[#allocation2 + $0x8] sm:$0xff] 0.0
        %891 = vst [vmem:[#allocation2 + $0x10] sm:$0xf] 0.0
        %892 = vst [vmem:[#allocation2 + $0x18] sm:$0xff] 0.0
        %893 = vst [vmem:[#allocation2 + $0x20] sm:$0xff] 0.0
        %894 = vst [vmem:[#allocation2 + $0x28] sm:$0xf] 0.0
        %895 = vst [vmem:[#allocation2 + $0x30] sm:$0xff] 0.0
        %896 = vst [vmem:[#allocation2 + $0x38] sm:$0xff] 0.0
        %897 = vst [vmem:[#allocation2 + $0x40] sm:$0xf] 0.0
        %898 = vst [vmem:[#allocation2 + $0x48] sm:$0xff] 0.0
        %899 = vst [vmem:[#allocation2 + $0x50] sm:$0xff] 0.0
        %900 = vst [vmem:[#allocation2 + $0x58] sm:$0xf] 0.0
        %901 = vst [vmem:[#allocation2 + $0x60] sm:$0xff] 0.0
        %902 = vst [vmem:[#allocation2 + $0x68] sm:$0xff] 0.0
        %903 = vst [vmem:[#allocation2 + $0x70] sm:$0xf] 0.0
        %904 = vst [vmem:[#allocation2 + $0x78] sm:$0xff] 0.0
        %905 = vst [vmem:[#allocation2 + $0x80] sm:$0xff] 0.0
        %906 = vst [vmem:[#allocation2 + $0x88] sm:$0xf] 0.0
        %907 = vst [vmem:[#allocation2 + $0x90] sm:$0xff] 0.0
        %908 = vst [vmem:[#allocation2 + $0x98] sm:$0xff] 0.0
        %909 = vst [vmem:[#allocation2 + $0xa0] sm:$0xf] 0.0
        %910 = vst [vmem:[#allocation2 + $0xa8] sm:$0xff] 0.0
        %911 = vst [vmem:[#allocation2 + $0xb0] sm:$0xff] 0.0
        %912 = vst [vmem:[#allocation2 + $0xb8] sm:$0xf] 0.0
        %913 = vst [vmem:[#allocation2 + $0xc0] sm:$0xff] 0.0
        %914 = vst [vmem:[#allocation2 + $0xc8] sm:$0xff] 0.0
        %915 = vst [vmem:[#allocation2 + $0xd0] sm:$0xf] 0.0
        %916 = vst [vmem:[#allocation2 + $0xd8] sm:$0xff] 0.0
        %917 = vst [vmem:[#allocation2 + $0xe0] sm:$0xff] 0.0
        %918 = vst [vmem:[#allocation2 + $0xe8] sm:$0xf] 0.0
        %919 = vst [vmem:[#allocation2 + $0xf0] sm:$0xff] 0.0
        %920 = vst [vmem:[#allocation2 + $0xf8] sm:$0xff] 0.0
        %921 = vst [vmem:[#allocation2 + $0x100] sm:$0xf] 0.0
        %922 = vst [vmem:[#allocation2 + $0x108] sm:$0xff] 0.0
        %923 = vst [vmem:[#allocation2 + $0x110] sm:$0xff] 0.0
        %924 = vst [vmem:[#allocation2 + $0x118] sm:$0xf] 0.0
        %925 = vst [vmem:[#allocation2 + $0x120] sm:$0xff] 0.0
        %926 = vst [vmem:[#allocation2 + $0x128] sm:$0xff] 0.0
        %927 = vst [vmem:[#allocation2 + $0x130] sm:$0xf] 0.0
        %928 = vst [vmem:[#allocation2 + $0x138] sm:$0xff] 0.0
        %929 = vst [vmem:[#allocation2 + $0x140] sm:$0xff] 0.0
        %930 = vst [vmem:[#allocation2 + $0x148] sm:$0xf] 0.0
        %931 = vst [vmem:[#allocation2 + $0x150] sm:$0xff] 0.0
        %932 = vst [vmem:[#allocation2 + $0x158] sm:$0xff] 0.0
        %933 = vst [vmem:[#allocation2 + $0x160] sm:$0xf] 0.0
        %934 = vst [vmem:[#allocation2 + $0x168] sm:$0xff] 0.0
        %935 = vst [vmem:[#allocation2 + $0x170] sm:$0xff] 0.0
        %936 = vst [vmem:[#allocation2 + $0x178] sm:$0xf] 0.0
        %937 = vst [vmem:[#allocation2 + $0x180] sm:$0xff] 0.0
        %938 = vst [vmem:[#allocation2 + $0x188] sm:$0xff] 0.0
        %939 = vst [vmem:[#allocation2 + $0x190] sm:$0xf] 0.0
        %940 = vst [vmem:[#allocation2 + $0x198] sm:$0xff] 0.0
        %941 = vst [vmem:[#allocation2 + $0x1a0] sm:$0xff] 0.0
        %942 = vst [vmem:[#allocation2 + $0x1a8] sm:$0xf] 0.0
        %943 = vst [vmem:[#allocation2 + $0x1b0] sm:$0xff] 0.0
        %944 = vst [vmem:[#allocation2 + $0x1b8] sm:$0xff] 0.0
        %945 = vst [vmem:[#allocation2 + $0x1c0] sm:$0xf] 0.0
        %946 = vst [vmem:[#allocation2 + $0x1c8] sm:$0xff] 0.0
        %947 = vst [vmem:[#allocation2 + $0x1d0] sm:$0xff] 0.0
        %948 = vst [vmem:[#allocation2 + $0x1d8] sm:$0xf] 0.0
        %s949 = scalar_lea.vmem [#allocation2], 48
        %950 = vst.msk [vmem:[%s949 + $0x2] sm:$0xff] %vm568, %v857
        %951 = vst.msk [vmem:[%s949 + $0xa] sm:$0xff] %vm568, %v858
        %952 = vst.msk [vmem:[%s949 + $0x1a] sm:$0xff] %vm568, %v859
        %953 = vst.msk [vmem:[%s949 + $0x22] sm:$0xff] %vm568, %v860
        %954 = vst.msk [vmem:[%s949 + $0x32] sm:$0xff] %vm568, %v861
        %955 = vst.msk [vmem:[%s949 + $0x3a] sm:$0xff] %vm568, %v862
        %956 = vst.msk [vmem:[%s949 + $0x4a] sm:$0xff] %vm568, %v863
        %957 = vst.msk [vmem:[%s949 + $0x52] sm:$0xff] %vm568, %v864
        %958 = vst.msk [vmem:[%s949 + $0x62] sm:$0xff] %vm568, %v865
        %959 = vst.msk [vmem:[%s949 + $0x6a] sm:$0xff] %vm568, %v866
        %960 = vst.msk [vmem:[%s949 + $0x7a] sm:$0xff] %vm568, %v867
        %961 = vst.msk [vmem:[%s949 + $0x82] sm:$0xff] %vm568, %v868
        %962 = vst.msk [vmem:[%s949 + $0x92] sm:$0xff] %vm568, %v869
        %963 = vst.msk [vmem:[%s949 + $0x9a] sm:$0xff] %vm568, %v870
        %964 = vst.msk [vmem:[%s949 + $0xaa] sm:$0xff] %vm568, %v871
        %965 = vst.msk [vmem:[%s949 + $0xb2] sm:$0xff] %vm568, %v872
        %966 = vst.msk [vmem:[%s949 + $0xc2] sm:$0xff] %vm568, %v873
        %967 = vst.msk [vmem:[%s949 + $0xca] sm:$0xff] %vm568, %v874
        %968 = vst.msk [vmem:[%s949 + $0xda] sm:$0xff] %vm568, %v875
        %969 = vst.msk [vmem:[%s949 + $0xe2] sm:$0xff] %vm568, %v876
        %970 = vst.msk [vmem:[%s949 + $0xf2] sm:$0xff] %vm568, %v877
        %971 = vst.msk [vmem:[%s949 + $0xfa] sm:$0xff] %vm568, %v878
        %972 = vst.msk [vmem:[%s949 + $0x10a] sm:$0xff] %vm568, %v879
        %973 = vst.msk [vmem:[%s949 + $0x112] sm:$0xff] %vm568, %v880
        %974 = vst.msk [vmem:[%s949 + $0x122] sm:$0xff] %vm568, %v881
        %975 = vst.msk [vmem:[%s949 + $0x12a] sm:$0xff] %vm568, %v882
        %976 = vst.msk [vmem:[%s949 + $0x13a] sm:$0xff] %vm568, %v883
        %977 = vst.msk [vmem:[%s949 + $0x142] sm:$0xff] %vm568, %v884
        %978 = vst.msk [vmem:[%s949 + $0x152] sm:$0xff] %vm568, %v885
        %979 = vst.msk [vmem:[%s949 + $0x15a] sm:$0xff] %vm568, %v886
        %980 = vst.msk [vmem:[%s949 + $0x16a] sm:$0xff] %vm568, %v887
        %981 = vst.msk [vmem:[%s949 + $0x172] sm:$0xff] %vm568, %v888
        %1014 = vrot.lane.b32.xlu0 %v857, 32
        %v1015 = vpop.permute.xlu0 %1014
        %1016 = vrot.lane.b32.xlu0 %v858, 32
        %v1017 = vpop.permute.xlu0 %1016
        %1018 = vrot.lane.b32.xlu0 %v859, 32
        %v1019 = vpop.permute.xlu0 %1018
        %1020 = vrot.lane.b32.xlu0 %v860, 32
        %v1021 = vpop.permute.xlu0 %1020
        %1022 = vrot.lane.b32.xlu0 %v861, 32
        %v1023 = vpop.permute.xlu0 %1022
        %1024 = vrot.lane.b32.xlu0 %v862, 32
        %v1025 = vpop.permute.xlu0 %1024
        %1026 = vrot.lane.b32.xlu0 %v863, 32
        %v1027 = vpop.permute.xlu0 %1026
        %1028 = vrot.lane.b32.xlu0 %v864, 32
        %v1029 = vpop.permute.xlu0 %1028
        %1030 = vrot.lane.b32.xlu0 %v865, 32
        %v1031 = vpop.permute.xlu0 %1030
        %1032 = vrot.lane.b32.xlu0 %v866, 32
        %v1033 = vpop.permute.xlu0 %1032
        %1034 = vrot.lane.b32.xlu0 %v867, 32
        %v1035 = vpop.permute.xlu0 %1034
        %1036 = vrot.lane.b32.xlu0 %v868, 32
        %v1037 = vpop.permute.xlu0 %1036
        %1038 = vrot.lane.b32.xlu0 %v869, 32
        %v1039 = vpop.permute.xlu0 %1038
        %1040 = vrot.lane.b32.xlu0 %v870, 32
        %v1041 = vpop.permute.xlu0 %1040
        %1042 = vrot.lane.b32.xlu0 %v871, 32
        %v1043 = vpop.permute.xlu0 %1042
        %1044 = vrot.lane.b32.xlu0 %v872, 32
        %v1045 = vpop.permute.xlu0 %1044
        %1046 = vrot.lane.b32.xlu0 %v873, 32
        %v1047 = vpop.permute.xlu0 %1046
        %1048 = vrot.lane.b32.xlu0 %v874, 32
        %v1049 = vpop.permute.xlu0 %1048
        %1050 = vrot.lane.b32.xlu0 %v875, 32
        %v1051 = vpop.permute.xlu0 %1050
        %1052 = vrot.lane.b32.xlu0 %v876, 32
        %v1053 = vpop.permute.xlu0 %1052
        %1054 = vrot.lane.b32.xlu0 %v877, 32
        %v1055 = vpop.permute.xlu0 %1054
        %1056 = vrot.lane.b32.xlu0 %v878, 32
        %v1057 = vpop.permute.xlu0 %1056
        %1058 = vrot.lane.b32.xlu0 %v879, 32
        %v1059 = vpop.permute.xlu0 %1058
        %1060 = vrot.lane.b32.xlu0 %v880, 32
        %v1061 = vpop.permute.xlu0 %1060
        %1062 = vrot.lane.b32.xlu0 %v881, 32
        %v1063 = vpop.permute.xlu0 %1062
        %1064 = vrot.lane.b32.xlu0 %v882, 32
        %v1065 = vpop.permute.xlu0 %1064
        %1066 = vrot.lane.b32.xlu0 %v883, 32
        %v1067 = vpop.permute.xlu0 %1066
        %1068 = vrot.lane.b32.xlu0 %v884, 32
        %v1069 = vpop.permute.xlu0 %1068
        %1070 = vrot.lane.b32.xlu0 %v885, 32
        %v1071 = vpop.permute.xlu0 %1070
        %1072 = vrot.lane.b32.xlu0 %v886, 32
        %v1073 = vpop.permute.xlu0 %1072
        %1074 = vrot.lane.b32.xlu0 %v887, 32
        %v1075 = vpop.permute.xlu0 %1074
        %1076 = vrot.lane.b32.xlu0 %v888, 32
        %v1077 = vpop.permute.xlu0 %1076
        %vm1110 = vcmask 523520
        %1111 = vst.msk [vmem:[%s949 + $0x2] sm:$0xff] %vm1110, %v1015
        %1112 = vst.msk [vmem:[%s949 + $0xa] sm:$0xff] %vm1110, %v1017
        %1113 = vst.msk [vmem:[%s949 + $0x1a] sm:$0xff] %vm1110, %v1019
        %1114 = vst.msk [vmem:[%s949 + $0x22] sm:$0xff] %vm1110, %v1021
        %1115 = vst.msk [vmem:[%s949 + $0x32] sm:$0xff] %vm1110, %v1023
        %1116 = vst.msk [vmem:[%s949 + $0x3a] sm:$0xff] %vm1110, %v1025
        %1117 = vst.msk [vmem:[%s949 + $0x4a] sm:$0xff] %vm1110, %v1027
        %1118 = vst.msk [vmem:[%s949 + $0x52] sm:$0xff] %vm1110, %v1029
        %1119 = vst.msk [vmem:[%s949 + $0x62] sm:$0xff] %vm1110, %v1031
        %1120 = vst.msk [vmem:[%s949 + $0x6a] sm:$0xff] %vm1110, %v1033
        %1121 = vst.msk [vmem:[%s949 + $0x7a] sm:$0xff] %vm1110, %v1035
        %1122 = vst.msk [vmem:[%s949 + $0x82] sm:$0xff] %vm1110, %v1037
        %1123 = vst.msk [vmem:[%s949 + $0x92] sm:$0xff] %vm1110, %v1039
        %1124 = vst.msk [vmem:[%s949 + $0x9a] sm:$0xff] %vm1110, %v1041
        %1125 = vst.msk [vmem:[%s949 + $0xaa] sm:$0xff] %vm1110, %v1043
        %1126 = vst.msk [vmem:[%s949 + $0xb2] sm:$0xff] %vm1110, %v1045
        %1127 = vst.msk [vmem:[%s949 + $0xc2] sm:$0xff] %vm1110, %v1047
        %1128 = vst.msk [vmem:[%s949 + $0xca] sm:$0xff] %vm1110, %v1049
        %1129 = vst.msk [vmem:[%s949 + $0xda] sm:$0xff] %vm1110, %v1051
        %1130 = vst.msk [vmem:[%s949 + $0xe2] sm:$0xff] %vm1110, %v1053
        %1131 = vst.msk [vmem:[%s949 + $0xf2] sm:$0xff] %vm1110, %v1055
        %1132 = vst.msk [vmem:[%s949 + $0xfa] sm:$0xff] %vm1110, %v1057
        %1133 = vst.msk [vmem:[%s949 + $0x10a] sm:$0xff] %vm1110, %v1059
        %1134 = vst.msk [vmem:[%s949 + $0x112] sm:$0xff] %vm1110, %v1061
        %1135 = vst.msk [vmem:[%s949 + $0x122] sm:$0xff] %vm1110, %v1063
        %1136 = vst.msk [vmem:[%s949 + $0x12a] sm:$0xff] %vm1110, %v1065
        %1137 = vst.msk [vmem:[%s949 + $0x13a] sm:$0xff] %vm1110, %v1067
        %1138 = vst.msk [vmem:[%s949 + $0x142] sm:$0xff] %vm1110, %v1069
        %1139 = vst.msk [vmem:[%s949 + $0x152] sm:$0xff] %vm1110, %v1071
        %1140 = vst.msk [vmem:[%s949 + $0x15a] sm:$0xff] %vm1110, %v1073
        %1141 = vst.msk [vmem:[%s949 + $0x16a] sm:$0xff] %vm1110, %v1075
        %1142 = vst.msk [vmem:[%s949 + $0x172] sm:$0xff] %vm1110, %v1077
        %1143 = vrot.lane.b32.xlu0 %v857, 64
        %v1144 = vpop.permute.xlu0 %1143
        %1145 = vrot.lane.b32.xlu0 %v858, 64
        %v1146 = vpop.permute.xlu0 %1145
        %1147 = vrot.lane.b32.xlu0 %v859, 64
        %v1148 = vpop.permute.xlu0 %1147
        %1149 = vrot.lane.b32.xlu0 %v860, 64
        %v1150 = vpop.permute.xlu0 %1149
        %1151 = vrot.lane.b32.xlu0 %v861, 64
        %v1152 = vpop.permute.xlu0 %1151
        %1153 = vrot.lane.b32.xlu0 %v862, 64
        %v1154 = vpop.permute.xlu0 %1153
        %1155 = vrot.lane.b32.xlu0 %v863, 64
        %v1156 = vpop.permute.xlu0 %1155
        %1157 = vrot.lane.b32.xlu0 %v864, 64
        %v1158 = vpop.permute.xlu0 %1157
        %1159 = vrot.lane.b32.xlu0 %v865, 64
        %v1160 = vpop.permute.xlu0 %1159
        %1161 = vrot.lane.b32.xlu0 %v866, 64
        %v1162 = vpop.permute.xlu0 %1161
        %1163 = vrot.lane.b32.xlu0 %v867, 64
        %v1164 = vpop.permute.xlu0 %1163
        %1165 = vrot.lane.b32.xlu0 %v868, 64
        %v1166 = vpop.permute.xlu0 %1165
        %1167 = vrot.lane.b32.xlu0 %v869, 64
        %v1168 = vpop.permute.xlu0 %1167
        %1169 = vrot.lane.b32.xlu0 %v870, 64
        %v1170 = vpop.permute.xlu0 %1169
        %1171 = vrot.lane.b32.xlu0 %v871, 64
        %v1172 = vpop.permute.xlu0 %1171
        %1173 = vrot.lane.b32.xlu0 %v872, 64
        %v1174 = vpop.permute.xlu0 %1173
        %1175 = vrot.lane.b32.xlu0 %v873, 64
        %v1176 = vpop.permute.xlu0 %1175
        %1177 = vrot.lane.b32.xlu0 %v874, 64
        %v1178 = vpop.permute.xlu0 %1177
        %1179 = vrot.lane.b32.xlu0 %v875, 64
        %v1180 = vpop.permute.xlu0 %1179
        %1181 = vrot.lane.b32.xlu0 %v876, 64
        %v1182 = vpop.permute.xlu0 %1181
        %1183 = vrot.lane.b32.xlu0 %v877, 64
        %v1184 = vpop.permute.xlu0 %1183
        %1185 = vrot.lane.b32.xlu0 %v878, 64
        %v1186 = vpop.permute.xlu0 %1185
        %1187 = vrot.lane.b32.xlu0 %v879, 64
        %v1188 = vpop.permute.xlu0 %1187
        %1189 = vrot.lane.b32.xlu0 %v880, 64
        %v1190 = vpop.permute.xlu0 %1189
        %1191 = vrot.lane.b32.xlu0 %v881, 64
        %v1192 = vpop.permute.xlu0 %1191
        %1193 = vrot.lane.b32.xlu0 %v882, 64
        %v1194 = vpop.permute.xlu0 %1193
        %1195 = vrot.lane.b32.xlu0 %v883, 64
        %v1196 = vpop.permute.xlu0 %1195
        %1197 = vrot.lane.b32.xlu0 %v884, 64
        %v1198 = vpop.permute.xlu0 %1197
        %1199 = vrot.lane.b32.xlu0 %v885, 64
        %v1200 = vpop.permute.xlu0 %1199
        %1201 = vrot.lane.b32.xlu0 %v886, 64
        %v1202 = vpop.permute.xlu0 %1201
        %1203 = vrot.lane.b32.xlu0 %v887, 64
        %v1204 = vpop.permute.xlu0 %1203
        %1205 = vrot.lane.b32.xlu0 %v888, 64
        %v1206 = vpop.permute.xlu0 %1205
        %vm1239 = vcmask 785920
        %1240 = vst.msk [vmem:[%s949 + $0x2] sm:$0xff] %vm1239, %v1144
        %1241 = vst.msk [vmem:[%s949 + $0xa] sm:$0xff] %vm1239, %v1146
        %1242 = vst.msk [vmem:[%s949 + $0x1a] sm:$0xff] %vm1239, %v1148
        %1243 = vst.msk [vmem:[%s949 + $0x22] sm:$0xff] %vm1239, %v1150
        %1244 = vst.msk [vmem:[%s949 + $0x32] sm:$0xff] %vm1239, %v1152
        %1245 = vst.msk [vmem:[%s949 + $0x3a] sm:$0xff] %vm1239, %v1154
        %1246 = vst.msk [vmem:[%s949 + $0x4a] sm:$0xff] %vm1239, %v1156
        %1247 = vst.msk [vmem:[%s949 + $0x52] sm:$0xff] %vm1239, %v1158
        %1248 = vst.msk [vmem:[%s949 + $0x62] sm:$0xff] %vm1239, %v1160
        %1249 = vst.msk [vmem:[%s949 + $0x6a] sm:$0xff] %vm1239, %v1162
        %1250 = vst.msk [vmem:[%s949 + $0x7a] sm:$0xff] %vm1239, %v1164
        %1251 = vst.msk [vmem:[%s949 + $0x82] sm:$0xff] %vm1239, %v1166
        %1252 = vst.msk [vmem:[%s949 + $0x92] sm:$0xff] %vm1239, %v1168
        %1253 = vst.msk [vmem:[%s949 + $0x9a] sm:$0xff] %vm1239, %v1170
        %1254 = vst.msk [vmem:[%s949 + $0xaa] sm:$0xff] %vm1239, %v1172
        %1255 = vst.msk [vmem:[%s949 + $0xb2] sm:$0xff] %vm1239, %v1174
        %1256 = vst.msk [vmem:[%s949 + $0xc2] sm:$0xff] %vm1239, %v1176
        %1257 = vst.msk [vmem:[%s949 + $0xca] sm:$0xff] %vm1239, %v1178
        %1258 = vst.msk [vmem:[%s949 + $0xda] sm:$0xff] %vm1239, %v1180
        %1259 = vst.msk [vmem:[%s949 + $0xe2] sm:$0xff] %vm1239, %v1182
        %1260 = vst.msk [vmem:[%s949 + $0xf2] sm:$0xff] %vm1239, %v1184
        %1261 = vst.msk [vmem:[%s949 + $0xfa] sm:$0xff] %vm1239, %v1186
        %1262 = vst.msk [vmem:[%s949 + $0x10a] sm:$0xff] %vm1239, %v1188
        %1263 = vst.msk [vmem:[%s949 + $0x112] sm:$0xff] %vm1239, %v1190
        %1264 = vst.msk [vmem:[%s949 + $0x122] sm:$0xff] %vm1239, %v1192
        %1265 = vst.msk [vmem:[%s949 + $0x12a] sm:$0xff] %vm1239, %v1194
        %1266 = vst.msk [vmem:[%s949 + $0x13a] sm:$0xff] %vm1239, %v1196
        %1267 = vst.msk [vmem:[%s949 + $0x142] sm:$0xff] %vm1239, %v1198
        %1268 = vst.msk [vmem:[%s949 + $0x152] sm:$0xff] %vm1239, %v1200
        %1269 = vst.msk [vmem:[%s949 + $0x15a] sm:$0xff] %vm1239, %v1202
        %1270 = vst.msk [vmem:[%s949 + $0x16a] sm:$0xff] %vm1239, %v1204
        %1271 = vst.msk [vmem:[%s949 + $0x172] sm:$0xff] %vm1239, %v1206
        %1272 = vrot.lane.b32.xlu0 %v857, 96
        %v1273 = vpop.permute.xlu0 %1272
        %1274 = vrot.lane.b32.xlu0 %v858, 96
        %v1275 = vpop.permute.xlu0 %1274
        %1276 = vrot.lane.b32.xlu0 %v859, 96
        %v1277 = vpop.permute.xlu0 %1276
        %1278 = vrot.lane.b32.xlu0 %v860, 96
        %v1279 = vpop.permute.xlu0 %1278
        %1280 = vrot.lane.b32.xlu0 %v861, 96
        %v1281 = vpop.permute.xlu0 %1280
        %1282 = vrot.lane.b32.xlu0 %v862, 96
        %v1283 = vpop.permute.xlu0 %1282
        %1284 = vrot.lane.b32.xlu0 %v863, 96
        %v1285 = vpop.permute.xlu0 %1284
        %1286 = vrot.lane.b32.xlu0 %v864, 96
        %v1287 = vpop.permute.xlu0 %1286
        %1288 = vrot.lane.b32.xlu0 %v865, 96
        %v1289 = vpop.permute.xlu0 %1288
        %1290 = vrot.lane.b32.xlu0 %v866, 96
        %v1291 = vpop.permute.xlu0 %1290
        %1292 = vrot.lane.b32.xlu0 %v867, 96
        %v1293 = vpop.permute.xlu0 %1292
        %1294 = vrot.lane.b32.xlu0 %v868, 96
        %v1295 = vpop.permute.xlu0 %1294
        %1296 = vrot.lane.b32.xlu0 %v869, 96
        %v1297 = vpop.permute.xlu0 %1296
        %1298 = vrot.lane.b32.xlu0 %v870, 96
        %v1299 = vpop.permute.xlu0 %1298
        %1300 = vrot.lane.b32.xlu0 %v871, 96
        %v1301 = vpop.permute.xlu0 %1300
        %1302 = vrot.lane.b32.xlu0 %v872, 96
        %v1303 = vpop.permute.xlu0 %1302
        %1304 = vrot.lane.b32.xlu0 %v873, 96
        %v1305 = vpop.permute.xlu0 %1304
        %1306 = vrot.lane.b32.xlu0 %v874, 96
        %v1307 = vpop.permute.xlu0 %1306
        %1308 = vrot.lane.b32.xlu0 %v875, 96
        %v1309 = vpop.permute.xlu0 %1308
        %1310 = vrot.lane.b32.xlu0 %v876, 96
        %v1311 = vpop.permute.xlu0 %1310
        %1312 = vrot.lane.b32.xlu0 %v877, 96
        %v1313 = vpop.permute.xlu0 %1312
        %1314 = vrot.lane.b32.xlu0 %v878, 96
        %v1315 = vpop.permute.xlu0 %1314
        %1316 = vrot.lane.b32.xlu0 %v879, 96
        %v1317 = vpop.permute.xlu0 %1316
        %1318 = vrot.lane.b32.xlu0 %v880, 96
        %v1319 = vpop.permute.xlu0 %1318
        %1320 = vrot.lane.b32.xlu0 %v881, 96
        %v1321 = vpop.permute.xlu0 %1320
        %1322 = vrot.lane.b32.xlu0 %v882, 96
        %v1323 = vpop.permute.xlu0 %1322
        %1324 = vrot.lane.b32.xlu0 %v883, 96
        %v1325 = vpop.permute.xlu0 %1324
        %1326 = vrot.lane.b32.xlu0 %v884, 96
        %v1327 = vpop.permute.xlu0 %1326
        %1328 = vrot.lane.b32.xlu0 %v885, 96
        %v1329 = vpop.permute.xlu0 %1328
        %1330 = vrot.lane.b32.xlu0 %v886, 96
        %v1331 = vpop.permute.xlu0 %1330
        %1332 = vrot.lane.b32.xlu0 %v887, 96
        %v1333 = vpop.permute.xlu0 %1332
        %1334 = vrot.lane.b32.xlu0 %v888, 96
        %v1335 = vpop.permute.xlu0 %1334
        %vm1368 = vcmask 1048320
        %1369 = vst.msk [vmem:[%s949 + $0x2] sm:$0xff] %vm1368, %v1273
        %1370 = vst.msk [vmem:[%s949 + $0xa] sm:$0xff] %vm1368, %v1275
        %1371 = vst.msk [vmem:[%s949 + $0x1a] sm:$0xff] %vm1368, %v1277
        %1372 = vst.msk [vmem:[%s949 + $0x22] sm:$0xff] %vm1368, %v1279
        %1373 = vst.msk [vmem:[%s949 + $0x32] sm:$0xff] %vm1368, %v1281
        %1374 = vst.msk [vmem:[%s949 + $0x3a] sm:$0xff] %vm1368, %v1283
        %1375 = vst.msk [vmem:[%s949 + $0x4a] sm:$0xff] %vm1368, %v1285
        %1376 = vst.msk [vmem:[%s949 + $0x52] sm:$0xff] %vm1368, %v1287
        %1377 = vst.msk [vmem:[%s949 + $0x62] sm:$0xff] %vm1368, %v1289
        %1378 = vst.msk [vmem:[%s949 + $0x6a] sm:$0xff] %vm1368, %v1291
        %1379 = vst.msk [vmem:[%s949 + $0x7a] sm:$0xff] %vm1368, %v1293
        %1380 = vst.msk [vmem:[%s949 + $0x82] sm:$0xff] %vm1368, %v1295
        %1381 = vst.msk [vmem:[%s949 + $0x92] sm:$0xff] %vm1368, %v1297
        %1382 = vst.msk [vmem:[%s949 + $0x9a] sm:$0xff] %vm1368, %v1299
        %1383 = vst.msk [vmem:[%s949 + $0xaa] sm:$0xff] %vm1368, %v1301
        %1384 = vst.msk [vmem:[%s949 + $0xb2] sm:$0xff] %vm1368, %v1303
        %1385 = vst.msk [vmem:[%s949 + $0xc2] sm:$0xff] %vm1368, %v1305
        %1386 = vst.msk [vmem:[%s949 + $0xca] sm:$0xff] %vm1368, %v1307
        %1387 = vst.msk [vmem:[%s949 + $0xda] sm:$0xff] %vm1368, %v1309
        %1388 = vst.msk [vmem:[%s949 + $0xe2] sm:$0xff] %vm1368, %v1311
        %1389 = vst.msk [vmem:[%s949 + $0xf2] sm:$0xff] %vm1368, %v1313
        %1390 = vst.msk [vmem:[%s949 + $0xfa] sm:$0xff] %vm1368, %v1315
        %1391 = vst.msk [vmem:[%s949 + $0x10a] sm:$0xff] %vm1368, %v1317
        %1392 = vst.msk [vmem:[%s949 + $0x112] sm:$0xff] %vm1368, %v1319
        %1393 = vst.msk [vmem:[%s949 + $0x122] sm:$0xff] %vm1368, %v1321
        %1394 = vst.msk [vmem:[%s949 + $0x12a] sm:$0xff] %vm1368, %v1323
        %1395 = vst.msk [vmem:[%s949 + $0x13a] sm:$0xff] %vm1368, %v1325
        %1396 = vst.msk [vmem:[%s949 + $0x142] sm:$0xff] %vm1368, %v1327
        %1397 = vst.msk [vmem:[%s949 + $0x152] sm:$0xff] %vm1368, %v1329
        %1398 = vst.msk [vmem:[%s949 + $0x15a] sm:$0xff] %vm1368, %v1331
        %1399 = vst.msk [vmem:[%s949 + $0x16a] sm:$0xff] %vm1368, %v1333
        %1400 = vst.msk [vmem:[%s949 + $0x172] sm:$0xff] %vm1368, %v1335
        %v1401 = vld [vmem:[#allocation11] sm:$0x1f]
        %v1402 = vld [vmem:[#allocation11 + $0x8] sm:$0x1f]
        %v1403 = vld [vmem:[#allocation11 + $0x10] sm:$0x1f]
        %v1404 = vld [vmem:[#allocation11 + $0x18] sm:$0x1f]
        %v1405 = vld [vmem:[#allocation11 + $0x20] sm:$0x1f]
        %v1406 = vld [vmem:[#allocation13] sm:$0x1]
        %1407 = vst [vmem:[#allocation3] sm:$0x3f] 0.0
        %1408 = vst [vmem:[#allocation3 + $0x8] sm:$0x3f] 0.0
        %1409 = vst [vmem:[#allocation3 + $0x10] sm:$0x3f] 0.0
        %1410 = vst [vmem:[#allocation3 + $0x18] sm:$0x3f] 0.0
        %1411 = vst [vmem:[#allocation3 + $0x20] sm:$0x3f] 0.0
        %1412 = vst [vmem:[#allocation3 + $0x28] sm:$0x3f] 0.0
        %v1413 = vld [vmem:[#allocation2] sm:$0x1f]
        %v1414 = vld [vmem:[#allocation2 + $0x18] sm:$0x1f]
        %v1415 = vld [vmem:[#allocation2 + $0x30] sm:$0x1f]
        %v1416 = vld [vmem:[#allocation2 + $0x48] sm:$0x1f]
        %v1417 = vld [vmem:[#allocation2 + $0x60] sm:$0x1f]
        %v1418 = vmul.f32 %v1413, %v1401
        %v1419 = vmul.f32 %v1414, %v1402
        %v1420 = vmul.f32 %v1415, %v1403
        %v1421 = vmul.f32 %v1416, %v1404
        %v1422 = vmul.f32 %v1417, %v1405
        %vm1423 = vcmask 1044480
        %v1424 = vsel %vm1423, %v1418, 0.0
        %v1425 = vsel %vm1423, %v1419, 0.0
        %v1426 = vadd.f32 %v1424, %v1425
        %v1427 = vsel %vm1423, %v1420, 0.0
        %v1428 = vadd.f32 %v1426, %v1427
        %v1429 = vsel %vm1423, %v1421, 0.0
        %v1430 = vadd.f32 %v1428, %v1429
        %v1431 = vsel %vm1423, %v1422, 0.0
        %v1432 = vadd.f32 %v1430, %v1431
        %v1433 = vsel %vm1423, %v1432, 0.0
        %v1434 = vrot.slane %v1433, 4
        %v1435 = vadd.f32 %v1433, %v1434
        %v1436 = vrot.slane %v1435, 2
        %v1437 = vadd.f32 %v1435, %v1436
        %v1438 = vrot.slane %v1437, 1
        %v1439 = vadd.f32 %v1437, %v1438
        %v1440 = vadd.f32 %v1439, %v1406
        %s1441 = scalar_lea.vmem [#allocation3], 8
        %1442 = vst [vmem:[%s1441 + $0x1] sm:$0x1] %v1440
        %v1443 = vld [vmem:[#allocation2 + $0x4] sm:$0x1f]
        %v1444 = vld [vmem:[#allocation2 + $0x1c] sm:$0x1f]
        %v1445 = vld [vmem:[#allocation2 + $0x34] sm:$0x1f]
        %v1446 = vld [vmem:[#allocation2 + $0x4c] sm:$0x1f]
        %v1447 = vld [vmem:[#allocation2 + $0x64] sm:$0x1f]
        %v1448 = vmul.f32 %v1443, %v1401
        %v1449 = vmul.f32 %v1444, %v1402
        %v1450 = vmul.f32 %v1445, %v1403
        %v1451 = vmul.f32 %v1446, %v1404
        %v1452 = vmul.f32 %v1447, %v1405
        %v1453 = vsel %vm1423, %v1448, 0.0
        %v1454 = vsel %vm1423, %v1449, 0.0
        %v1455 = vadd.f32 %v1453, %v1454
        %v1456 = vsel %vm1423, %v1450, 0.0
        %v1457 = vadd.f32 %v1455, %v1456
        %v1458 = vsel %vm1423, %v1451, 0.0
        %v1459 = vadd.f32 %v1457, %v1458
        %v1460 = vsel %vm1423, %v1452, 0.0
        %v1461 = vadd.f32 %v1459, %v1460
        %v1462 = vsel %vm1423, %v1461, 0.0
        %v1463 = vrot.slane %v1462, 4
        %v1464 = vadd.f32 %v1462, %v1463
        %v1465 = vrot.slane %v1464, 2
        %v1466 = vadd.f32 %v1464, %v1465
        %v1467 = vrot.slane %v1466, 1
        %v1468 = vadd.f32 %v1466, %v1467
        %v1469 = vadd.f32 %v1468, %v1406
        %1470 = vst [vmem:[%s1441 + $0x2] sm:$0x1] %v1469
        %v1471 = vld [vmem:[#allocation2 + $0x8] sm:$0x1f]
        %v1472 = vld [vmem:[#allocation2 + $0x20] sm:$0x1f]
        %v1473 = vld [vmem:[#allocation2 + $0x38] sm:$0x1f]
        %v1474 = vld [vmem:[#allocation2 + $0x50] sm:$0x1f]
        %v1475 = vld [vmem:[#allocation2 + $0x68] sm:$0x1f]
        %v1476 = vmul.f32 %v1471, %v1401
        %v1477 = vmul.f32 %v1472, %v1402
        %v1478 = vmul.f32 %v1473, %v1403
        %v1479 = vmul.f32 %v1474, %v1404
        %v1480 = vmul.f32 %v1475, %v1405
        %v1481 = vsel %vm1423, %v1476, 0.0
        %v1482 = vsel %vm1423, %v1477, 0.0
        %v1483 = vadd.f32 %v1481, %v1482
        %v1484 = vsel %vm1423, %v1478, 0.0
        %v1485 = vadd.f32 %v1483, %v1484
        %v1486 = vsel %vm1423, %v1479, 0.0
        %v1487 = vadd.f32 %v1485, %v1486
        %v1488 = vsel %vm1423, %v1480, 0.0
        %v1489 = vadd.f32 %v1487, %v1488
        %v1490 = vsel %vm1423, %v1489, 0.0
        %v1491 = vrot.slane %v1490, 4
        %v1492 = vadd.f32 %v1490, %v1491
        %v1493 = vrot.slane %v1492, 2
        %v1494 = vadd.f32 %v1492, %v1493
        %v1495 = vrot.slane %v1494, 1
        %v1496 = vadd.f32 %v1494, %v1495
        %v1497 = vadd.f32 %v1496, %v1406
        %1498 = vst [vmem:[%s1441 + $0x3] sm:$0x1] %v1497
        %v1499 = vld [vmem:[#allocation2 + $0xc] sm:$0x1f]
        %v1500 = vld [vmem:[#allocation2 + $0x24] sm:$0x1f]
        %v1501 = vld [vmem:[#allocation2 + $0x3c] sm:$0x1f]
        %v1502 = vld [vmem:[#allocation2 + $0x54] sm:$0x1f]
        %v1503 = vld [vmem:[#allocation2 + $0x6c] sm:$0x1f]
        %v1504 = vmul.f32 %v1499, %v1401
        %v1505 = vmul.f32 %v1500, %v1402
        %v1506 = vmul.f32 %v1501, %v1403
        %v1507 = vmul.f32 %v1502, %v1404
        %v1508 = vmul.f32 %v1503, %v1405
        %v1509 = vsel %vm1423, %v1504, 0.0
        %v1510 = vsel %vm1423, %v1505, 0.0
        %v1511 = vadd.f32 %v1509, %v1510
        %v1512 = vsel %vm1423, %v1506, 0.0
        %v1513 = vadd.f32 %v1511, %v1512
        %v1514 = vsel %vm1423, %v1507, 0.0
        %v1515 = vadd.f32 %v1513, %v1514
        %v1516 = vsel %vm1423, %v1508, 0.0
        %v1517 = vadd.f32 %v1515, %v1516
        %v1518 = vsel %vm1423, %v1517, 0.0
        %v1519 = vrot.slane %v1518, 4
        %v1520 = vadd.f32 %v1518, %v1519
        %v1521 = vrot.slane %v1520, 2
        %v1522 = vadd.f32 %v1520, %v1521
        %v1523 = vrot.slane %v1522, 1
        %v1524 = vadd.f32 %v1522, %v1523
        %v1525 = vadd.f32 %v1524, %v1406
        %1526 = vst [vmem:[%s1441 + $0x4] sm:$0x1] %v1525
        %s1527 = scalar_lea.vmem [#allocation2], 96
        %v1528 = vld [vmem:[%s1527] sm:$0x1f]
        %v1529 = vld [vmem:[%s1527 + $0x18] sm:$0x1f]
        %v1530 = vld [vmem:[%s1527 + $0x30] sm:$0x1f]
        %v1531 = vld [vmem:[%s1527 + $0x48] sm:$0x1f]
        %v1532 = vld [vmem:[%s1527 + $0x60] sm:$0x1f]
        %v1533 = vmul.f32 %v1528, %v1401
        %v1534 = vmul.f32 %v1529, %v1402
        %v1535 = vmul.f32 %v1530, %v1403
        %v1536 = vmul.f32 %v1531, %v1404
        %v1537 = vmul.f32 %v1532, %v1405
        %v1538 = vsel %vm1423, %v1533, 0.0
        %v1539 = vsel %vm1423, %v1534, 0.0
        %v1540 = vadd.f32 %v1538, %v1539
        %v1541 = vsel %vm1423, %v1535, 0.0
        %v1542 = vadd.f32 %v1540, %v1541
        %v1543 = vsel %vm1423, %v1536, 0.0
        %v1544 = vadd.f32 %v1542, %v1543
        %v1545 = vsel %vm1423, %v1537, 0.0
        %v1546 = vadd.f32 %v1544, %v1545
        %v1547 = vsel %vm1423, %v1546, 0.0
        %v1548 = vrot.slane %v1547, 4
        %v1549 = vadd.f32 %v1547, %v1548
        %v1550 = vrot.slane %v1549, 2
        %v1551 = vadd.f32 %v1549, %v1550
        %v1552 = vrot.slane %v1551, 1
        %v1553 = vadd.f32 %v1551, %v1552
        %v1554 = vadd.f32 %v1553, %v1406
        %s1555 = scalar_lea.vmem [#allocation3], 16
        %1556 = vst [vmem:[%s1555 + $0x1] sm:$0x1] %v1554
        %v1557 = vld [vmem:[%s1527 + $0x4] sm:$0x1f]
        %v1558 = vld [vmem:[%s1527 + $0x1c] sm:$0x1f]
        %v1559 = vld [vmem:[%s1527 + $0x34] sm:$0x1f]
        %v1560 = vld [vmem:[%s1527 + $0x4c] sm:$0x1f]
        %v1561 = vld [vmem:[%s1527 + $0x64] sm:$0x1f]
        %v1562 = vmul.f32 %v1557, %v1401
        %v1563 = vmul.f32 %v1558, %v1402
        %v1564 = vmul.f32 %v1559, %v1403
        %v1565 = vmul.f32 %v1560, %v1404
        %v1566 = vmul.f32 %v1561, %v1405
        %v1567 = vsel %vm1423, %v1562, 0.0
        %v1568 = vsel %vm1423, %v1563, 0.0
        %v1569 = vadd.f32 %v1567, %v1568
        %v1570 = vsel %vm1423, %v1564, 0.0
        %v1571 = vadd.f32 %v1569, %v1570
        %v1572 = vsel %vm1423, %v1565, 0.0
        %v1573 = vadd.f32 %v1571, %v1572
        %v1574 = vsel %vm1423, %v1566, 0.0
        %v1575 = vadd.f32 %v1573, %v1574
        %v1576 = vsel %vm1423, %v1575, 0.0
        %v1577 = vrot.slane %v1576, 4
        %v1578 = vadd.f32 %v1576, %v1577
        %v1579 = vrot.slane %v1578, 2
        %v1580 = vadd.f32 %v1578, %v1579
        %v1581 = vrot.slane %v1580, 1
        %v1582 = vadd.f32 %v1580, %v1581
        %v1583 = vadd.f32 %v1582, %v1406
        %1584 = vst [vmem:[%s1555 + $0x2] sm:$0x1] %v1583
        %v1585 = vld [vmem:[%s1527 + $0x8] sm:$0x1f]
        %v1586 = vld [vmem:[%s1527 + $0x20] sm:$0x1f]
        %v1587 = vld [vmem:[%s1527 + $0x38] sm:$0x1f]
        %v1588 = vld [vmem:[%s1527 + $0x50] sm:$0x1f]
        %v1589 = vld [vmem:[%s1527 + $0x68] sm:$0x1f]
        %v1590 = vmul.f32 %v1585, %v1401
        %v1591 = vmul.f32 %v1586, %v1402
        %v1592 = vmul.f32 %v1587, %v1403
        %v1593 = vmul.f32 %v1588, %v1404
        %v1594 = vmul.f32 %v1589, %v1405
        %v1595 = vsel %vm1423, %v1590, 0.0
        %v1596 = vsel %vm1423, %v1591, 0.0
        %v1597 = vadd.f32 %v1595, %v1596
        %v1598 = vsel %vm1423, %v1592, 0.0
        %v1599 = vadd.f32 %v1597, %v1598
        %v1600 = vsel %vm1423, %v1593, 0.0
        %v1601 = vadd.f32 %v1599, %v1600
        %v1602 = vsel %vm1423, %v1594, 0.0
        %v1603 = vadd.f32 %v1601, %v1602
        %v1604 = vsel %vm1423, %v1603, 0.0
        %v1605 = vrot.slane %v1604, 4
        %v1606 = vadd.f32 %v1604, %v1605
        %v1607 = vrot.slane %v1606, 2
        %v1608 = vadd.f32 %v1606, %v1607
        %v1609 = vrot.slane %v1608, 1
        %v1610 = vadd.f32 %v1608, %v1609
        %v1611 = vadd.f32 %v1610, %v1406
        %1612 = vst [vmem:[%s1555 + $0x3] sm:$0x1] %v1611
        %v1613 = vld [vmem:[%s1527 + $0xc] sm:$0x1f]
        %v1614 = vld [vmem:[%s1527 + $0x24] sm:$0x1f]
        %v1615 = vld [vmem:[%s1527 + $0x3c] sm:$0x1f]
        %v1616 = vld [vmem:[%s1527 + $0x54] sm:$0x1f]
        %v1617 = vld [vmem:[%s1527 + $0x6c] sm:$0x1f]
        %v1618 = vmul.f32 %v1613, %v1401
        %v1619 = vmul.f32 %v1614, %v1402
        %v1620 = vmul.f32 %v1615, %v1403
        %v1621 = vmul.f32 %v1616, %v1404
        %v1622 = vmul.f32 %v1617, %v1405
        %v1623 = vsel %vm1423, %v1618, 0.0
        %v1624 = vsel %vm1423, %v1619, 0.0
        %v1625 = vadd.f32 %v1623, %v1624
        %v1626 = vsel %vm1423, %v1620, 0.0
        %v1627 = vadd.f32 %v1625, %v1626
        %v1628 = vsel %vm1423, %v1621, 0.0
        %v1629 = vadd.f32 %v1627, %v1628
        %v1630 = vsel %vm1423, %v1622, 0.0
        %v1631 = vadd.f32 %v1629, %v1630
        %v1632 = vsel %vm1423, %v1631, 0.0
        %v1633 = vrot.slane %v1632, 4
        %v1634 = vadd.f32 %v1632, %v1633
        %v1635 = vrot.slane %v1634, 2
        %v1636 = vadd.f32 %v1634, %v1635
        %v1637 = vrot.slane %v1636, 1
        %v1638 = vadd.f32 %v1636, %v1637
        %v1639 = vadd.f32 %v1638, %v1406
        %1640 = vst [vmem:[%s1555 + $0x4] sm:$0x1] %v1639
        %s1641 = scalar_lea.vmem [#allocation2], 192
        %v1642 = vld [vmem:[%s1641] sm:$0x1f]
        %v1643 = vld [vmem:[%s1641 + $0x18] sm:$0x1f]
        %v1644 = vld [vmem:[%s1641 + $0x30] sm:$0x1f]
        %v1645 = vld [vmem:[%s1641 + $0x48] sm:$0x1f]
        %v1646 = vld [vmem:[%s1641 + $0x60] sm:$0x1f]
        %v1647 = vmul.f32 %v1642, %v1401
        %v1648 = vmul.f32 %v1643, %v1402
        %v1649 = vmul.f32 %v1644, %v1403
        %v1650 = vmul.f32 %v1645, %v1404
        %v1651 = vmul.f32 %v1646, %v1405
        %v1652 = vsel %vm1423, %v1647, 0.0
        %v1653 = vsel %vm1423, %v1648, 0.0
        %v1654 = vadd.f32 %v1652, %v1653
        %v1655 = vsel %vm1423, %v1649, 0.0
        %v1656 = vadd.f32 %v1654, %v1655
        %v1657 = vsel %vm1423, %v1650, 0.0
        %v1658 = vadd.f32 %v1656, %v1657
        %v1659 = vsel %vm1423, %v1651, 0.0
        %v1660 = vadd.f32 %v1658, %v1659
        %v1661 = vsel %vm1423, %v1660, 0.0
        %v1662 = vrot.slane %v1661, 4
        %v1663 = vadd.f32 %v1661, %v1662
        %v1664 = vrot.slane %v1663, 2
        %v1665 = vadd.f32 %v1663, %v1664
        %v1666 = vrot.slane %v1665, 1
        %v1667 = vadd.f32 %v1665, %v1666
        %v1668 = vadd.f32 %v1667, %v1406
        %s1669 = scalar_lea.vmem [#allocation3], 24
        %1670 = vst [vmem:[%s1669 + $0x1] sm:$0x1] %v1668
        %v1671 = vld [vmem:[%s1641 + $0x4] sm:$0x1f]
        %v1672 = vld [vmem:[%s1641 + $0x1c] sm:$0x1f]
        %v1673 = vld [vmem:[%s1641 + $0x34] sm:$0x1f]
        %v1674 = vld [vmem:[%s1641 + $0x4c] sm:$0x1f]
        %v1675 = vld [vmem:[%s1641 + $0x64] sm:$0x1f]
        %v1676 = vmul.f32 %v1671, %v1401
        %v1677 = vmul.f32 %v1672, %v1402
        %v1678 = vmul.f32 %v1673, %v1403
        %v1679 = vmul.f32 %v1674, %v1404
        %v1680 = vmul.f32 %v1675, %v1405
        %v1681 = vsel %vm1423, %v1676, 0.0
        %v1682 = vsel %vm1423, %v1677, 0.0
        %v1683 = vadd.f32 %v1681, %v1682
        %v1684 = vsel %vm1423, %v1678, 0.0
        %v1685 = vadd.f32 %v1683, %v1684
        %v1686 = vsel %vm1423, %v1679, 0.0
        %v1687 = vadd.f32 %v1685, %v1686
        %v1688 = vsel %vm1423, %v1680, 0.0
        %v1689 = vadd.f32 %v1687, %v1688
        %v1690 = vsel %vm1423, %v1689, 0.0
        %v1691 = vrot.slane %v1690, 4
        %v1692 = vadd.f32 %v1690, %v1691
        %v1693 = vrot.slane %v1692, 2
        %v1694 = vadd.f32 %v1692, %v1693
        %v1695 = vrot.slane %v1694, 1
        %v1696 = vadd.f32 %v1694, %v1695
        %v1697 = vadd.f32 %v1696, %v1406
        %1698 = vst [vmem:[%s1669 + $0x2] sm:$0x1] %v1697
        %v1699 = vld [vmem:[%s1641 + $0x8] sm:$0x1f]
        %v1700 = vld [vmem:[%s1641 + $0x20] sm:$0x1f]
        %v1701 = vld [vmem:[%s1641 + $0x38] sm:$0x1f]
        %v1702 = vld [vmem:[%s1641 + $0x50] sm:$0x1f]
        %v1703 = vld [vmem:[%s1641 + $0x68] sm:$0x1f]
        %v1704 = vmul.f32 %v1699, %v1401
        %v1705 = vmul.f32 %v1700, %v1402
        %v1706 = vmul.f32 %v1701, %v1403
        %v1707 = vmul.f32 %v1702, %v1404
        %v1708 = vmul.f32 %v1703, %v1405
        %v1709 = vsel %vm1423, %v1704, 0.0
        %v1710 = vsel %vm1423, %v1705, 0.0
        %v1711 = vadd.f32 %v1709, %v1710
        %v1712 = vsel %vm1423, %v1706, 0.0
        %v1713 = vadd.f32 %v1711, %v1712
        %v1714 = vsel %vm1423, %v1707, 0.0
        %v1715 = vadd.f32 %v1713, %v1714
        %v1716 = vsel %vm1423, %v1708, 0.0
        %v1717 = vadd.f32 %v1715, %v1716
        %v1718 = vsel %vm1423, %v1717, 0.0
        %v1719 = vrot.slane %v1718, 4
        %v1720 = vadd.f32 %v1718, %v1719
        %v1721 = vrot.slane %v1720, 2
        %v1722 = vadd.f32 %v1720, %v1721
        %v1723 = vrot.slane %v1722, 1
        %v1724 = vadd.f32 %v1722, %v1723
        %v1725 = vadd.f32 %v1724, %v1406
        %1726 = vst [vmem:[%s1669 + $0x3] sm:$0x1] %v1725
        %v1727 = vld [vmem:[%s1641 + $0xc] sm:$0x1f]
        %v1728 = vld [vmem:[%s1641 + $0x24] sm:$0x1f]
        %v1729 = vld [vmem:[%s1641 + $0x3c] sm:$0x1f]
        %v1730 = vld [vmem:[%s1641 + $0x54] sm:$0x1f]
        %v1731 = vld [vmem:[%s1641 + $0x6c] sm:$0x1f]
        %v1732 = vmul.f32 %v1727, %v1401
        %v1733 = vmul.f32 %v1728, %v1402
        %v1734 = vmul.f32 %v1729, %v1403
        %v1735 = vmul.f32 %v1730, %v1404
        %v1736 = vmul.f32 %v1731, %v1405
        %v1737 = vsel %vm1423, %v1732, 0.0
        %v1738 = vsel %vm1423, %v1733, 0.0
        %v1739 = vadd.f32 %v1737, %v1738
        %v1740 = vsel %vm1423, %v1734, 0.0
        %v1741 = vadd.f32 %v1739, %v1740
        %v1742 = vsel %vm1423, %v1735, 0.0
        %v1743 = vadd.f32 %v1741, %v1742
        %v1744 = vsel %vm1423, %v1736, 0.0
        %v1745 = vadd.f32 %v1743, %v1744
        %v1746 = vsel %vm1423, %v1745, 0.0
        %v1747 = vrot.slane %v1746, 4
        %v1748 = vadd.f32 %v1746, %v1747
        %v1749 = vrot.slane %v1748, 2
        %v1750 = vadd.f32 %v1748, %v1749
        %v1751 = vrot.slane %v1750, 1
        %v1752 = vadd.f32 %v1750, %v1751
        %v1753 = vadd.f32 %v1752, %v1406
        %1754 = vst [vmem:[%s1669 + $0x4] sm:$0x1] %v1753
        %s1755 = scalar_lea.vmem [#allocation2], 288
        %v1756 = vld [vmem:[%s1755] sm:$0x1f]
        %v1757 = vld [vmem:[%s1755 + $0x18] sm:$0x1f]
        %v1758 = vld [vmem:[%s1755 + $0x30] sm:$0x1f]
        %v1759 = vld [vmem:[%s1755 + $0x48] sm:$0x1f]
        %v1760 = vld [vmem:[%s1755 + $0x60] sm:$0x1f]
        %v1761 = vmul.f32 %v1756, %v1401
        %v1762 = vmul.f32 %v1757, %v1402
        %v1763 = vmul.f32 %v1758, %v1403
        %v1764 = vmul.f32 %v1759, %v1404
        %v1765 = vmul.f32 %v1760, %v1405
        %v1766 = vsel %vm1423, %v1761, 0.0
        %v1767 = vsel %vm1423, %v1762, 0.0
        %v1768 = vadd.f32 %v1766, %v1767
        %v1769 = vsel %vm1423, %v1763, 0.0
        %v1770 = vadd.f32 %v1768, %v1769
        %v1771 = vsel %vm1423, %v1764, 0.0
        %v1772 = vadd.f32 %v1770, %v1771
        %v1773 = vsel %vm1423, %v1765, 0.0
        %v1774 = vadd.f32 %v1772, %v1773
        %v1775 = vsel %vm1423, %v1774, 0.0
        %v1776 = vrot.slane %v1775, 4
        %v1777 = vadd.f32 %v1775, %v1776
        %v1778 = vrot.slane %v1777, 2
        %v1779 = vadd.f32 %v1777, %v1778
        %v1780 = vrot.slane %v1779, 1
        %v1781 = vadd.f32 %v1779, %v1780
        %v1782 = vadd.f32 %v1781, %v1406
        %s1783 = scalar_lea.vmem [#allocation3], 32
        %1784 = vst [vmem:[%s1783 + $0x1] sm:$0x1] %v1782
        %v1785 = vld [vmem:[%s1755 + $0x4] sm:$0x1f]
        %v1786 = vld [vmem:[%s1755 + $0x1c] sm:$0x1f]
        %v1787 = vld [vmem:[%s1755 + $0x34] sm:$0x1f]
        %v1788 = vld [vmem:[%s1755 + $0x4c] sm:$0x1f]
        %v1789 = vld [vmem:[%s1755 + $0x64] sm:$0x1f]
        %v1790 = vmul.f32 %v1785, %v1401
        %v1791 = vmul.f32 %v1786, %v1402
        %v1792 = vmul.f32 %v1787, %v1403
        %v1793 = vmul.f32 %v1788, %v1404
        %v1794 = vmul.f32 %v1789, %v1405
        %v1795 = vsel %vm1423, %v1790, 0.0
        %v1796 = vsel %vm1423, %v1791, 0.0
        %v1797 = vadd.f32 %v1795, %v1796
        %v1798 = vsel %vm1423, %v1792, 0.0
        %v1799 = vadd.f32 %v1797, %v1798
        %v1800 = vsel %vm1423, %v1793, 0.0
        %v1801 = vadd.f32 %v1799, %v1800
        %v1802 = vsel %vm1423, %v1794, 0.0
        %v1803 = vadd.f32 %v1801, %v1802
        %v1804 = vsel %vm1423, %v1803, 0.0
        %v1805 = vrot.slane %v1804, 4
        %v1806 = vadd.f32 %v1804, %v1805
        %v1807 = vrot.slane %v1806, 2
        %v1808 = vadd.f32 %v1806, %v1807
        %v1809 = vrot.slane %v1808, 1
        %v1810 = vadd.f32 %v1808, %v1809
        %v1811 = vadd.f32 %v1810, %v1406
        %1812 = vst [vmem:[%s1783 + $0x2] sm:$0x1] %v1811
        %v1813 = vld [vmem:[%s1755 + $0x8] sm:$0x1f]
        %v1814 = vld [vmem:[%s1755 + $0x20] sm:$0x1f]
        %v1815 = vld [vmem:[%s1755 + $0x38] sm:$0x1f]
        %v1816 = vld [vmem:[%s1755 + $0x50] sm:$0x1f]
        %v1817 = vld [vmem:[%s1755 + $0x68] sm:$0x1f]
        %v1818 = vmul.f32 %v1813, %v1401
        %v1819 = vmul.f32 %v1814, %v1402
        %v1820 = vmul.f32 %v1815, %v1403
        %v1821 = vmul.f32 %v1816, %v1404
        %v1822 = vmul.f32 %v1817, %v1405
        %v1823 = vsel %vm1423, %v1818, 0.0
        %v1824 = vsel %vm1423, %v1819, 0.0
        %v1825 = vadd.f32 %v1823, %v1824
        %v1826 = vsel %vm1423, %v1820, 0.0
        %v1827 = vadd.f32 %v1825, %v1826
        %v1828 = vsel %vm1423, %v1821, 0.0
        %v1829 = vadd.f32 %v1827, %v1828
        %v1830 = vsel %vm1423, %v1822, 0.0
        %v1831 = vadd.f32 %v1829, %v1830
        %v1832 = vsel %vm1423, %v1831, 0.0
        %v1833 = vrot.slane %v1832, 4
        %v1834 = vadd.f32 %v1832, %v1833
        %v1835 = vrot.slane %v1834, 2
        %v1836 = vadd.f32 %v1834, %v1835
        %v1837 = vrot.slane %v1836, 1
        %v1838 = vadd.f32 %v1836, %v1837
        %v1839 = vadd.f32 %v1838, %v1406
        %1840 = vst [vmem:[%s1783 + $0x3] sm:$0x1] %v1839
        %v1841 = vld [vmem:[%s1755 + $0xc] sm:$0x1f]
        %v1842 = vld [vmem:[%s1755 + $0x24] sm:$0x1f]
        %v1843 = vld [vmem:[%s1755 + $0x3c] sm:$0x1f]
        %v1844 = vld [vmem:[%s1755 + $0x54] sm:$0x1f]
        %v1845 = vld [vmem:[%s1755 + $0x6c] sm:$0x1f]
        %v1846 = vmul.f32 %v1841, %v1401
        %v1847 = vmul.f32 %v1842, %v1402
        %v1848 = vmul.f32 %v1843, %v1403
        %v1849 = vmul.f32 %v1844, %v1404
        %v1850 = vmul.f32 %v1845, %v1405
        %v1851 = vsel %vm1423, %v1846, 0.0
        %v1852 = vsel %vm1423, %v1847, 0.0
        %v1853 = vadd.f32 %v1851, %v1852
        %v1854 = vsel %vm1423, %v1848, 0.0
        %v1855 = vadd.f32 %v1853, %v1854
        %v1856 = vsel %vm1423, %v1849, 0.0
        %v1857 = vadd.f32 %v1855, %v1856
        %v1858 = vsel %vm1423, %v1850, 0.0
        %v1859 = vadd.f32 %v1857, %v1858
        %v1860 = vsel %vm1423, %v1859, 0.0
        %v1861 = vrot.slane %v1860, 4
        %v1862 = vadd.f32 %v1860, %v1861
        %v1863 = vrot.slane %v1862, 2
        %v1864 = vadd.f32 %v1862, %v1863
        %v1865 = vrot.slane %v1864, 1
        %v1866 = vadd.f32 %v1864, %v1865
        %v1867 = vadd.f32 %v1866, %v1406
        %1868 = vst [vmem:[%s1783 + $0x4] sm:$0x1] %v1867
        %v1869 = vld [vmem:[#allocation14] sm:$0x7]
        %v1870 = vld [vmem:[#allocation14 + $0x4] sm:$0x7]
        %v1871 = vld [vmem:[#allocation14 + $0x8] sm:$0x7]
        %v1872 = vld [vmem:[#allocation16] sm:$0x1]
        %v1874 = vlaneseq
        %v1875 = vshrl.u32 %v1874, 7
        %v1876 = vsub.s32 0, %v1875
        %v1877 = vrot.slane %v1872, %v1876
        %v1879 = vld [vmem:[#allocation3] sm:$0xf]
        %v1880 = vlaneseq
        %v1881 = vshrl.u32 %v1880, 7
        %v1882 = vsub.s32 0, %v1881
        %v1883 = vrot.slane %v1869, %v1882
        %v1884 = vmul.f32 %v1879, %v1883
        %v1885 = vadd.f32 %v1877, %v1884
        %v1886 = vld [vmem:[#allocation3 + $0x1] sm:$0xf]
        %v1887 = vlaneseq
        %v1888 = vshrl.u32 %v1887, 7
        %v1889 = vsub.s32 1, %v1888
        %v1890 = vrot.slane %v1869, %v1889
        %v1891 = vmul.f32 %v1886, %v1890
        %v1892 = vadd.f32 %v1885, %v1891
        %v1893 = vld [vmem:[#allocation3 + $0x2] sm:$0xf]
        %v1894 = vlaneseq
        %v1895 = vshrl.u32 %v1894, 7
        %v1896 = vsub.s32 2, %v1895
        %v1897 = vrot.slane %v1869, %v1896
        %v1898 = vmul.f32 %v1893, %v1897
        %v1899 = vadd.f32 %v1892, %v1898
        %v1900 = vld [vmem:[%s1441] sm:$0xf]
        %v1901 = vlaneseq
        %v1902 = vshrl.u32 %v1901, 7
        %v1903 = vsub.s32 0, %v1902
        %v1904 = vrot.slane %v1870, %v1903
        %v1905 = vmul.f32 %v1900, %v1904
        %v1906 = vadd.f32 %v1899, %v1905
        %v1907 = vld [vmem:[%s1441 + $0x1] sm:$0xf]
        %v1908 = vlaneseq
        %v1909 = vshrl.u32 %v1908, 7
        %v1910 = vsub.s32 1, %v1909
        %v1911 = vrot.slane %v1870, %v1910
        %v1912 = vmul.f32 %v1907, %v1911
        %v1913 = vadd.f32 %v1906, %v1912
        %v1914 = vld [vmem:[%s1441 + $0x2] sm:$0xf]
        %v1915 = vlaneseq
        %v1916 = vshrl.u32 %v1915, 7
        %v1917 = vsub.s32 2, %v1916
        %v1918 = vrot.slane %v1870, %v1917
        %v1919 = vmul.f32 %v1914, %v1918
        %v1920 = vadd.f32 %v1913, %v1919
        %v1921 = vld [vmem:[%s1555] sm:$0xf]
        %v1922 = vlaneseq
        %v1923 = vshrl.u32 %v1922, 7
        %v1924 = vsub.s32 0, %v1923
        %v1925 = vrot.slane %v1871, %v1924
        %v1926 = vmul.f32 %v1921, %v1925
        %v1927 = vadd.f32 %v1920, %v1926
        %v1928 = vld [vmem:[%s1555 + $0x1] sm:$0xf]
        %v1929 = vlaneseq
        %v1930 = vshrl.u32 %v1929, 7
        %v1931 = vsub.s32 1, %v1930
        %v1932 = vrot.slane %v1871, %v1931
        %v1933 = vmul.f32 %v1928, %v1932
        %v1934 = vadd.f32 %v1927, %v1933
        %v1935 = vld [vmem:[%s1555 + $0x2] sm:$0xf]
        %v1936 = vlaneseq
        %v1937 = vshrl.u32 %v1936, 7
        %v1938 = vsub.s32 2, %v1937
        %v1939 = vrot.slane %v1871, %v1938
        %v1940 = vmul.f32 %v1935, %v1939
        %v1941 = vadd.f32 %v1934, %v1940
        %v1942 = vxor.u32 %v1941, 2147483648
        %v1943 = vmul.f32 %v1942, 1.442695
        %v1944 = vpow.pop %v1943
        %v1945 = vadd.f32 %v1944, 1.0
        %v1946 = vrcp.pop %v1945
        %v1947 = vmul.f32 1.0, %v1946
        %v1948 = vmul.f32 %v1907, %v1947
        %1949 = vst [vmem:[#allocation4] sm:$0xf] %v1948
        %v1950 = vld [vmem:[%s1441] sm:$0xf]
        %v1951 = vmul.f32 %v1950, %v1883
        %v1952 = vadd.f32 %v1877, %v1951
        %v1953 = vld [vmem:[%s1441 + $0x1] sm:$0xf]
        %v1954 = vmul.f32 %v1953, %v1890
        %v1955 = vadd.f32 %v1952, %v1954
        %v1956 = vld [vmem:[%s1441 + $0x2] sm:$0xf]
        %v1957 = vmul.f32 %v1956, %v1897
        %v1958 = vadd.f32 %v1955, %v1957
        %v1959 = vld [vmem:[%s1555] sm:$0xf]
        %v1960 = vmul.f32 %v1959, %v1904
        %v1961 = vadd.f32 %v1958, %v1960
        %v1962 = vld [vmem:[%s1555 + $0x1] sm:$0xf]
        %v1963 = vmul.f32 %v1962, %v1911
        %v1964 = vadd.f32 %v1961, %v1963
        %v1965 = vld [vmem:[%s1555 + $0x2] sm:$0xf]
        %v1966 = vmul.f32 %v1965, %v1918
        %v1967 = vadd.f32 %v1964, %v1966
        %v1968 = vld [vmem:[%s1669] sm:$0xf]
        %v1969 = vmul.f32 %v1968, %v1925
        %v1970 = vadd.f32 %v1967, %v1969
        %v1971 = vld [vmem:[%s1669 + $0x1] sm:$0xf]
        %v1972 = vmul.f32 %v1971, %v1932
        %v1973 = vadd.f32 %v1970, %v1972
        %v1974 = vld [vmem:[%s1669 + $0x2] sm:$0xf]
        %v1975 = vmul.f32 %v1974, %v1939
        %v1976 = vadd.f32 %v1973, %v1975
        %v1977 = vxor.u32 %v1976, 2147483648
        %v1978 = vmul.f32 %v1977, 1.442695
        %v1979 = vpow.pop %v1978
        %v1980 = vadd.f32 %v1979, 1.0
        %v1981 = vrcp.pop %v1980
        %v1982 = vmul.f32 1.0, %v1981
        %v1983 = vmul.f32 %v1962, %v1982
        %1984 = vst [vmem:[#allocation4 + $0x4] sm:$0xf] %v1983
        %v1985 = vld [vmem:[%s1555] sm:$0xf]
        %v1986 = vmul.f32 %v1985, %v1883
        %v1987 = vadd.f32 %v1877, %v1986
        %v1988 = vld [vmem:[%s1555 + $0x1] sm:$0xf]
        %v1989 = vmul.f32 %v1988, %v1890
        %v1990 = vadd.f32 %v1987, %v1989
        %v1991 = vld [vmem:[%s1555 + $0x2] sm:$0xf]
        %v1992 = vmul.f32 %v1991, %v1897
        %v1993 = vadd.f32 %v1990, %v1992
        %v1994 = vld [vmem:[%s1669] sm:$0xf]
        %v1995 = vmul.f32 %v1994, %v1904
        %v1996 = vadd.f32 %v1993, %v1995
        %v1997 = vld [vmem:[%s1669 + $0x1] sm:$0xf]
        %v1998 = vmul.f32 %v1997, %v1911
        %v1999 = vadd.f32 %v1996, %v1998
        %v2000 = vld [vmem:[%s1669 + $0x2] sm:$0xf]
        %v2001 = vmul.f32 %v2000, %v1918
        %v2002 = vadd.f32 %v1999, %v2001
        %v2003 = vld [vmem:[%s1783] sm:$0xf]
        %v2004 = vmul.f32 %v2003, %v1925
        %v2005 = vadd.f32 %v2002, %v2004
        %v2006 = vld [vmem:[%s1783 + $0x1] sm:$0xf]
        %v2007 = vmul.f32 %v2006, %v1932
        %v2008 = vadd.f32 %v2005, %v2007
        %v2009 = vld [vmem:[%s1783 + $0x2] sm:$0xf]
        %v2010 = vmul.f32 %v2009, %v1939
        %v2011 = vadd.f32 %v2008, %v2010
        %v2012 = vxor.u32 %v2011, 2147483648
        %v2013 = vmul.f32 %v2012, 1.442695
        %v2014 = vpow.pop %v2013
        %v2015 = vadd.f32 %v2014, 1.0
        %v2016 = vrcp.pop %v2015
        %v2017 = vmul.f32 1.0, %v2016
        %v2018 = vmul.f32 %v1997, %v2017
        %2019 = vst [vmem:[#allocation4 + $0x8] sm:$0xf] %v2018
        %v2020 = vld [vmem:[%s1669] sm:$0xf]
        %v2021 = vmul.f32 %v2020, %v1883
        %v2022 = vadd.f32 %v1877, %v2021
        %v2023 = vld [vmem:[%s1669 + $0x1] sm:$0xf]
        %v2024 = vmul.f32 %v2023, %v1890
        %v2025 = vadd.f32 %v2022, %v2024
        %v2026 = vld [vmem:[%s1669 + $0x2] sm:$0xf]
        %v2027 = vmul.f32 %v2026, %v1897
        %v2028 = vadd.f32 %v2025, %v2027
        %v2029 = vld [vmem:[%s1783] sm:$0xf]
        %v2030 = vmul.f32 %v2029, %v1904
        %v2031 = vadd.f32 %v2028, %v2030
        %v2032 = vld [vmem:[%s1783 + $0x1] sm:$0xf]
        %v2033 = vmul.f32 %v2032, %v1911
        %v2034 = vadd.f32 %v2031, %v2033
        %v2035 = vld [vmem:[%s1783 + $0x2] sm:$0xf]
        %v2036 = vmul.f32 %v2035, %v1918
        %v2037 = vadd.f32 %v2034, %v2036
        %s2038 = scalar_lea.vmem [#allocation3], 40
        %v2039 = vld [vmem:[%s2038] sm:$0xf]
        %v2040 = vmul.f32 %v2039, %v1925
        %v2041 = vadd.f32 %v2037, %v2040
        %v2042 = vld [vmem:[%s2038 + $0x1] sm:$0xf]
        %v2043 = vmul.f32 %v2042, %v1932
        %v2044 = vadd.f32 %v2041, %v2043
        %v2045 = vld [vmem:[%s2038 + $0x2] sm:$0xf]
        %v2046 = vmul.f32 %v2045, %v1939
        %v2047 = vadd.f32 %v2044, %v2046
        %v2048 = vxor.u32 %v2047, 2147483648
        %v2049 = vmul.f32 %v2048, 1.442695
        %v2050 = vpow.pop %v2049
        %v2051 = vadd.f32 %v2050, 1.0
        %v2052 = vrcp.pop %v2051
        %v2053 = vmul.f32 1.0, %v2052
        %v2054 = vmul.f32 %v2032, %v2053
        %2055 = vst [vmem:[#allocation4 + $0xc] sm:$0xf] %v2054
        %v2056 = vld [vmem:[#allocation4] sm:$0xff]
        %v2057 = vld [vmem:[#allocation4 + $0x8] sm:$0xff]
        %2058 = vadd.xlane.f32.xlu0 %v2056
        %v2059 = vpop.xlane.xlu0 %2058
        %2060 = vadd.xlane.f32.xlu0 %v2057
        %v2061 = vpop.xlane.xlu0 %2060
        %v2062 = vrcp.pop 128.0
        %v2063 = vmul.f32 %v2059, %v2062
        %v2064 = vmul.f32 %v2061, %v2062
        %v2065 = vsub.f32 %v2056, %v2063
        %v2066 = vsub.f32 %v2057, %v2064
        %v2067 = vmul.f32 %v2065, %v2065
        %v2068 = vmul.f32 %v2066, %v2066
        %2069 = vadd.xlane.f32.xlu0 %v2067
        %v2070 = vpop.xlane.xlu0 %2069
        %2071 = vadd.xlane.f32.xlu0 %v2068
        %v2072 = vpop.xlane.xlu0 %2071
        %v2073 = vmul.f32 %v2070, %v2062
        %v2074 = vmul.f32 %v2072, %v2062
        %v2075 = vadd.f32 %v2073, 1e-06
        %v2076 = vadd.f32 %v2074, 1e-06
        %v2077 = vrsqrt.pop %v2075
        %v2078 = vrsqrt.pop %v2076
        %v2079 = vmul.f32 %v2065, %v2077
        %v2080 = vmul.f32 %v2066, %v2078
        %v2081 = vld [vmem:[#allocation17] sm:$0x1]
        %v2083 = vlaneseq
        %v2084 = vshrl.u32 %v2083, 7
        %v2085 = vsub.s32 0, %v2084
        %v2086 = vrot.slane %v2081, %v2085
        %v2088 = vmul.f32 %v2079, %v2086
        %v2089 = vmul.f32 %v2080, %v2086
        %v2090 = vld [vmem:[#allocation19] sm:$0x1]
        %v2092 = vlaneseq
        %v2093 = vshrl.u32 %v2092, 7
        %v2094 = vsub.s32 0, %v2093
        %v2095 = vrot.slane %v2090, %v2094
        %v2097 = vadd.f32 %v2088, %v2095
        %v2098 = vadd.f32 %v2089, %v2095
        %v2099 = vld [vmem:[#allocation20] sm:$0xff]
        %v2100 = vld [vmem:[#allocation20 + $0x8] sm:$0xff]
        %v2101 = vld [vmem:[#allocation20 + $0x10] sm:$0xff]
        %v2102 = vld [vmem:[#allocation20 + $0x18] sm:$0xff]
        %v2103 = vld [vmem:[#allocation20 + $0x20] sm:$0xff]
        %v2104 = vld [vmem:[#allocation20 + $0x28] sm:$0xff]
        %v2105 = vld [vmem:[#allocation20 + $0x30] sm:$0xff]
        %v2106 = vld [vmem:[#allocation20 + $0x38] sm:$0xff]
        %v2107 = vld [vmem:[#allocation20 + $0x40] sm:$0xff]
        %v2108 = vld [vmem:[#allocation20 + $0x48] sm:$0xff]
        %v2109 = vld [vmem:[#allocation20 + $0x50] sm:$0xff]
        %v2110 = vld [vmem:[#allocation20 + $0x58] sm:$0xff]
        %v2111 = vld [vmem:[#allocation20 + $0x60] sm:$0xff]
        %v2112 = vld [vmem:[#allocation20 + $0x68] sm:$0xff]
        %v2113 = vld [vmem:[#allocation20 + $0x70] sm:$0xff]
        %v2114 = vld [vmem:[#allocation20 + $0x78] sm:$0xff]
        %v2115 = vld [vmem:[#allocation22] sm:$0x1]
        %v2117 = vlaneseq
        %v2118 = vshrl.u32 %v2117, 7
        %v2119 = vsub.s32 0, %v2118
        %v2120 = vrot.slane %v2115, %v2119
        %2122 = vmatprep.subr.mxu0 0.0
        %2123 = vmatpush1.msra.mxu0 %v2099
        %2124 = vmatprep.subr.mxu0 0.0
        %2125 = vmatpush1.msra.mxu0 %v2100
        %2126 = vmatprep.subr.mxu0 0.0
        %2127 = vmatpush1.msra.mxu0 %v2101
        %2128 = vmatprep.subr.mxu0 0.0
        %2129 = vmatpush1.msra.mxu0 %v2102
        %2130 = vmatprep.subr.mxu0 0.0
        %2131 = vmatpush1.msra.mxu0 %v2103
        %2132 = vmatprep.subr.mxu0 0.0
        %2133 = vmatpush1.msra.mxu0 %v2104
        %2134 = vmatprep.subr.mxu0 0.0
        %2135 = vmatpush1.msra.mxu0 %v2105
        %2136 = vmatprep.subr.mxu0 0.0
        %2137 = vmatpush1.msra.mxu0 %v2106
        %2138 = vmatprep.subr.mxu0 0.0
        %2139 = vmatpush1.msra.mxu0 %v2107
        %2140 = vmatprep.subr.mxu0 0.0
        %2141 = vmatpush1.msra.mxu0 %v2108
        %2142 = vmatprep.subr.mxu0 0.0
        %2143 = vmatpush1.msra.mxu0 %v2109
        %2144 = vmatprep.subr.mxu0 0.0
        %2145 = vmatpush1.msra.mxu0 %v2110
        %2146 = vmatprep.subr.mxu0 0.0
        %2147 = vmatpush1.msra.mxu0 %v2111
        %2148 = vmatprep.subr.mxu0 0.0
        %2149 = vmatpush1.msra.mxu0 %v2112
        %2150 = vmatprep.subr.mxu0 0.0
        %2151 = vmatpush1.msra.mxu0 %v2113
        %2152 = vmatprep.subr.mxu0 0.0
        %2153 = vmatpush1.msra.mxu0 %v2114
        %2154 = vmatprep.subr.mxu0 0.0
        %2155 = vmatpush1.msra.mxu0 0.0
        %2156 = vmatprep.subr.mxu0 0.0
        %2157 = vmatpush1.msra.mxu0 0.0
        %2158 = vmatprep.subr.mxu0 0.0
        %2159 = vmatpush1.msra.mxu0 0.0
        %2160 = vmatprep.subr.mxu0 0.0
        %2161 = vmatpush1.msra.mxu0 0.0
        %2162 = vmatprep.subr.mxu0 0.0
        %2163 = vmatpush1.msra.mxu0 0.0
        %2164 = vmatprep.subr.mxu0 0.0
        %2165 = vmatpush1.msra.mxu0 0.0
        %2166 = vmatprep.subr.mxu0 0.0
        %2167 = vmatpush1.msra.mxu0 0.0
        %2168 = vmatprep.subr.mxu0 0.0
        %2169 = vmatpush1.msra.mxu0 0.0
        %2170 = vmatprep.subr.mxu0 0.0
        %2171 = vmatpush1.msra.mxu0 0.0
        %2172 = vmatprep.subr.mxu0 0.0
        %2173 = vmatpush1.msra.mxu0 0.0
        %2174 = vmatprep.subr.mxu0 0.0
        %2175 = vmatpush1.msra.mxu0 0.0
        %2176 = vmatprep.subr.mxu0 0.0
        %2177 = vmatpush1.msra.mxu0 0.0
        %2178 = vmatprep.subr.mxu0 0.0
        %2179 = vmatpush1.msra.mxu0 0.0
        %2180 = vmatprep.subr.mxu0 0.0
        %2181 = vmatpush1.msra.mxu0 0.0
        %2182 = vmatprep.subr.mxu0 0.0
        %2183 = vmatpush1.msra.mxu0 0.0
        %2184 = vmatprep.subr.mxu0 0.0
        %2185 = vmatpush1.msra.mxu0 0.0
        %2186 = vmatprep.mubr.f32.mxu0 0.0
        %2187 = vmatmul.mubr.f32.gmra.mrb[0].mxu0 %v2097
        %v2188 = vpop.f32.mrb[0].mxu0
        %v2189 = vadd.f32 %v2120, %v2188
        %v2190 = vpop.f32.mrb[0].mxu0
        %2191 = vmatprep.mubr.f32.mxu0 0.0
        %2192 = vmatmul.mubr.f32.gmra.mrb[0].mxu0 %v2098
        %v2193 = vpop.f32.mrb[0].mxu0
        %v2194 = vadd.f32 %v2120, %v2193
        %v2195 = vpop.f32.mrb[0].mxu0
        %2196 = vdwg.mxu0
        %2197 = vst [vmem:[%s535] sm:$0xff] %v2189
        %2198 = vst [vmem:[%s535 + $0x8] sm:$0xff] %v2194
        %s2199 = sand.u32 %s277, 1
        %s2200 = scalar_lea.sflag [#allocation7], %s2199
        %s2201 = sand.u32 %s277, 1
        %s2202 = smul.addr %s2201, 16
        %s2203 = scalar_lea.vmem [#allocation23], %s2202
        // Predicated region
        $region109: #{tpu_custom_call.1} parent=63 // pred_check
          %p2204 = pneg %p287
        $region110: #{tpu_custom_call.1} parent=63 // pred_check_branch
          %2206 = sbr.rel (%p2204) target = $region112
        $region111: #{tpu_custom_call.1} parent=63 // pred_region
          %s2208 = ssub.s32 256, 256
          %2209 = vsyncadd %s2200, %s2208
          %s2210 = smul.addr %s33, 2
          %s2211 = smul.addr %s2210, 128
          %s2212 = scalar_lea.hbm %s11, %s2211
          %s2213 = sshll.u32 %s2203, 4
          %s2214 = int_to_ptr.vmem [resolvable:$true] %s2213
          %2219 = dma.vmem_to_hbm [thread:$0]  %s2214, 256, %s2212, %s2200, 128, 128, 8
        $region112: #{tpu_custom_call.1} parent=63 // pred_fallthru
          _
      $region64: #{tpu_custom_call.1} parent=5 // pred_fallthru
        _
      %p2220 = scmp.le.s32.totalorder 2, %s28
      // Predicated region
      $region113: #{tpu_custom_call.1} parent=5 // pred_check
        %p2221 = pneg %p2220
      $region114: #{tpu_custom_call.1} parent=5 // pred_check_branch
        %2223 = sbr.rel (%p2221) target = $region116
      $region115: #{tpu_custom_call.1} parent=5 // pred_region
        %s2224 = ssub.s32 %s28, 2
        // Predicated region
        $region117: #{tpu_custom_call.1} parent=115 // pred_check
          %p2225 = pneg %p293
        $region118: #{tpu_custom_call.1} parent=115 // pred_check_branch
          %2227 = sbr.rel (%p2225) target = $region120
        $region119: #{tpu_custom_call.1} parent=115 // pred_region
          %s2228 = sand.u32 %s278, 1
          %s2229 = scalar_lea.sflag [#allocation7], %s2228
          %s2230 = sand.u32 %s278, 1
          %s2231 = smul.addr %s2230, 16
          %s2232 = scalar_lea.vmem [#allocation23], %s2231
          %2233 = dma.done %s2229, 256
        $region120: #{tpu_custom_call.1} parent=115 // pred_fallthru
          _
      $region116: #{tpu_custom_call.1} parent=5 // pred_fallthru
        _
    $region6: #{tpu_custom_call.1} parent=1 // loop_footer
      %s32 = sadd.s32 1, %s28
    $region7: #{tpu_custom_call.1} parent=1 // loop_footer_branch
      %27 = sbr.rel target = $region3
    $region8: #{tpu_custom_call.1} parent=1 // loop_exit
      _
    %2234 = vsyncpa [#allocation6], 1
    %s2235 = scalar_lea.sflag [#allocation6], 1
    %2236 = vsyncpa %s2235, 1
    %2237 = vsyncpa [#allocation9], 1
    %2238 = vsyncpa [#allocation12], 1
    %2239 = vsyncpa [#allocation15], 1
    %2240 = vsyncpa [#allocation18], 1
    %2241 = vsyncpa [#allocation21], 1
    %2242 = vsyncpa [#allocation7], 1
    %s2243 = scalar_lea.sflag [#allocation7], 1
    %2244 = vsyncpa %s2243, 1

</llo_original>
